<compile_context>
chip_gen: v7x
topology: tpu7x:2x2x1
jax: 0.10.0
libtpu: 0.0.40
codegen_flags: <defaults>
</compile_context>

<pallas_src>
import functools
import math

import jax
import jax.numpy as jnp
from jax import lax
from jax.experimental import pallas as pl
from jax.experimental.pallas import tpu as pltpu

EPS = 1e-5            # Persimmon layer_norm_eps
ROPE_THETA = 25000.0  # Persimmon/Fuyu rope_theta
NEG_INF = -1e9


# ----------------------------------------------------------------------------- helpers
def _layernorm(x, w, b):
    mu = jnp.mean(x, axis=-1, keepdims=True)
    var = jnp.mean(jnp.square(x - mu), axis=-1, keepdims=True)
    return (x - mu) * lax.rsqrt(var + EPS) * w + b


def rotary_tables(seq_len, head_dim, rot_dim, base=ROPE_THETA):
    """Per-head rotary tables of shape (S, D):
       cos_d  : cos over the rotary span, 1 on the pass-through dims
       sinp_d : sin on dims [half, rot)  (multiplies the forward-rolled copy),  0 elsewhere
       sinn_d : sin on dims [0, half)    (multiplies the backward-rolled copy), 0 elsewhere
    so rope(x) = x*cos_d + roll_fwd(x)*sinp_d - roll_bwd(x)*sinn_d (pure VPU, no MXU)."""
    inv_freq = 1.0 / (base ** (jnp.arange(0, rot_dim, 2, dtype=jnp.float32) / rot_dim))
    pos = jnp.arange(seq_len, dtype=jnp.float32)
    freqs = pos[:, None] * inv_freq[None, :]                       # (S, rot/2)
    emb = jnp.concatenate([freqs, freqs], axis=-1)                 # (S, rot)
    cos, sin = jnp.cos(emb), jnp.sin(emb)
    half = rot_dim // 2
    pad = head_dim - rot_dim
    z = lambda n: jnp.zeros((seq_len, n), jnp.float32)
    cos_d = jnp.concatenate([cos, jnp.ones((seq_len, pad), jnp.float32)], -1)
    sinp_d = jnp.concatenate([z(half), sin[:, half:], z(pad)], -1)
    sinn_d = jnp.concatenate([sin[:, :half], z(rot_dim - half), z(pad)], -1)
    return cos_d, sinp_d, sinn_d, cos, sin


def _roll_lanes(x, shift):
    """out[..., j] = x[..., (j - shift) % W]  (jnp.roll semantics on the lane axis)."""
    W = x.shape[-1]
    s = shift % W
    if s == 0:
        return x
    return jnp.concatenate([x[..., W - s:], x[..., :W - s]], axis=-1)


def _rope(t, cos_t, sinp_t, sinn_t, half):
    """rotate_half-style partial RoPE via shifted copies.  Applied at head-GROUP width:
    the shifted copies never leak across heads because sinp/sinn are zero outside each
    head's rotary span."""
    W = t.shape[-1]
    fwd = _roll_lanes(t, half)        # fwd[j] = t[j - half]
    bwd = _roll_lanes(t, W - half)    # bwd[j] = t[j + half]
    return t * cos_t + fwd * sinp_t - bwd * sinn_t


# ----------------------------------------------------------------------- Pallas kernel
def _decoder_layer_kernel(num_heads, head_dim, half, apply_final_ln,
                          x_ref, pad_ref, cos_ref, sinp_ref, sinn_ref,
                          ln1w_ref, ln1b_ref, wqkv_ref, bqkv_ref,
                          qlnw_ref, qlnb_ref, klnw_ref, klnb_ref,
                          wo_ref, bo_ref, ln2w_ref, ln2b_ref,
                          w1_ref, b1_ref, w2_ref, b2_ref,
                          *rest):
    if apply_final_ln:
        fw_ref, fb_ref, y_ref, kout_ref, vout_ref, ctx_scr = rest
    else:
        fw_ref = fb_ref = None
        y_ref, kout_ref, vout_ref, ctx_scr = rest

    D = head_dim
    NH = num_heads
    H = NH * D
    bf16 = jnp.bfloat16

    x = x_ref[0]                                     # (S, H) f32
    S = x.shape[0]

    # additive attention mask = in-kernel causal + streamed per-key padding row (1, S)
    rows = lax.broadcasted_iota(jnp.int32, (S, S), 0)
    cols = lax.broadcasted_iota(jnp.int32, (S, S), 1)
    mask = jnp.where(cols <= rows, jnp.float32(0.0), jnp.float32(NEG_INF)) + pad_ref[0]

    # --- input LayerNorm (f32) + fused full-width QKV projection (bf16 MXU, f32 accum)
    xn = _layernorm(x, ln1w_ref[...], ln1b_ref[...])
    qkv = jnp.dot(xn.astype(bf16), wqkv_ref[...],
                  preferred_element_type=jnp.float32) + bqkv_ref[...]       # (S, 3H)
    q_all, k_all, v_all = qkv[:, :H], qkv[:, H:2 * H], qkv[:, 2 * H:]

    # head grouping so K/V/ctx stores are 128-lane aligned (GH=2 heads at D=64)
    if D <= 128 and 128 % D == 0 and NH % max(1, 128 // D) == 0:
        GH = 128 // D
    else:
        GH = 1
    GW = GH * D

    # per-head rotary tables tiled once to group width
    cos_g = jnp.concatenate([cos_ref[...]] * GH, -1) if GH > 1 else cos_ref[...]
    sinp_g = jnp.concatenate([sinp_ref[...]] * GH, -1) if GH > 1 else sinp_ref[...]
    sinn_g = jnp.concatenate([sinn_ref[...]] * GH, -1) if GH > 1 else sinn_ref[...]

    for g in range(NH // GH):
        g0 = g * GW
        # per-head q/k LayerNorm (1/sqrt(D) scale already folded into qln weights)
        qs, ks = [], []
        for j in range(GH):
            c0 = g0 + j * D
            qs.append(_layernorm(q_all[:, c0:c0 + D], qlnw_ref[...], qlnb_ref[...]))
            ks.append(_layernorm(k_all[:, c0:c0 + D], klnw_ref[...], klnb_ref[...]))
        qg = qs[0] if GH == 1 else jnp.concatenate(qs, axis=-1)
        kg = ks[0] if GH == 1 else jnp.concatenate(ks, axis=-1)

        # partial rotary at group width (pure VPU)
        qg = _rope(qg, cos_g, sinp_g, sinn_g, half)
        kg = _rope(kg, cos_g, sinp_g, sinn_g, half)
        vg = v_all[:, g0:g0 + GW]

        # present K/V: lane-dense bf16, aligned group stores
        kout_ref[0, :, g0:g0 + GW] = kg.astype(bf16)
        vout_ref[0, :, g0:g0 + GW] = vg.astype(bf16)

        # attention per head: scores/softmax f32, MXU inputs bf16
        ctxs = []
        for j in range(GH):
            qh = qg[:, j * D:(j + 1) * D].astype(bf16)
            kh = kg[:, j * D:(j + 1) * D].astype(bf16)
            vh = vg[:, j * D:(j + 1) * D].astype(bf16)
            sc = lax.dot_general(qh, kh, (((1,), (1,)), ((), ())),
                                 preferred_element_type=jnp.float32) + mask
            m = jnp.max(sc, axis=-1, keepdims=True)
            p = jnp.exp(sc - m)
            p = p * pl.reciprocal(jnp.sum(p, axis=-1, keepdims=True), approx=True)
            ctxs.append(jnp.dot(p.astype(bf16), vh,
                                preferred_element_type=jnp.float32))        # (S, D)
        ctx_g = ctxs[0] if GH == 1 else jnp.concatenate(ctxs, axis=-1)
        ctx_scr[:, g0:g0 + GW] = ctx_g.astype(bf16)     # aligned store, bounded live range

    # single full-width output projection + residual 1 (dropout p=0 in eval)
    attn_out = jnp.dot(ctx_scr[...], wo_ref[...],
                       preferred_element_type=jnp.float32) + bo_ref[...]
    h1 = x + attn_out

    # --- post-attention LayerNorm + relu^2 MLP + residual 2
    xn2 = _layernorm(h1, ln2w_ref[...], ln2b_ref[...])
    z = jnp.dot(xn2.astype(bf16), w1_ref[...],
                preferred_element_type=jnp.float32) + b1_ref[...]
    z = jnp.square(jnp.maximum(z, 0.0))                 # hidden_act = "relu2"
    mlp = jnp.dot(z.astype(bf16), w2_ref[...],
                  preferred_element_type=jnp.float32) + b2_ref[...]
    out = h1 + mlp

    if apply_final_ln:                                  # final model LayerNorm fused here
        out = _layernorm(out, fw_ref[...], fb_ref[...])
    y_ref[0] = out


# --------------------------------------------------------------------------- wrappers
def prepare_params(params, num_heads):
    """ONE-TIME parameter preparation (outside the forward path): fuse QKV weights,
    pre-cast all matmul weights to bf16 and fold the 1/sqrt(D) attention scale into the
    per-head q-LayerNorm affine parameters."""
    bf = jnp.bfloat16
    layers = []
    for lp in params["layers"]:
        H = lp["wq"].shape[0]
        D = H // num_heads
        scale = 1.0 / math.sqrt(D)
        layers.append({
            "ln1_w": lp["ln1_w"], "ln1_b": lp["ln1_b"],
            "w_qkv": jnp.concatenate([lp["wq"], lp["wk"], lp["wv"]], axis=1).astype(bf),
            "b_qkv": jnp.concatenate([lp["bq"], lp["bk"], lp["bv"]], axis=1),
            "qln_w": lp["qln_w"] * scale, "qln_b": lp["qln_b"] * scale,
            "kln_w": lp["kln_w"], "kln_b": lp["kln_b"],
            "wo": lp["wo"].astype(bf), "bo": lp["bo"],
            "ln2_w": lp["ln2_w"], "ln2_b": lp["ln2_b"],
            "w1": lp["w1"].astype(bf), "b1": lp["b1"],
            "w2": lp["w2"].astype(bf), "b2": lp["b2"],
        })
    return {"layers": layers, "final_w": params["final_w"], "final_b": params["final_b"]}


def decoder_layer_pallas(hidden, key_pad, cos_d, sinp_d, sinn_d, lp, num_heads, rot,
                         final_w=None, final_b=None):
    B, S, H = hidden.shape
    D = H // num_heads
    inter = lp["w1"].shape[1]
    apply_final = final_w is not None

    weights = [lp["ln1_w"], lp["ln1_b"], lp["w_qkv"], lp["b_qkv"],
               lp["qln_w"], lp["qln_b"], lp["kln_w"], lp["kln_b"],
               lp["wo"], lp["bo"], lp["ln2_w"], lp["ln2_b"],
               lp["w1"], lp["b1"], lp["w2"], lp["b2"]]
    if apply_final:
        weights += [final_w, final_b]

    # grid-invariant operands: whole-array, single-buffered VMEM residents
    vmem_whole = pl.BlockSpec(memory_space=pltpu.MemorySpace.VMEM)
    in_specs = ([pl.BlockSpec((1, S, H), lambda b: (b, 0, 0)),
                 pl.BlockSpec((1, 1, S), lambda b: (b, 0, 0))]
                + [vmem_whole] * (3 + len(weights)))
    out_specs = (pl.BlockSpec((1, S, H), lambda b: (b, 0, 0)),
                 pl.BlockSpec((1, S, H), lambda b: (b, 0, 0)),
                 pl.BlockSpec((1, S, H), lambda b: (b, 0, 0)))
    out_shape = (jax.ShapeDtypeStruct((B, S, H), jnp.float32),    # hidden out
                 jax.ShapeDtypeStruct((B, S, H), jnp.bfloat16),   # present K, lane-dense
                 jax.ShapeDtypeStruct((B, S, H), jnp.bfloat16))   # present V, lane-dense

    flops = B * (2 * S * H * 3 * H + 2 * S * H * H + 4 * S * H * inter
                 + num_heads * 4 * S * S * D)
    bytes_accessed = (4 * B * S * H) * 2 + (2 * B * S * H) * 2 + 4 * B * S \
        + 2 * (4 * H * H + 2 * H * inter) + 4 * (8 * H + 3 * H + inter + 4 * D) \
        + 4 * 3 * S * D
    transcendentals = B * num_heads * S * S + 4 * B * S

    kernel = functools.partial(_decoder_layer_kernel, num_heads, D, rot // 2, apply_final)
    y, k_flat, v_flat = pl.pallas_call(
        kernel,
        grid=(B,),
        in_specs=in_specs,
        out_specs=out_specs,
        out_shape=out_shape,
        scratch_shapes=[pltpu.VMEM((S, H), jnp.bfloat16)],        # per-head ctx slab
        compiler_params=pltpu.CompilerParams(
            dimension_semantics=("parallel",),
            vmem_limit_bytes=48 * 1024 * 1024),
        cost_estimate=pl.CostEstimate(flops=int(flops),
                                      transcendentals=int(transcendentals),
                                      bytes_accessed=int(bytes_accessed)),
    )(hidden, key_pad, cos_d, sinp_d, sinn_d, *weights)

    # lane-dense bf16 presents -> (B, NH, S, D); reshape/transpose stays in bf16
    k4 = k_flat.reshape(B, S, num_heads, D).transpose(0, 2, 1, 3)
    v4 = v_flat.reshape(B, S, num_heads, D).transpose(0, 2, 1, 3)
    return y, k4, v4


def fuyu_img_decoder_forward(inputs_embeds, attention_mask, prepared, num_heads, rot_dim):
    """Mirrors FuyuModelImgDecoderWrapper.forward: returns (hidden_states, *presents),
    presents[i] = (key_states_i, value_states_i) of shape (B, NH, S, D)."""
    B, S, H = inputs_embeds.shape
    D = H // num_heads
    cos_d, sinp_d, sinn_d, _, _ = rotary_tables(S, D, rot_dim)   # position_ids = arange(S)
    # HF additive mask = causal + per-key padding; causal is regenerated in-kernel,
    # so only the per-key additive row (last query row) is streamed.
    key_pad = attention_mask[:, :, -1, :]                        # (B, 1, S)
    hidden = inputs_embeds
    presents = []
    n_layers = len(prepared["layers"])
    for i, lp in enumerate(prepared["layers"]):
        last = (i == n_layers - 1)
        hidden, k, v = decoder_layer_pallas(
            hidden, key_pad, cos_d, sinp_d, sinn_d, lp, num_heads, rot_dim,
            final_w=prepared["final_w"] if last else None,
            final_b=prepared["final_b"] if last else None)
        presents.append((k, v))
    return (hidden, *presents)


# ----------------------------------------------------------- deterministic synthetic init
def init_params(key, num_layers, H, NH, D, I):
    # convention: y = x @ W + b, i.e. W is the transpose of torch.nn.Linear.weight
    def nrm(k, shape, scale=0.02):
        return scale * jax.random.normal(k, shape, dtype=jnp.float32)

    layers = []
    for _ in range(num_layers):
        key, *ks = jax.random.split(key, 21)
        ks = iter(ks)
        layers.append({
            "ln1_w": 1.0 + nrm(next(ks), (1, H)), "ln1_b": nrm(next(ks), (1, H)),
            "wq": nrm(next(ks), (H, H)), "bq": nrm(next(ks), (1, H)),
            "wk": nrm(next(ks), (H, H)), "bk": nrm(next(ks), (1, H)),
            "wv": nrm(next(ks), (H, H)), "bv": nrm(next(ks), (1, H)),
            "qln_w": 1.0 + nrm(next(ks), (1, D)), "qln_b": nrm(next(ks), (1, D)),
            "kln_w": 1.0 + nrm(next(ks), (1, D)), "kln_b": nrm(next(ks), (1, D)),
            "wo": nrm(next(ks), (H, H)), "bo": nrm(next(ks), (1, H)),
            "ln2_w": 1.0 + nrm(next(ks), (1, H)), "ln2_b": nrm(next(ks), (1, H)),
            "w1": nrm(next(ks), (H, I)), "b1": nrm(next(ks), (1, I)),
            "w2": nrm(next(ks), (I, H)), "b2": nrm(next(ks), (1, H)),
        })
    key, kf1, kf2 = jax.random.split(key, 3)
    return {"layers": layers,
            "final_w": 1.0 + nrm(kf1, (1, H)),
            "final_b": nrm(kf2, (1, H))}


# -------------------------------------------------------------------- pure-JAX reference
def _ln_ref(x, w, b):
    mu = x.mean(-1, keepdims=True)
    var = jnp.square(x - mu).mean(-1, keepdims=True)
    return (x - mu) / jnp.sqrt(var + EPS) * w + b


def ref_forward(x, mask, params, num_heads, rot):
    B, S, H = x.shape
    D = H // num_heads
    _, _, _, cos, sin = rotary_tables(S, D, rot)
    P = lax.Precision.HIGHEST
    hidden, presents = x, []
    for lp in params["layers"]:
        res = hidden
        xn = _ln_ref(hidden, lp["ln1_w"][0], lp["ln1_b"][0])

        def proj(w, b):
            return (jnp.einsum("bsh,hd->bsd", xn, w, precision=P) + b[0]).reshape(B, S, num_heads, D)

        q, k, v = proj(lp["wq"], lp["bq"]), proj(lp["wk"], lp["bk"]), proj(lp["wv"], lp["bv"])
        q = _ln_ref(q, lp["qln_w"][0], lp["qln_b"][0])
        k = _ln_ref(k, lp["kln_w"][0], lp["kln_b"][0])
        q, k, v = (t.transpose(0, 2, 1, 3) for t in (q, k, v))    # (B, NH, S, D)

        def rope(t):
            t_rot, t_pass = t[..., :rot], t[..., rot:]
            half = rot // 2
            rh = jnp.concatenate([-t_rot[..., half:], t_rot[..., :half]], axis=-1)
            return jnp.concatenate([t_rot * cos + rh * sin, t_pass], axis=-1)

        q, k = rope(q), rope(k)
        scores = jnp.einsum("bhqd,bhkd->bhqk", q, k, precision=P) / math.sqrt(D) + mask
        attn = jax.nn.softmax(scores, axis=-1)
        ctx = jnp.einsum("bhqk,bhkd->bhqd", attn, v, precision=P)
        ctx = ctx.transpose(0, 2, 1, 3).reshape(B, S, H)
        attn_out = jnp.einsum("bsh,hk->bsk", ctx, lp["wo"], precision=P) + lp["bo"][0]
        h1 = res + attn_out
        xn2 = _ln_ref(h1, lp["ln2_w"][0], lp["ln2_b"][0])
        z = jnp.square(jnp.maximum(jnp.einsum("bsh,hi->bsi", xn2, lp["w1"], precision=P) + lp["b1"][0], 0.0))
        mlp = jnp.einsum("bsi,ih->bsh", z, lp["w2"], precision=P) + lp["b2"][0]
        hidden = h1 + mlp
        presents.append((k, v))
    hidden = _ln_ref(hidden, params["final_w"][0], params["final_b"][0])
    return (hidden, *presents)


# --------------------------------------------------------------------------------- main
if __name__ == "__main__":
    B, S, H, NH, LAYERS = 2, 16, 128, 2, 2
    D = H // NH
    I = 4 * H
    ROT = D // 2          # Persimmon partial_rotary_factor = 0.5

    key = jax.random.PRNGKey(0)
    k_in, k_par = jax.random.split(key)
    inputs_embeds = jax.random.normal(k_in, (B, S, H), dtype=jnp.float32)

    # HF-style additive mask: causal + per-key padding (last 3 keys of batch 1 padded)
    attend = jnp.ones((B, S), dtype=bool).at[1, S - 3:].set(False)
    pad_add = jnp.where(attend, 0.0, NEG_INF).astype(jnp.float32)           # (B, S)
    causal = jnp.where(jnp.tril(jnp.ones((S, S), dtype=bool)), 0.0, NEG_INF).astype(jnp.float32)
    attention_mask = causal[None, None] + pad_add[:, None, None, :]         # (B,1,S,S)

    params = init_params(k_par, LAYERS, H, NH, D, I)
    prepared = prepare_params(params, NH)        # one-time weight prep (bf16, fused QKV)

    outs = fuyu_img_decoder_forward(inputs_embeds, attention_mask, prepared, NH, ROT)
    outs = jax.block_until_ready(outs)

    refs = ref_forward(inputs_embeds, attention_mask, params, NH, ROT)
    flat_o = jax.tree_util.tree_leaves(outs)
    flat_r = jax.tree_util.tree_leaves(refs)
    assert len(flat_o) == len(flat_r) == 1 + 2 * LAYERS
    for o, r in zip(flat_o, flat_r):
        err = float(jnp.max(jnp.abs(o.astype(jnp.float32) - r)))
        # kernel uses bf16 MXU inputs / bf16 presents (f32 accumulation); ref is f32 HIGHEST
        assert err < 5e-2, f"mismatch vs reference: max abs err = {err}"

    print("KERNEL_OK")
</pallas_src>

<mosaic_0001>
module attributes {stable_mosaic.version = 11 : i64} {
  func.func @_decoder_layer_kernel(%arg0: i32, %arg1: memref<1x16x128xf32, #tpu.memory_space<vmem>>, %arg2: memref<1x1x16xf32, #tpu.memory_space<vmem>>, %arg3: memref<16x64xf32, #tpu.memory_space<vmem>>, %arg4: memref<16x64xf32, #tpu.memory_space<vmem>>, %arg5: memref<16x64xf32, #tpu.memory_space<vmem>>, %arg6: memref<1x128xf32, #tpu.memory_space<vmem>>, %arg7: memref<1x128xf32, #tpu.memory_space<vmem>>, %arg8: memref<128x384xbf16, #tpu.memory_space<vmem>>, %arg9: memref<1x384xf32, #tpu.memory_space<vmem>>, %arg10: memref<1x64xf32, #tpu.memory_space<vmem>>, %arg11: memref<1x64xf32, #tpu.memory_space<vmem>>, %arg12: memref<1x64xf32, #tpu.memory_space<vmem>>, %arg13: memref<1x64xf32, #tpu.memory_space<vmem>>, %arg14: memref<128x128xbf16, #tpu.memory_space<vmem>>, %arg15: memref<1x128xf32, #tpu.memory_space<vmem>>, %arg16: memref<1x128xf32, #tpu.memory_space<vmem>>, %arg17: memref<1x128xf32, #tpu.memory_space<vmem>>, %arg18: memref<128x512xbf16, #tpu.memory_space<vmem>>, %arg19: memref<1x512xf32, #tpu.memory_space<vmem>>, %arg20: memref<512x128xbf16, #tpu.memory_space<vmem>>, %arg21: memref<1x128xf32, #tpu.memory_space<vmem>>, %arg22: memref<1x16x128xf32, #tpu.memory_space<vmem>>, %arg23: memref<1x16x128xbf16, #tpu.memory_space<vmem>>, %arg24: memref<1x16x128xbf16, #tpu.memory_space<vmem>>, %arg25: memref<16x128xbf16, #tpu.memory_space<vmem>>) attributes {dimension_semantics = [#tpu.dimension_semantics<parallel>], iteration_bounds = array<i64: 2>, scalar_prefetch = 0 : i64, scratch_operands = 1 : i64, tpu.core_type = #tpu.core_type<tc>, window_params = [{transform_indices = @transform_0, window_bounds = array<i64: 1, 16, 128>}, {transform_indices = @transform_1, window_bounds = array<i64: 1, 1, 16>}, {pipeline_mode = #tpu.pipeline_mode<synchronous>, transform_indices = @transform_2, window_bounds = array<i64: 16, 64>}, {pipeline_mode = #tpu.pipeline_mode<synchronous>, transform_indices = @transform_3, window_bounds = array<i64: 16, 64>}, {pipeline_mode = #tpu.pipeline_mode<synchronous>, transform_indices = @transform_4, window_bounds = array<i64: 16, 64>}, {pipeline_mode = #tpu.pipeline_mode<synchronous>, transform_indices = @transform_5, window_bounds = array<i64: 1, 128>}, {pipeline_mode = #tpu.pipeline_mode<synchronous>, transform_indices = @transform_6, window_bounds = array<i64: 1, 128>}, {pipeline_mode = #tpu.pipeline_mode<synchronous>, transform_indices = @transform_7, window_bounds = array<i64: 128, 384>}, {pipeline_mode = #tpu.pipeline_mode<synchronous>, transform_indices = @transform_8, window_bounds = array<i64: 1, 384>}, {pipeline_mode = #tpu.pipeline_mode<synchronous>, transform_indices = @transform_9, window_bounds = array<i64: 1, 64>}, {pipeline_mode = #tpu.pipeline_mode<synchronous>, transform_indices = @transform_10, window_bounds = array<i64: 1, 64>}, {pipeline_mode = #tpu.pipeline_mode<synchronous>, transform_indices = @transform_11, window_bounds = array<i64: 1, 64>}, {pipeline_mode = #tpu.pipeline_mode<synchronous>, transform_indices = @transform_12, window_bounds = array<i64: 1, 64>}, {pipeline_mode = #tpu.pipeline_mode<synchronous>, transform_indices = @transform_13, window_bounds = array<i64: 128, 128>}, {pipeline_mode = #tpu.pipeline_mode<synchronous>, transform_indices = @transform_14, window_bounds = array<i64: 1, 128>}, {pipeline_mode = #tpu.pipeline_mode<synchronous>, transform_indices = @transform_15, window_bounds = array<i64: 1, 128>}, {pipeline_mode = #tpu.pipeline_mode<synchronous>, transform_indices = @transform_16, window_bounds = array<i64: 1, 128>}, {pipeline_mode = #tpu.pipeline_mode<synchronous>, transform_indices = @transform_17, window_bounds = array<i64: 128, 512>}, {pipeline_mode = #tpu.pipeline_mode<synchronous>, transform_indices = @transform_18, window_bounds = array<i64: 1, 512>}, {pipeline_mode = #tpu.pipeline_mode<synchronous>, transform_indices = @transform_19, window_bounds = array<i64: 512, 128>}, {pipeline_mode = #tpu.pipeline_mode<synchronous>, transform_indices = @transform_20, window_bounds = array<i64: 1, 128>}, {transform_indices = @transform_21, window_bounds = array<i64: 1, 16, 128>}, {transform_indices = @transform_22, window_bounds = array<i64: 1, 16, 128>}, {transform_indices = @transform_23, window_bounds = array<i64: 1, 16, 128>}]} {
    %c0 = arith.constant 0 : index
    %c0_0 = arith.constant 0 : index
    %c0_1 = arith.constant 0 : index
    %0 = vector.load %arg1[%c0, %c0_0, %c0_1] : memref<1x16x128xf32, #tpu.memory_space<vmem>>, vector<1x16x128xf32>
    %1 = vector.shape_cast %0 : vector<1x16x128xf32> to vector<16x128xf32>
    %2 = tpu.iota {dimensions = array<i32: 0>} : vector<16x16xi32>
    %3 = tpu.iota {dimensions = array<i32: 1>} : vector<16x16xi32>
    %4 = arith.cmpi sle, %3, %2 : vector<16x16xi32>
    %cst = arith.constant 0.000000e+00 : f32
    %cst_2 = arith.constant -1.000000e+09 : f32
    %5 = vector.broadcast %cst : f32 to vector<16x16xf32>
    %6 = vector.broadcast %cst_2 : f32 to vector<16x16xf32>
    %7 = arith.select %4, %5, %6 : vector<16x16xi1>, vector<16x16xf32>
    %c0_3 = arith.constant 0 : index
    %c0_4 = arith.constant 0 : index
    %c0_5 = arith.constant 0 : index
    %8 = vector.load %arg2[%c0_3, %c0_4, %c0_5] : memref<1x1x16xf32, #tpu.memory_space<vmem>>, vector<1x1x16xf32>
    %9 = vector.shape_cast %8 : vector<1x1x16xf32> to vector<1x16xf32>
    %10 = vector.broadcast %9 : vector<1x16xf32> to vector<16x16xf32>
    %11 = arith.addf %7, %10 : vector<16x16xf32>
    %c0_6 = arith.constant 0 : index
    %c0_7 = arith.constant 0 : index
    %12 = vector.load %arg6[%c0_6, %c0_7] : memref<1x128xf32, #tpu.memory_space<vmem>>, vector<1x128xf32>
    %c0_8 = arith.constant 0 : index
    %c0_9 = arith.constant 0 : index
    %13 = vector.load %arg7[%c0_8, %c0_9] : memref<1x128xf32, #tpu.memory_space<vmem>>, vector<1x128xf32>
    %cst_10 = arith.constant dense<0.000000e+00> : vector<16xf32>
    %14 = vector.multi_reduction <add>, %1, %cst_10 [1] : vector<16x128xf32> to vector<16xf32>
    %15 = vector.shape_cast %14 : vector<16xf32> to vector<16x1xf32>
    %cst_11 = arith.constant 1.280000e+02 : f32
    %16 = vector.broadcast %cst_11 : f32 to vector<16x1xf32>
    %17 = arith.divf %15, %16 : vector<16x1xf32>
    %18 = vector.broadcast %17 : vector<16x1xf32> to vector<16x128xf32>
    %19 = arith.subf %1, %18 : vector<16x128xf32>
    %20 = arith.mulf %19, %19 : vector<16x128xf32>
    %cst_12 = arith.constant dense<0.000000e+00> : vector<16xf32>
    %21 = vector.multi_reduction <add>, %20, %cst_12 [1] : vector<16x128xf32> to vector<16xf32>
    %22 = vector.shape_cast %21 : vector<16xf32> to vector<16x1xf32>
    %cst_13 = arith.constant 1.280000e+02 : f32
    %23 = vector.broadcast %cst_13 : f32 to vector<16x1xf32>
    %24 = arith.divf %22, %23 : vector<16x1xf32>
    %25 = vector.broadcast %17 : vector<16x1xf32> to vector<16x128xf32>
    %26 = arith.subf %1, %25 : vector<16x128xf32>
    %cst_14 = arith.constant 9.99999974E-6 : f32
    %27 = vector.broadcast %cst_14 : f32 to vector<16x1xf32>
    %28 = arith.addf %24, %27 : vector<16x1xf32>
    %29 = math.rsqrt %28 : vector<16x1xf32>
    %30 = vector.broadcast %29 : vector<16x1xf32> to vector<16x128xf32>
    %31 = arith.mulf %26, %30 : vector<16x128xf32>
    %32 = vector.broadcast %12 : vector<1x128xf32> to vector<16x128xf32>
    %33 = arith.mulf %31, %32 : vector<16x128xf32>
    %34 = vector.broadcast %13 : vector<1x128xf32> to vector<16x128xf32>
    %35 = arith.addf %33, %34 : vector<16x128xf32>
    %36 = arith.truncf %35 : vector<16x128xf32> to vector<16x128xbf16>
    %c0_15 = arith.constant 0 : index
    %c0_16 = arith.constant 0 : index
    %37 = vector.load %arg8[%c0_15, %c0_16] : memref<128x384xbf16, #tpu.memory_space<vmem>>, vector<128x384xbf16>
    %cst_17 = arith.constant dense<0.000000e+00> : vector<16x384xf32>
    %38 = tpu.matmul %36, %37, %cst_17 {dimension_numbers = #tpu.dot_dimension_numbers<[1], [0], [0], [1], [0, 0, 1, 1], [], []>} : vector<16x128xbf16>, vector<128x384xbf16>, vector<16x384xf32> -> vector<16x384xf32>
    %c0_18 = arith.constant 0 : index
    %c0_19 = arith.constant 0 : index
    %39 = vector.load %arg9[%c0_18, %c0_19] : memref<1x384xf32, #tpu.memory_space<vmem>>, vector<1x384xf32>
    %40 = vector.broadcast %39 : vector<1x384xf32> to vector<16x384xf32>
    %41 = arith.addf %38, %40 : vector<16x384xf32>
    %42 = vector.extract_strided_slice %41 {offsets = [0, 0], sizes = [16, 128], strides = [1, 1]} : vector<16x384xf32> to vector<16x128xf32>
    %43 = vector.extract_strided_slice %41 {offsets = [0, 128], sizes = [16, 128], strides = [1, 1]} : vector<16x384xf32> to vector<16x128xf32>
    %44 = vector.extract_strided_slice %41 {offsets = [0, 256], sizes = [16, 128], strides = [1, 1]} : vector<16x384xf32> to vector<16x128xf32>
    %c0_20 = arith.constant 0 : index
    %c0_21 = arith.constant 0 : index
    %45 = vector.load %arg3[%c0_20, %c0_21] : memref<16x64xf32, #tpu.memory_space<vmem>>, vector<16x64xf32>
    %46 = tpu.concatenate %45, %45 in 1 : vector<16x64xf32>, vector<16x64xf32> -> vector<16x128xf32>
    %c0_22 = arith.constant 0 : index
    %c0_23 = arith.constant 0 : index
    %47 = vector.load %arg4[%c0_22, %c0_23] : memref<16x64xf32, #tpu.memory_space<vmem>>, vector<16x64xf32>
    %48 = tpu.concatenate %47, %47 in 1 : vector<16x64xf32>, vector<16x64xf32> -> vector<16x128xf32>
    %c0_24 = arith.constant 0 : index
    %c0_25 = arith.constant 0 : index
    %49 = vector.load %arg5[%c0_24, %c0_25] : memref<16x64xf32, #tpu.memory_space<vmem>>, vector<16x64xf32>
    %50 = tpu.concatenate %49, %49 in 1 : vector<16x64xf32>, vector<16x64xf32> -> vector<16x128xf32>
    %51 = vector.extract_strided_slice %42 {offsets = [0, 0], sizes = [16, 64], strides = [1, 1]} : vector<16x128xf32> to vector<16x64xf32>
    %c0_26 = arith.constant 0 : index
    %c0_27 = arith.constant 0 : index
    %52 = vector.load %arg10[%c0_26, %c0_27] : memref<1x64xf32, #tpu.memory_space<vmem>>, vector<1x64xf32>
    %c0_28 = arith.constant 0 : index
    %c0_29 = arith.constant 0 : index
    %53 = vector.load %arg11[%c0_28, %c0_29] : memref<1x64xf32, #tpu.memory_space<vmem>>, vector<1x64xf32>
    %cst_30 = arith.constant dense<0.000000e+00> : vector<16xf32>
    %54 = vector.multi_reduction <add>, %51, %cst_30 [1] : vector<16x64xf32> to vector<16xf32>
    %55 = vector.shape_cast %54 : vector<16xf32> to vector<16x1xf32>
    %cst_31 = arith.constant 6.400000e+01 : f32
    %56 = vector.broadcast %cst_31 : f32 to vector<16x1xf32>
    %57 = arith.divf %55, %56 : vector<16x1xf32>
    %58 = vector.broadcast %57 : vector<16x1xf32> to vector<16x64xf32>
    %59 = arith.subf %51, %58 : vector<16x64xf32>
    %60 = arith.mulf %59, %59 : vector<16x64xf32>
    %cst_32 = arith.constant dense<0.000000e+00> : vector<16xf32>
    %61 = vector.multi_reduction <add>, %60, %cst_32 [1] : vector<16x64xf32> to vector<16xf32>
    %62 = vector.shape_cast %61 : vector<16xf32> to vector<16x1xf32>
    %cst_33 = arith.constant 6.400000e+01 : f32
    %63 = vector.broadcast %cst_33 : f32 to vector<16x1xf32>
    %64 = arith.divf %62, %63 : vector<16x1xf32>
    %65 = vector.broadcast %57 : vector<16x1xf32> to vector<16x64xf32>
    %66 = arith.subf %51, %65 : vector<16x64xf32>
    %cst_34 = arith.constant 9.99999974E-6 : f32
    %67 = vector.broadcast %cst_34 : f32 to vector<16x1xf32>
    %68 = arith.addf %64, %67 : vector<16x1xf32>
    %69 = math.rsqrt %68 : vector<16x1xf32>
    %70 = vector.broadcast %69 : vector<16x1xf32> to vector<16x64xf32>
    %71 = arith.mulf %66, %70 : vector<16x64xf32>
    %72 = vector.broadcast %52 : vector<1x64xf32> to vector<16x64xf32>
    %73 = arith.mulf %71, %72 : vector<16x64xf32>
    %74 = vector.broadcast %53 : vector<1x64xf32> to vector<16x64xf32>
    %75 = arith.addf %73, %74 : vector<16x64xf32>
    %76 = vector.extract_strided_slice %43 {offsets = [0, 0], sizes = [16, 64], strides = [1, 1]} : vector<16x128xf32> to vector<16x64xf32>
    %c0_35 = arith.constant 0 : index
    %c0_36 = arith.constant 0 : index
    %77 = vector.load %arg12[%c0_35, %c0_36] : memref<1x64xf32, #tpu.memory_space<vmem>>, vector<1x64xf32>
    %c0_37 = arith.constant 0 : index
    %c0_38 = arith.constant 0 : index
    %78 = vector.load %arg13[%c0_37, %c0_38] : memref<1x64xf32, #tpu.memory_space<vmem>>, vector<1x64xf32>
    %cst_39 = arith.constant dense<0.000000e+00> : vector<16xf32>
    %79 = vector.multi_reduction <add>, %76, %cst_39 [1] : vector<16x64xf32> to vector<16xf32>
    %80 = vector.shape_cast %79 : vector<16xf32> to vector<16x1xf32>
    %cst_40 = arith.constant 6.400000e+01 : f32
    %81 = vector.broadcast %cst_40 : f32 to vector<16x1xf32>
    %82 = arith.divf %80, %81 : vector<16x1xf32>
    %83 = vector.broadcast %82 : vector<16x1xf32> to vector<16x64xf32>
    %84 = arith.subf %76, %83 : vector<16x64xf32>
    %85 = arith.mulf %84, %84 : vector<16x64xf32>
    %cst_41 = arith.constant dense<0.000000e+00> : vector<16xf32>
    %86 = vector.multi_reduction <add>, %85, %cst_41 [1] : vector<16x64xf32> to vector<16xf32>
    %87 = vector.shape_cast %86 : vector<16xf32> to vector<16x1xf32>
    %cst_42 = arith.constant 6.400000e+01 : f32
    %88 = vector.broadcast %cst_42 : f32 to vector<16x1xf32>
    %89 = arith.divf %87, %88 : vector<16x1xf32>
    %90 = vector.broadcast %82 : vector<16x1xf32> to vector<16x64xf32>
    %91 = arith.subf %76, %90 : vector<16x64xf32>
    %cst_43 = arith.constant 9.99999974E-6 : f32
    %92 = vector.broadcast %cst_43 : f32 to vector<16x1xf32>
    %93 = arith.addf %89, %92 : vector<16x1xf32>
    %94 = math.rsqrt %93 : vector<16x1xf32>
    %95 = vector.broadcast %94 : vector<16x1xf32> to vector<16x64xf32>
    %96 = arith.mulf %91, %95 : vector<16x64xf32>
    %97 = vector.broadcast %77 : vector<1x64xf32> to vector<16x64xf32>
    %98 = arith.mulf %96, %97 : vector<16x64xf32>
    %99 = vector.broadcast %78 : vector<1x64xf32> to vector<16x64xf32>
    %100 = arith.addf %98, %99 : vector<16x64xf32>
    %101 = vector.extract_strided_slice %42 {offsets = [0, 64], sizes = [16, 64], strides = [1, 1]} : vector<16x128xf32> to vector<16x64xf32>
    %c0_44 = arith.constant 0 : index
    %c0_45 = arith.constant 0 : index
    %102 = vector.load %arg10[%c0_44, %c0_45] : memref<1x64xf32, #tpu.memory_space<vmem>>, vector<1x64xf32>
    %c0_46 = arith.constant 0 : index
    %c0_47 = arith.constant 0 : index
    %103 = vector.load %arg11[%c0_46, %c0_47] : memref<1x64xf32, #tpu.memory_space<vmem>>, vector<1x64xf32>
    %cst_48 = arith.constant dense<0.000000e+00> : vector<16xf32>
    %104 = vector.multi_reduction <add>, %101, %cst_48 [1] : vector<16x64xf32> to vector<16xf32>
    %105 = vector.shape_cast %104 : vector<16xf32> to vector<16x1xf32>
    %cst_49 = arith.constant 6.400000e+01 : f32
    %106 = vector.broadcast %cst_49 : f32 to vector<16x1xf32>
    %107 = arith.divf %105, %106 : vector<16x1xf32>
    %108 = vector.broadcast %107 : vector<16x1xf32> to vector<16x64xf32>
    %109 = arith.subf %101, %108 : vector<16x64xf32>
    %110 = arith.mulf %109, %109 : vector<16x64xf32>
    %cst_50 = arith.constant dense<0.000000e+00> : vector<16xf32>
    %111 = vector.multi_reduction <add>, %110, %cst_50 [1] : vector<16x64xf32> to vector<16xf32>
    %112 = vector.shape_cast %111 : vector<16xf32> to vector<16x1xf32>
    %cst_51 = arith.constant 6.400000e+01 : f32
    %113 = vector.broadcast %cst_51 : f32 to vector<16x1xf32>
    %114 = arith.divf %112, %113 : vector<16x1xf32>
    %115 = vector.broadcast %107 : vector<16x1xf32> to vector<16x64xf32>
    %116 = arith.subf %101, %115 : vector<16x64xf32>
    %cst_52 = arith.constant 9.99999974E-6 : f32
    %117 = vector.broadcast %cst_52 : f32 to vector<16x1xf32>
    %118 = arith.addf %114, %117 : vector<16x1xf32>
    %119 = math.rsqrt %118 : vector<16x1xf32>
    %120 = vector.broadcast %119 : vector<16x1xf32> to vector<16x64xf32>
    %121 = arith.mulf %116, %120 : vector<16x64xf32>
    %122 = vector.broadcast %102 : vector<1x64xf32> to vector<16x64xf32>
    %123 = arith.mulf %121, %122 : vector<16x64xf32>
    %124 = vector.broadcast %103 : vector<1x64xf32> to vector<16x64xf32>
    %125 = arith.addf %123, %124 : vector<16x64xf32>
    %126 = vector.extract_strided_slice %43 {offsets = [0, 64], sizes = [16, 64], strides = [1, 1]} : vector<16x128xf32> to vector<16x64xf32>
    %c0_53 = arith.constant 0 : index
    %c0_54 = arith.constant 0 : index
    %127 = vector.load %arg12[%c0_53, %c0_54] : memref<1x64xf32, #tpu.memory_space<vmem>>, vector<1x64xf32>
    %c0_55 = arith.constant 0 : index
    %c0_56 = arith.constant 0 : index
    %128 = vector.load %arg13[%c0_55, %c0_56] : memref<1x64xf32, #tpu.memory_space<vmem>>, vector<1x64xf32>
    %cst_57 = arith.constant dense<0.000000e+00> : vector<16xf32>
    %129 = vector.multi_reduction <add>, %126, %cst_57 [1] : vector<16x64xf32> to vector<16xf32>
    %130 = vector.shape_cast %129 : vector<16xf32> to vector<16x1xf32>
    %cst_58 = arith.constant 6.400000e+01 : f32
    %131 = vector.broadcast %cst_58 : f32 to vector<16x1xf32>
    %132 = arith.divf %130, %131 : vector<16x1xf32>
    %133 = vector.broadcast %132 : vector<16x1xf32> to vector<16x64xf32>
    %134 = arith.subf %126, %133 : vector<16x64xf32>
    %135 = arith.mulf %134, %134 : vector<16x64xf32>
    %cst_59 = arith.constant dense<0.000000e+00> : vector<16xf32>
    %136 = vector.multi_reduction <add>, %135, %cst_59 [1] : vector<16x64xf32> to vector<16xf32>
    %137 = vector.shape_cast %136 : vector<16xf32> to vector<16x1xf32>
    %cst_60 = arith.constant 6.400000e+01 : f32
    %138 = vector.broadcast %cst_60 : f32 to vector<16x1xf32>
    %139 = arith.divf %137, %138 : vector<16x1xf32>
    %140 = vector.broadcast %132 : vector<16x1xf32> to vector<16x64xf32>
    %141 = arith.subf %126, %140 : vector<16x64xf32>
    %cst_61 = arith.constant 9.99999974E-6 : f32
    %142 = vector.broadcast %cst_61 : f32 to vector<16x1xf32>
    %143 = arith.addf %139, %142 : vector<16x1xf32>
    %144 = math.rsqrt %143 : vector<16x1xf32>
    %145 = vector.broadcast %144 : vector<16x1xf32> to vector<16x64xf32>
    %146 = arith.mulf %141, %145 : vector<16x64xf32>
    %147 = vector.broadcast %127 : vector<1x64xf32> to vector<16x64xf32>
    %148 = arith.mulf %146, %147 : vector<16x64xf32>
    %149 = vector.broadcast %128 : vector<1x64xf32> to vector<16x64xf32>
    %150 = arith.addf %148, %149 : vector<16x64xf32>
    %151 = tpu.concatenate %75, %125 in 1 : vector<16x64xf32>, vector<16x64xf32> -> vector<16x128xf32>
    %152 = tpu.concatenate %100, %150 in 1 : vector<16x64xf32>, vector<16x64xf32> -> vector<16x128xf32>
    %153 = vector.extract_strided_slice %151 {offsets = [0, 112], sizes = [16, 16], strides = [1, 1]} : vector<16x128xf32> to vector<16x16xf32>
    %154 = vector.extract_strided_slice %151 {offsets = [0, 0], sizes = [16, 112], strides = [1, 1]} : vector<16x128xf32> to vector<16x112xf32>
    %155 = tpu.concatenate %153, %154 in 1 : vector<16x16xf32>, vector<16x112xf32> -> vector<16x128xf32>
    %156 = vector.extract_strided_slice %151 {offsets = [0, 16], sizes = [16, 112], strides = [1, 1]} : vector<16x128xf32> to vector<16x112xf32>
    %157 = vector.extract_strided_slice %151 {offsets = [0, 0], sizes = [16, 16], strides = [1, 1]} : vector<16x128xf32> to vector<16x16xf32>
    %158 = tpu.concatenate %156, %157 in 1 : vector<16x112xf32>, vector<16x16xf32> -> vector<16x128xf32>
    %159 = arith.mulf %151, %46 : vector<16x128xf32>
    %160 = arith.mulf %155, %48 : vector<16x128xf32>
    %161 = arith.addf %159, %160 : vector<16x128xf32>
    %162 = arith.mulf %158, %50 : vector<16x128xf32>
    %163 = arith.subf %161, %162 : vector<16x128xf32>
    %164 = vector.extract_strided_slice %152 {offsets = [0, 112], sizes = [16, 16], strides = [1, 1]} : vector<16x128xf32> to vector<16x16xf32>
    %165 = vector.extract_strided_slice %152 {offsets = [0, 0], sizes = [16, 112], strides = [1, 1]} : vector<16x128xf32> to vector<16x112xf32>
    %166 = tpu.concatenate %164, %165 in 1 : vector<16x16xf32>, vector<16x112xf32> -> vector<16x128xf32>
    %167 = vector.extract_strided_slice %152 {offsets = [0, 16], sizes = [16, 112], strides = [1, 1]} : vector<16x128xf32> to vector<16x112xf32>
    %168 = vector.extract_strided_slice %152 {offsets = [0, 0], sizes = [16, 16], strides = [1, 1]} : vector<16x128xf32> to vector<16x16xf32>
    %169 = tpu.concatenate %167, %168 in 1 : vector<16x112xf32>, vector<16x16xf32> -> vector<16x128xf32>
    %170 = arith.mulf %152, %46 : vector<16x128xf32>
    %171 = arith.mulf %166, %48 : vector<16x128xf32>
    %172 = arith.addf %170, %171 : vector<16x128xf32>
    %173 = arith.mulf %169, %50 : vector<16x128xf32>
    %174 = arith.subf %172, %173 : vector<16x128xf32>
    %175 = arith.truncf %174 : vector<16x128xf32> to vector<16x128xbf16>
    %c0_62 = arith.constant 0 : index
    %c0_63 = arith.constant 0 : index
    %c0_64 = arith.constant 0 : index
    %176 = vector.load %arg23[%c0_62, %c0_63, %c0_64] : memref<1x16x128xbf16, #tpu.memory_space<vmem>>, vector<1x16x128xbf16>
    %177 = vector.shape_cast %176 : vector<1x16x128xbf16> to vector<16x128xbf16>
    %178 = vector.shape_cast %175 : vector<16x128xbf16> to vector<1x16x128xbf16>
    tpu.vector_store %arg23[%c0_62, %c0_63, %c0_64], %178 {strides = array<i32>} : memref<1x16x128xbf16, #tpu.memory_space<vmem>>, vector<1x16x128xbf16>,
    %179 = arith.truncf %44 : vector<16x128xf32> to vector<16x128xbf16>
    %c0_65 = arith.constant 0 : index
    %c0_66 = arith.constant 0 : index
    %c0_67 = arith.constant 0 : index
    %180 = vector.load %arg24[%c0_65, %c0_66, %c0_67] : memref<1x16x128xbf16, #tpu.memory_space<vmem>>, vector<1x16x128xbf16>
    %181 = vector.shape_cast %180 : vector<1x16x128xbf16> to vector<16x128xbf16>
    %182 = vector.shape_cast %179 : vector<16x128xbf16> to vector<1x16x128xbf16>
    tpu.vector_store %arg24[%c0_65, %c0_66, %c0_67], %182 {strides = array<i32>} : memref<1x16x128xbf16, #tpu.memory_space<vmem>>, vector<1x16x128xbf16>,
    %183 = vector.extract_strided_slice %163 {offsets = [0, 0], sizes = [16, 64], strides = [1, 1]} : vector<16x128xf32> to vector<16x64xf32>
    %184 = arith.truncf %183 : vector<16x64xf32> to vector<16x64xbf16>
    %185 = vector.extract_strided_slice %174 {offsets = [0, 0], sizes = [16, 64], strides = [1, 1]} : vector<16x128xf32> to vector<16x64xf32>
    %186 = arith.truncf %185 : vector<16x64xf32> to vector<16x64xbf16>
    %187 = vector.extract_strided_slice %44 {offsets = [0, 0], sizes = [16, 64], strides = [1, 1]} : vector<16x128xf32> to vector<16x64xf32>
    %188 = arith.truncf %187 : vector<16x64xf32> to vector<16x64xbf16>
    %cst_68 = arith.constant dense<0.000000e+00> : vector<16x16xf32>
    %189 = tpu.matmul %184, %186, %cst_68 {dimension_numbers = #tpu.dot_dimension_numbers<[1], [1], [0], [0], [0, 0, 1, 0], [], []>} : vector<16x64xbf16>, vector<16x64xbf16>, vector<16x16xf32> -> vector<16x16xf32>
    %190 = arith.addf %189, %11 : vector<16x16xf32>
    %cst_69 = arith.constant dense<0xFF800000> : vector<16xf32>
    %191 = vector.multi_reduction <maximumf>, %190, %cst_69 [1] : vector<16x16xf32> to vector<16xf32>
    %192 = vector.shape_cast %191 : vector<16xf32> to vector<16x1xf32>
    %193 = vector.broadcast %192 : vector<16x1xf32> to vector<16x16xf32>
    %194 = arith.subf %190, %193 : vector<16x16xf32>
    %195 = math.exp %194 : vector<16x16xf32>
    %cst_70 = arith.constant dense<0.000000e+00> : vector<16xf32>
    %196 = vector.multi_reduction <add>, %195, %cst_70 [1] : vector<16x16xf32> to vector<16xf32>
    %197 = vector.shape_cast %196 : vector<16xf32> to vector<16x1xf32>
    %198 = tpu.reciprocal %197 {approx = true} : vector<16x1xf32> -> vector<16x1xf32>
    %199 = vector.broadcast %198 : vector<16x1xf32> to vector<16x16xf32>
    %200 = arith.mulf %195, %199 : vector<16x16xf32>
    %201 = arith.truncf %200 : vector<16x16xf32> to vector<16x16xbf16>
    %cst_71 = arith.constant dense<0.000000e+00> : vector<16x64xf32>
    %202 = tpu.matmul %201, %188, %cst_71 {dimension_numbers = #tpu.dot_dimension_numbers<[1], [0], [0], [1], [0, 0, 1, 1], [], []>} : vector<16x16xbf16>, vector<16x64xbf16>, vector<16x64xf32> -> vector<16x64xf32>
    %203 = vector.extract_strided_slice %163 {offsets = [0, 64], sizes = [16, 64], strides = [1, 1]} : vector<16x128xf32> to vector<16x64xf32>
    %204 = arith.truncf %203 : vector<16x64xf32> to vector<16x64xbf16>
    %205 = vector.extract_strided_slice %174 {offsets = [0, 64], sizes = [16, 64], strides = [1, 1]} : vector<16x128xf32> to vector<16x64xf32>
    %206 = arith.truncf %205 : vector<16x64xf32> to vector<16x64xbf16>
    %207 = vector.extract_strided_slice %44 {offsets = [0, 64], sizes = [16, 64], strides = [1, 1]} : vector<16x128xf32> to vector<16x64xf32>
    %208 = arith.truncf %207 : vector<16x64xf32> to vector<16x64xbf16>
    %cst_72 = arith.constant dense<0.000000e+00> : vector<16x16xf32>
    %209 = tpu.matmul %204, %206, %cst_72 {dimension_numbers = #tpu.dot_dimension_numbers<[1], [1], [0], [0], [0, 0, 1, 0], [], []>} : vector<16x64xbf16>, vector<16x64xbf16>, vector<16x16xf32> -> vector<16x16xf32>
    %210 = arith.addf %209, %11 : vector<16x16xf32>
    %cst_73 = arith.constant dense<0xFF800000> : vector<16xf32>
    %211 = vector.multi_reduction <maximumf>, %210, %cst_73 [1] : vector<16x16xf32> to vector<16xf32>
    %212 = vector.shape_cast %211 : vector<16xf32> to vector<16x1xf32>
    %213 = vector.broadcast %212 : vector<16x1xf32> to vector<16x16xf32>
    %214 = arith.subf %210, %213 : vector<16x16xf32>
    %215 = math.exp %214 : vector<16x16xf32>
    %cst_74 = arith.constant dense<0.000000e+00> : vector<16xf32>
    %216 = vector.multi_reduction <add>, %215, %cst_74 [1] : vector<16x16xf32> to vector<16xf32>
    %217 = vector.shape_cast %216 : vector<16xf32> to vector<16x1xf32>
    %218 = tpu.reciprocal %217 {approx = true} : vector<16x1xf32> -> vector<16x1xf32>
    %219 = vector.broadcast %218 : vector<16x1xf32> to vector<16x16xf32>
    %220 = arith.mulf %215, %219 : vector<16x16xf32>
    %221 = arith.truncf %220 : vector<16x16xf32> to vector<16x16xbf16>
    %cst_75 = arith.constant dense<0.000000e+00> : vector<16x64xf32>
    %222 = tpu.matmul %221, %208, %cst_75 {dimension_numbers = #tpu.dot_dimension_numbers<[1], [0], [0], [1], [0, 0, 1, 1], [], []>} : vector<16x16xbf16>, vector<16x64xbf16>, vector<16x64xf32> -> vector<16x64xf32>
    %223 = tpu.concatenate %202, %222 in 1 : vector<16x64xf32>, vector<16x64xf32> -> vector<16x128xf32>
    %224 = arith.truncf %223 : vector<16x128xf32> to vector<16x128xbf16>
    %c0_76 = arith.constant 0 : index
    %c0_77 = arith.constant 0 : index
    %225 = vector.load %arg25[%c0_76, %c0_77] : memref<16x128xbf16, #tpu.memory_space<vmem>>, vector<16x128xbf16>
    tpu.vector_store %arg25[%c0_76, %c0_77], %224 {strides = array<i32>} : memref<16x128xbf16, #tpu.memory_space<vmem>>, vector<16x128xbf16>,
    %c0_78 = arith.constant 0 : index
    %c0_79 = arith.constant 0 : index
    %226 = vector.load %arg25[%c0_78, %c0_79] : memref<16x128xbf16, #tpu.memory_space<vmem>>, vector<16x128xbf16>
    %c0_80 = arith.constant 0 : index
    %c0_81 = arith.constant 0 : index
    %227 = vector.load %arg14[%c0_80, %c0_81] : memref<128x128xbf16, #tpu.memory_space<vmem>>, vector<128x128xbf16>
    %cst_82 = arith.constant dense<0.000000e+00> : vector<16x128xf32>
    %228 = tpu.matmul %226, %227, %cst_82 {dimension_numbers = #tpu.dot_dimension_numbers<[1], [0], [0], [1], [0, 0, 1, 1], [], []>} : vector<16x128xbf16>, vector<128x128xbf16>, vector<16x128xf32> -> vector<16x128xf32>
    %c0_83 = arith.constant 0 : index
    %c0_84 = arith.constant 0 : index
    %229 = vector.load %arg15[%c0_83, %c0_84] : memref<1x128xf32, #tpu.memory_space<vmem>>, vector<1x128xf32>
    %230 = vector.broadcast %229 : vector<1x128xf32> to vector<16x128xf32>
    %231 = arith.addf %228, %230 : vector<16x128xf32>
    %232 = arith.addf %1, %231 : vector<16x128xf32>
    %c0_85 = arith.constant 0 : index
    %c0_86 = arith.constant 0 : index
    %233 = vector.load %arg16[%c0_85, %c0_86] : memref<1x128xf32, #tpu.memory_space<vmem>>, vector<1x128xf32>
    %c0_87 = arith.constant 0 : index
    %c0_88 = arith.constant 0 : index
    %234 = vector.load %arg17[%c0_87, %c0_88] : memref<1x128xf32, #tpu.memory_space<vmem>>, vector<1x128xf32>
    %cst_89 = arith.constant dense<0.000000e+00> : vector<16xf32>
    %235 = vector.multi_reduction <add>, %232, %cst_89 [1] : vector<16x128xf32> to vector<16xf32>
    %236 = vector.shape_cast %235 : vector<16xf32> to vector<16x1xf32>
    %cst_90 = arith.constant 1.280000e+02 : f32
    %237 = vector.broadcast %cst_90 : f32 to vector<16x1xf32>
    %238 = arith.divf %236, %237 : vector<16x1xf32>
    %239 = vector.broadcast %238 : vector<16x1xf32> to vector<16x128xf32>
    %240 = arith.subf %232, %239 : vector<16x128xf32>
    %241 = arith.mulf %240, %240 : vector<16x128xf32>
    %cst_91 = arith.constant dense<0.000000e+00> : vector<16xf32>
    %242 = vector.multi_reduction <add>, %241, %cst_91 [1] : vector<16x128xf32> to vector<16xf32>
    %243 = vector.shape_cast %242 : vector<16xf32> to vector<16x1xf32>
    %cst_92 = arith.constant 1.280000e+02 : f32
    %244 = vector.broadcast %cst_92 : f32 to vector<16x1xf32>
    %245 = arith.divf %243, %244 : vector<16x1xf32>
    %246 = vector.broadcast %238 : vector<16x1xf32> to vector<16x128xf32>
    %247 = arith.subf %232, %246 : vector<16x128xf32>
    %cst_93 = arith.constant 9.99999974E-6 : f32
    %248 = vector.broadcast %cst_93 : f32 to vector<16x1xf32>
    %249 = arith.addf %245, %248 : vector<16x1xf32>
    %250 = math.rsqrt %249 : vector<16x1xf32>
    %251 = vector.broadcast %250 : vector<16x1xf32> to vector<16x128xf32>
    %252 = arith.mulf %247, %251 : vector<16x128xf32>
    %253 = vector.broadcast %233 : vector<1x128xf32> to vector<16x128xf32>
    %254 = arith.mulf %252, %253 : vector<16x128xf32>
    %255 = vector.broadcast %234 : vector<1x128xf32> to vector<16x128xf32>
    %256 = arith.addf %254, %255 : vector<16x128xf32>
    %257 = arith.truncf %256 : vector<16x128xf32> to vector<16x128xbf16>
    %c0_94 = arith.constant 0 : index
    %c0_95 = arith.constant 0 : index
    %258 = vector.load %arg18[%c0_94, %c0_95] : memref<128x512xbf16, #tpu.memory_space<vmem>>, vector<128x512xbf16>
    %cst_96 = arith.constant dense<0.000000e+00> : vector<16x512xf32>
    %259 = tpu.matmul %257, %258, %cst_96 {dimension_numbers = #tpu.dot_dimension_numbers<[1], [0], [0], [1], [0, 0, 1, 1], [], []>} : vector<16x128xbf16>, vector<128x512xbf16>, vector<16x512xf32> -> vector<16x512xf32>
    %c0_97 = arith.constant 0 : index
    %c0_98 = arith.constant 0 : index
    %260 = vector.load %arg19[%c0_97, %c0_98] : memref<1x512xf32, #tpu.memory_space<vmem>>, vector<1x512xf32>
    %261 = vector.broadcast %260 : vector<1x512xf32> to vector<16x512xf32>
    %262 = arith.addf %259, %261 : vector<16x512xf32>
    %cst_99 = arith.constant 0.000000e+00 : f32
    %263 = vector.broadcast %cst_99 : f32 to vector<16x512xf32>
    %264 = arith.maximumf %262, %263 : vector<16x512xf32>
    %265 = arith.mulf %264, %264 : vector<16x512xf32>
    %266 = arith.truncf %265 : vector<16x512xf32> to vector<16x512xbf16>
    %c0_100 = arith.constant 0 : index
    %c0_101 = arith.constant 0 : index
    %267 = vector.load %arg20[%c0_100, %c0_101] : memref<512x128xbf16, #tpu.memory_space<vmem>>, vector<512x128xbf16>
    %cst_102 = arith.constant dense<0.000000e+00> : vector<16x128xf32>
    %268 = tpu.matmul %266, %267, %cst_102 {dimension_numbers = #tpu.dot_dimension_numbers<[1], [0], [0], [1], [0, 0, 1, 1], [], []>} : vector<16x512xbf16>, vector<512x128xbf16>, vector<16x128xf32> -> vector<16x128xf32>
    %c0_103 = arith.constant 0 : index
    %c0_104 = arith.constant 0 : index
    %269 = vector.load %arg21[%c0_103, %c0_104] : memref<1x128xf32, #tpu.memory_space<vmem>>, vector<1x128xf32>
    %270 = vector.broadcast %269 : vector<1x128xf32> to vector<16x128xf32>
    %271 = arith.addf %268, %270 : vector<16x128xf32>
    %272 = arith.addf %232, %271 : vector<16x128xf32>
    %c0_105 = arith.constant 0 : index
    %c0_106 = arith.constant 0 : index
    %c0_107 = arith.constant 0 : index
    %273 = vector.load %arg22[%c0_105, %c0_106, %c0_107] : memref<1x16x128xf32, #tpu.memory_space<vmem>>, vector<1x16x128xf32>
    %274 = vector.shape_cast %273 : vector<1x16x128xf32> to vector<16x128xf32>
    %275 = vector.shape_cast %272 : vector<16x128xf32> to vector<1x16x128xf32>
    tpu.vector_store %arg22[%c0_105, %c0_106, %c0_107], %275 {strides = array<i32>} : memref<1x16x128xf32, #tpu.memory_space<vmem>>, vector<1x16x128xf32>,
    return
  }
  func.func @transform_0(%arg0: i32) -> (i32, i32, i32) {
    %c0_i32 = arith.constant 0 : i32
    %c0_i32_0 = arith.constant 0 : i32
    %c0_i32_1 = arith.constant 0 : i32
    return %arg0, %c0_i32, %c0_i32_0 : i32, i32, i32
  }
  func.func @transform_1(%arg0: i32) -> (i32, i32, i32) {
    %c0_i32 = arith.constant 0 : i32
    %c0_i32_0 = arith.constant 0 : i32
    %c0_i32_1 = arith.constant 0 : i32
    return %arg0, %c0_i32, %c0_i32_0 : i32, i32, i32
  }
  func.func @transform_2(%arg0: i32) -> (i32, i32) {
    %c0_i32 = arith.constant 0 : i32
    %c0_i32_0 = arith.constant 0 : i32
    %c0_i32_1 = arith.constant 0 : i32
    return %c0_i32, %c0_i32_0 : i32, i32
  }
  func.func @transform_3(%arg0: i32) -> (i32, i32) {
    %c0_i32 = arith.constant 0 : i32
    %c0_i32_0 = arith.constant 0 : i32
    %c0_i32_1 = arith.constant 0 : i32
    return %c0_i32, %c0_i32_0 : i32, i32
  }
  func.func @transform_4(%arg0: i32) -> (i32, i32) {
    %c0_i32 = arith.constant 0 : i32
    %c0_i32_0 = arith.constant 0 : i32
    %c0_i32_1 = arith.constant 0 : i32
    return %c0_i32, %c0_i32_0 : i32, i32
  }
  func.func @transform_5(%arg0: i32) -> (i32, i32) {
    %c0_i32 = arith.constant 0 : i32
    %c0_i32_0 = arith.constant 0 : i32
    %c0_i32_1 = arith.constant 0 : i32
    return %c0_i32, %c0_i32_0 : i32, i32
  }
  func.func @transform_6(%arg0: i32) -> (i32, i32) {
    %c0_i32 = arith.constant 0 : i32
    %c0_i32_0 = arith.constant 0 : i32
    %c0_i32_1 = arith.constant 0 : i32
    return %c0_i32, %c0_i32_0 : i32, i32
  }
  func.func @transform_7(%arg0: i32) -> (i32, i32) {
    %c0_i32 = arith.constant 0 : i32
    %c0_i32_0 = arith.constant 0 : i32
    %c0_i32_1 = arith.constant 0 : i32
    return %c0_i32, %c0_i32_0 : i32, i32
  }
  func.func @transform_8(%arg0: i32) -> (i32, i32) {
    %c0_i32 = arith.constant 0 : i32
    %c0_i32_0 = arith.constant 0 : i32
    %c0_i32_1 = arith.constant 0 : i32
    return %c0_i32, %c0_i32_0 : i32, i32
  }
  func.func @transform_9(%arg0: i32) -> (i32, i32) {
    %c0_i32 = arith.constant 0 : i32
    %c0_i32_0 = arith.constant 0 : i32
    %c0_i32_1 = arith.constant 0 : i32
    return %c0_i32, %c0_i32_0 : i32, i32
  }
  func.func @transform_10(%arg0: i32) -> (i32, i32) {
    %c0_i32 = arith.constant 0 : i32
    %c0_i32_0 = arith.constant 0 : i32
    %c0_i32_1 = arith.constant 0 : i32
    return %c0_i32, %c0_i32_0 : i32, i32
  }
  func.func @transform_11(%arg0: i32) -> (i32, i32) {
    %c0_i32 = arith.constant 0 : i32
    %c0_i32_0 = arith.constant 0 : i32
    %c0_i32_1 = arith.constant 0 : i32
    return %c0_i32, %c0_i32_0 : i32, i32
  }
  func.func @transform_12(%arg0: i32) -> (i32, i32) {
    %c0_i32 = arith.constant 0 : i32
    %c0_i32_0 = arith.constant 0 : i32
    %c0_i32_1 = arith.constant 0 : i32
    return %c0_i32, %c0_i32_0 : i32, i32
  }
  func.func @transform_13(%arg0: i32) -> (i32, i32) {
    %c0_i32 = arith.constant 0 : i32
    %c0_i32_0 = arith.constant 0 : i32
    %c0_i32_1 = arith.constant 0 : i32
    return %c0_i32, %c0_i32_0 : i32, i32
  }
  func.func @transform_14(%arg0: i32) -> (i32, i32) {
    %c0_i32 = arith.constant 0 : i32
    %c0_i32_0 = arith.constant 0 : i32
    %c0_i32_1 = arith.constant 0 : i32
    return %c0_i32, %c0_i32_0 : i32, i32
  }
  func.func @transform_15(%arg0: i32) -> (i32, i32) {
    %c0_i32 = arith.constant 0 : i32
    %c0_i32_0 = arith.constant 0 : i32
    %c0_i32_1 = arith.constant 0 : i32
    return %c0_i32, %c0_i32_0 : i32, i32
  }
  func.func @transform_16(%arg0: i32) -> (i32, i32) {
    %c0_i32 = arith.constant 0 : i32
    %c0_i32_0 = arith.constant 0 : i32
    %c0_i32_1 = arith.constant 0 : i32
    return %c0_i32, %c0_i32_0 : i32, i32
  }
  func.func @transform_17(%arg0: i32) -> (i32, i32) {
    %c0_i32 = arith.constant 0 : i32
    %c0_i32_0 = arith.constant 0 : i32
    %c0_i32_1 = arith.constant 0 : i32
    return %c0_i32, %c0_i32_0 : i32, i32
  }
  func.func @transform_18(%arg0: i32) -> (i32, i32) {
    %c0_i32 = arith.constant 0 : i32
    %c0_i32_0 = arith.constant 0 : i32
    %c0_i32_1 = arith.constant 0 : i32
    return %c0_i32, %c0_i32_0 : i32, i32
  }
  func.func @transform_19(%arg0: i32) -> (i32, i32) {
    %c0_i32 = arith.constant 0 : i32
    %c0_i32_0 = arith.constant 0 : i32
    %c0_i32_1 = arith.constant 0 : i32
    return %c0_i32, %c0_i32_0 : i32, i32
  }
  func.func @transform_20(%arg0: i32) -> (i32, i32) {
    %c0_i32 = arith.constant 0 : i32
    %c0_i32_0 = arith.constant 0 : i32
    %c0_i32_1 = arith.constant 0 : i32
    return %c0_i32, %c0_i32_0 : i32, i32
  }
  func.func @transform_21(%arg0: i32) -> (i32, i32, i32) {
    %c0_i32 = arith.constant 0 : i32
    %c0_i32_0 = arith.constant 0 : i32
    %c0_i32_1 = arith.constant 0 : i32
    return %arg0, %c0_i32, %c0_i32_0 : i32, i32, i32
  }
  func.func @transform_22(%arg0: i32) -> (i32, i32, i32) {
    %c0_i32 = arith.constant 0 : i32
    %c0_i32_0 = arith.constant 0 : i32
    %c0_i32_1 = arith.constant 0 : i32
    return %arg0, %c0_i32, %c0_i32_0 : i32, i32, i32
  }
  func.func @transform_23(%arg0: i32) -> (i32, i32, i32) {
    %c0_i32 = arith.constant 0 : i32
    %c0_i32_0 = arith.constant 0 : i32
    %c0_i32_1 = arith.constant 0 : i32
    return %arg0, %c0_i32, %c0_i32_0 : i32, i32, i32
  }
}

</mosaic_0001>

<llo_original>
// kernel: tpu_custom_call.1
$region0: #{tpu_custom_call.1}
  #allocation0 [shape = 'u32[]', space=smem, size = 0x4, offset = 0x4, fixed_abs, tag = 'smem constant byte address 0x4 - core index']
  #allocation1 [shape = 'u32[144,128]{1,0:T(1,128)}', space=vmem, size = 0x12000, scoped, tag = 'internal scratch']
  #allocation2 [shape = 'bf16[16,128]{1,0:T(16,128)(2,1)}', space=vmem, size = 0x1000, scoped, tag = 'scratch operand']
  %s0 = inlined_call_operand.hbm [shape: f32[2,16,128], index: 0, kind: input, shape index: {}]
  %s1 = inlined_call_operand.hbm [shape: f32[2,1,16], index: 1, kind: input, shape index: {}]
  %s2 = inlined_call_operand.hbm [shape: f32[16,64], index: 2, kind: input, shape index: {}]
  %s3 = inlined_call_operand.hbm [shape: f32[16,64], index: 3, kind: input, shape index: {}]
  %s4 = inlined_call_operand.hbm [shape: f32[16,64], index: 4, kind: input, shape index: {}]
  %s5 = inlined_call_operand.vmem [shape: f32[1,128], index: 5, kind: input, shape index: {}]
  %s6 = inlined_call_operand.vmem [shape: f32[1,128], index: 6, kind: input, shape index: {}]
  %s7 = inlined_call_operand.hbm [shape: bf16[128,384], index: 7, kind: input, shape index: {}]
  %s8 = inlined_call_operand.vmem [shape: f32[1,384], index: 8, kind: input, shape index: {}]
  %s9 = inlined_call_operand.vmem [shape: f32[1,64], index: 9, kind: input, shape index: {}]
  %s10 = inlined_call_operand.vmem [shape: f32[1,64], index: 10, kind: input, shape index: {}]
  %s11 = inlined_call_operand.vmem [shape: f32[1,64], index: 11, kind: input, shape index: {}]
  %s12 = inlined_call_operand.vmem [shape: f32[1,64], index: 12, kind: input, shape index: {}]
  %s13 = inlined_call_operand.hbm [shape: bf16[128,128], index: 13, kind: input, shape index: {}]
  %s14 = inlined_call_operand.vmem [shape: f32[1,128], index: 14, kind: input, shape index: {}]
  %s15 = inlined_call_operand.vmem [shape: f32[1,128], index: 15, kind: input, shape index: {}]
  %s16 = inlined_call_operand.vmem [shape: f32[1,128], index: 16, kind: input, shape index: {}]
  %s17 = inlined_call_operand.hbm [shape: bf16[128,512], index: 17, kind: input, shape index: {}]
  %s18 = inlined_call_operand.vmem [shape: f32[1,512], index: 18, kind: input, shape index: {}]
  %s19 = inlined_call_operand.hbm [shape: bf16[512,128], index: 19, kind: input, shape index: {}]
  %s20 = inlined_call_operand.vmem [shape: f32[1,128], index: 20, kind: input, shape index: {}]
  %s21 = inlined_call_operand.hbm [shape: f32[2,16,128], index: 21, kind: output, shape index: {0}]
  %s22 = inlined_call_operand.hbm [shape: bf16[2,16,128], index: 22, kind: output, shape index: {1}]
  %s23 = inlined_call_operand.hbm [shape: bf16[2,16,128], index: 23, kind: output, shape index: {2}]
  %24 = xla_tuple %s21, %s22, %s23
  %s25 = sld [smem:[#allocation0]]
  $region169: #{tpu_custom_call.1} parent=0
    _
  %s27 = ssub.s32 1, %s25
  %s28 = scalar_select 0, %s27, %s25
  $region1: #{tpu_custom_call.1} parent=0
    #allocation3 [shape = 'u8[16384]{0}', space=vmem, size = 0x4000, scoped, tag = 'input window, operand 0']
    #allocation4 [shape = 's32[2]{0}', space=sflag, size = 0x8, scoped, tag = 'scoped memory for tpu_custom_call.1']
    #allocation5 [shape = 's32[2]{0}', space=sflag, size = 0x8, scoped, tag = 'scoped memory for tpu_custom_call.1']
    #allocation6 [shape = 'u8[1024]{0}', space=vmem, size = 0x400, scoped, tag = 'input window, operand 1']
    #allocation7 [shape = 's32[2]{0}', space=sflag, size = 0x8, scoped, tag = 'scoped memory for tpu_custom_call.1']
    #allocation8 [shape = 'u8[8192]{0}', space=vmem, size = 0x2000, scoped, tag = 'input window, operand 2, single buffered']
    #allocation9 [shape = 'u8[8192]{0}', space=vmem, size = 0x2000, scoped, tag = 'input window, operand 3, single buffered']
    #allocation10 [shape = 's32[1]{0}', space=sflag, size = 0x4, scoped, tag = 'scoped memory for tpu_custom_call.1']
    #allocation11 [shape = 'u8[8192]{0}', space=vmem, size = 0x2000, scoped, tag = 'input window, operand 4, single buffered']
    #allocation12 [shape = 'u8[98304]{0}', space=vmem, size = 0x18000, scoped, tag = 'input window, operand 7, single buffered']
    #allocation13 [shape = 's32[1]{0}', space=sflag, size = 0x4, scoped, tag = 'scoped memory for tpu_custom_call.1']
    #allocation14 [shape = 'u8[32768]{0}', space=vmem, size = 0x8000, scoped, tag = 'input window, operand 13, single buffered']
    #allocation15 [shape = 'u8[131072]{0}', space=vmem, size = 0x20000, scoped, tag = 'input window, operand 17, single buffered']
    #allocation16 [shape = 's32[1]{0}', space=sflag, size = 0x4, scoped, tag = 'scoped memory for tpu_custom_call.1']
    #allocation17 [shape = 'u8[131072]{0}', space=vmem, size = 0x20000, scoped, tag = 'input window, operand 19, single buffered']
    #allocation18 [shape = 'u8[16384]{0}', space=vmem, size = 0x4000, scoped, tag = 'output window, operand 0']
    #allocation19 [shape = 'u8[8192]{0}', space=vmem, size = 0x2000, scoped, tag = 'output window, operand 1']
    #allocation20 [shape = 's32[2]{0}', space=sflag, size = 0x8, scoped, tag = 'scoped memory for tpu_custom_call.1']
    #allocation21 [shape = 'u8[8192]{0}', space=vmem, size = 0x2000, scoped, tag = 'output window, operand 2']
    %29 = vsyncpa [#allocation4], 0
    %s30 = scalar_lea.sflag [#allocation4], 1
    %31 = vsyncpa %s30, 0
    %32 = vsyncpa [#allocation7], 0
    %s33 = scalar_lea.sflag [#allocation7], 1
    %34 = vsyncpa %s33, 0
    %35 = vsyncpa [#allocation10], 0
    %36 = vsyncpa [#allocation13], 0
    %37 = vsyncpa [#allocation16], 0
    %38 = vsyncpa [#allocation5], 0
    %s39 = scalar_lea.sflag [#allocation5], 1
    %40 = vsyncpa %s39, 0
    %41 = vsyncpa [#allocation20], 0
    %s42 = scalar_lea.sflag [#allocation20], 1
    %43 = vsyncpa %s42, 0
    loop: start=0, step=1, limit=4
    $region2: #{tpu_custom_call.1} parent=1 // loop_pre_header
      _
    $region3: #{tpu_custom_call.1} parent=1 // loop_header
      %s45 = sphi 0, %s49
      %p46 = scmp.ge.s32.totalorder %s45, 4
      %s55 = sphi 0, %s57
      %s58 = sphi 0, %s55
      %s59 = sphi 0, %s58
      %s75 = sphi 0, %s59
      %s81 = sphi 0, %s83
      %s84 = sphi 0, %s81
      %s85 = sphi 0, %s84
      %s101 = sphi 0, %s85
      %s105 = sphi 0, %s105
      %s107 = sphi 0, %s105
      %s108 = sphi 0, %s107
      %s122 = sphi 0, %s108
      %s126 = sphi 0, %s126
      %s128 = sphi 0, %s126
      %s129 = sphi 0, %s128
      %s143 = sphi 0, %s129
      %s147 = sphi 0, %s147
      %s149 = sphi 0, %s147
      %s150 = sphi 0, %s149
      %s164 = sphi 0, %s150
      %s168 = sphi 0, %s168
      %s170 = sphi 0, %s168
      %s171 = sphi 0, %s170
      %s185 = sphi 0, %s171
      %s189 = sphi 0, %s189
      %s191 = sphi 0, %s189
      %s192 = sphi 0, %s191
      %s206 = sphi 0, %s192
      %s210 = sphi 0, %s210
      %s212 = sphi 0, %s210
      %s213 = sphi 0, %s212
      %s227 = sphi 0, %s213
      %s231 = sphi 0, %s231
      %s233 = sphi 0, %s231
      %s234 = sphi 0, %s233
      %s248 = sphi 0, %s234
      %s252 = sphi 0, %s252
      %s254 = sphi 0, %s252
      %s255 = sphi 0, %s254
      %s269 = sphi 0, %s255
      %s273 = sphi 0, %s273
      %s275 = sphi 0, %s273
      %s276 = sphi 0, %s275
      %s290 = sphi 0, %s276
      %s294 = sphi 0, %s294
      %s296 = sphi 0, %s294
      %s297 = sphi 0, %s296
      %s311 = sphi 0, %s297
      %s315 = sphi 0, %s315
      %s317 = sphi 0, %s315
      %s318 = sphi 0, %s317
      %s332 = sphi 0, %s318
      %s336 = sphi 0, %s336
      %s338 = sphi 0, %s336
      %s339 = sphi 0, %s338
      %s353 = sphi 0, %s339
      %s357 = sphi 0, %s357
      %s359 = sphi 0, %s357
      %s360 = sphi 0, %s359
      %s374 = sphi 0, %s360
      %s378 = sphi 0, %s378
      %s380 = sphi 0, %s378
      %s381 = sphi 0, %s380
      %s395 = sphi 0, %s381
      %s399 = sphi 0, %s399
      %s401 = sphi 0, %s399
      %s402 = sphi 0, %s401
      %s416 = sphi 0, %s402
      %s420 = sphi 0, %s420
      %s422 = sphi 0, %s420
      %s423 = sphi 0, %s422
      %s437 = sphi 0, %s423
      %s441 = sphi 0, %s441
      %s443 = sphi 0, %s441
      %s444 = sphi 0, %s443
      %s458 = sphi 0, %s444
      %s462 = sphi 0, %s462
      %s464 = sphi 0, %s462
      %s465 = sphi 0, %s464
      %s479 = sphi 0, %s465
      %s483 = sphi 0, %s483
      %s485 = sphi 0, %s483
      %s486 = sphi 0, %s485
      %s500 = sphi 0, %s486
      %s506 = sphi 0, %s508
      %s509 = sphi 0, %s506
      %s510 = sphi 0, %s509
      %s526 = sphi 0, %s510
      %s532 = sphi 0, %s534
      %s535 = sphi 0, %s532
      %s536 = sphi 0, %s535
      %s552 = sphi 0, %s536
      %s558 = sphi 0, %s560
      %s561 = sphi 0, %s558
      %s562 = sphi 0, %s561
      %s578 = sphi 0, %s562
    $region4: #{tpu_custom_call.1} parent=1 // loop_header_branch
      %48 = sbr.rel (%p46) target = $region8
    $region5: #{tpu_custom_call.1} parent=1 // loop_body
      %s50 = ssub.s32 %s45, 1
      %s51 = ssub.s32 %s45, 2
      %s52 = sadd.s32 %s45, 1
      %s53 = ssub.s32 %s45, %s52
      %p54 = scmp.eq.s32.totalorder %s53, 0
      %s56 = sadd.s32 %s55, 1
      %s57 = scalar_select %p54, %s55, %s56
      %p60 = pneg %p54
      %p61 = scmp.eq.s32.totalorder %s45, 1
      %p62 = por %p60, %p61
      %p63 = scmp.ne.s32.totalorder %s55, %s58
      %p64 = scmp.eq.s32.totalorder %s45, 0
      %p65 = por %p63, %p64
      %p66 = scmp.ne.s32.totalorder %s55, %s58
      %p67 = scmp.eq.s32.totalorder %s50, 1
      %p68 = por %p66, %p67
      %p69 = scmp.ne.s32.totalorder %s58, %s59
      %p70 = scmp.eq.s32.totalorder %s50, 0
      %p71 = por %p69, %p70
      %p72 = scmp.ne.s32.totalorder %s58, %s59
      %p73 = scmp.eq.s32.totalorder %s51, 1
      %p74 = por %p72, %p73
      %p76 = scmp.ne.s32.totalorder %s59, %s75
      %p77 = scmp.eq.s32.totalorder %s51, 0
      %p78 = por %p76, %p77
      %s79 = ssub.s32 %s45, %s52
      %p80 = scmp.eq.s32.totalorder %s79, 0
      %s82 = sadd.s32 %s81, 1
      %s83 = scalar_select %p80, %s81, %s82
      %p86 = pneg %p80
      %p87 = scmp.eq.s32.totalorder %s45, 1
      %p88 = por %p86, %p87
      %p89 = scmp.ne.s32.totalorder %s81, %s84
      %p90 = scmp.eq.s32.totalorder %s45, 0
      %p91 = por %p89, %p90
      %p92 = scmp.ne.s32.totalorder %s81, %s84
      %p93 = scmp.eq.s32.totalorder %s50, 1
      %p94 = por %p92, %p93
      %p95 = scmp.ne.s32.totalorder %s84, %s85
      %p96 = scmp.eq.s32.totalorder %s50, 0
      %p97 = por %p95, %p96
      %p98 = scmp.ne.s32.totalorder %s84, %s85
      %p99 = scmp.eq.s32.totalorder %s51, 1
      %p100 = por %p98, %p99
      %p102 = scmp.ne.s32.totalorder %s85, %s101
      %p103 = scmp.eq.s32.totalorder %s51, 0
      %p104 = por %p102, %p103
      %s106 = sadd.s32 %s105, 1
      %p109 = scmp.eq.s32.totalorder %s45, 1
      %p110 = scmp.ne.s32.totalorder %s105, %s107
      %p111 = scmp.eq.s32.totalorder %s45, 0
      %p112 = por %p110, %p111
      %p113 = scmp.ne.s32.totalorder %s105, %s107
      %p114 = scmp.eq.s32.totalorder %s50, 1
      %p115 = por %p113, %p114
      %p116 = scmp.ne.s32.totalorder %s107, %s108
      %p117 = scmp.eq.s32.totalorder %s50, 0
      %p118 = por %p116, %p117
      %p119 = scmp.ne.s32.totalorder %s107, %s108
      %p120 = scmp.eq.s32.totalorder %s51, 1
      %p121 = por %p119, %p120
      %p123 = scmp.ne.s32.totalorder %s108, %s122
      %p124 = scmp.eq.s32.totalorder %s51, 0
      %p125 = por %p123, %p124
      %s127 = sadd.s32 %s126, 1
      %p130 = scmp.eq.s32.totalorder %s45, 1
      %p131 = scmp.ne.s32.totalorder %s126, %s128
      %p132 = scmp.eq.s32.totalorder %s45, 0
      %p133 = por %p131, %p132
      %p134 = scmp.ne.s32.totalorder %s126, %s128
      %p135 = scmp.eq.s32.totalorder %s50, 1
      %p136 = por %p134, %p135
      %p137 = scmp.ne.s32.totalorder %s128, %s129
      %p138 = scmp.eq.s32.totalorder %s50, 0
      %p139 = por %p137, %p138
      %p140 = scmp.ne.s32.totalorder %s128, %s129
      %p141 = scmp.eq.s32.totalorder %s51, 1
      %p142 = por %p140, %p141
      %p144 = scmp.ne.s32.totalorder %s129, %s143
      %p145 = scmp.eq.s32.totalorder %s51, 0
      %p146 = por %p144, %p145
      %s148 = sadd.s32 %s147, 1
      %p151 = scmp.eq.s32.totalorder %s45, 1
      %p152 = scmp.ne.s32.totalorder %s147, %s149
      %p153 = scmp.eq.s32.totalorder %s45, 0
      %p154 = por %p152, %p153
      %p155 = scmp.ne.s32.totalorder %s147, %s149
      %p156 = scmp.eq.s32.totalorder %s50, 1
      %p157 = por %p155, %p156
      %p158 = scmp.ne.s32.totalorder %s149, %s150
      %p159 = scmp.eq.s32.totalorder %s50, 0
      %p160 = por %p158, %p159
      %p161 = scmp.ne.s32.totalorder %s149, %s150
      %p162 = scmp.eq.s32.totalorder %s51, 1
      %p163 = por %p161, %p162
      %p165 = scmp.ne.s32.totalorder %s150, %s164
      %p166 = scmp.eq.s32.totalorder %s51, 0
      %p167 = por %p165, %p166
      %s169 = sadd.s32 %s168, 1
      %p172 = scmp.eq.s32.totalorder %s45, 1
      %p173 = scmp.ne.s32.totalorder %s168, %s170
      %p174 = scmp.eq.s32.totalorder %s45, 0
      %p175 = por %p173, %p174
      %p176 = scmp.ne.s32.totalorder %s168, %s170
      %p177 = scmp.eq.s32.totalorder %s50, 1
      %p178 = por %p176, %p177
      %p179 = scmp.ne.s32.totalorder %s170, %s171
      %p180 = scmp.eq.s32.totalorder %s50, 0
      %p181 = por %p179, %p180
      %p182 = scmp.ne.s32.totalorder %s170, %s171
      %p183 = scmp.eq.s32.totalorder %s51, 1
      %p184 = por %p182, %p183
      %p186 = scmp.ne.s32.totalorder %s171, %s185
      %p187 = scmp.eq.s32.totalorder %s51, 0
      %p188 = por %p186, %p187
      %s190 = sadd.s32 %s189, 1
      %p193 = scmp.eq.s32.totalorder %s45, 1
      %p194 = scmp.ne.s32.totalorder %s189, %s191
      %p195 = scmp.eq.s32.totalorder %s45, 0
      %p196 = por %p194, %p195
      %p197 = scmp.ne.s32.totalorder %s189, %s191
      %p198 = scmp.eq.s32.totalorder %s50, 1
      %p199 = por %p197, %p198
      %p200 = scmp.ne.s32.totalorder %s191, %s192
      %p201 = scmp.eq.s32.totalorder %s50, 0
      %p202 = por %p200, %p201
      %p203 = scmp.ne.s32.totalorder %s191, %s192
      %p204 = scmp.eq.s32.totalorder %s51, 1
      %p205 = por %p203, %p204
      %p207 = scmp.ne.s32.totalorder %s192, %s206
      %p208 = scmp.eq.s32.totalorder %s51, 0
      %p209 = por %p207, %p208
      %s211 = sadd.s32 %s210, 1
      %p214 = scmp.eq.s32.totalorder %s45, 1
      %p215 = scmp.ne.s32.totalorder %s210, %s212
      %p216 = scmp.eq.s32.totalorder %s45, 0
      %p217 = por %p215, %p216
      %p218 = scmp.ne.s32.totalorder %s210, %s212
      %p219 = scmp.eq.s32.totalorder %s50, 1
      %p220 = por %p218, %p219
      %p221 = scmp.ne.s32.totalorder %s212, %s213
      %p222 = scmp.eq.s32.totalorder %s50, 0
      %p223 = por %p221, %p222
      %p224 = scmp.ne.s32.totalorder %s212, %s213
      %p225 = scmp.eq.s32.totalorder %s51, 1
      %p226 = por %p224, %p225
      %p228 = scmp.ne.s32.totalorder %s213, %s227
      %p229 = scmp.eq.s32.totalorder %s51, 0
      %p230 = por %p228, %p229
      %s232 = sadd.s32 %s231, 1
      %p235 = scmp.eq.s32.totalorder %s45, 1
      %p236 = scmp.ne.s32.totalorder %s231, %s233
      %p237 = scmp.eq.s32.totalorder %s45, 0
      %p238 = por %p236, %p237
      %p239 = scmp.ne.s32.totalorder %s231, %s233
      %p240 = scmp.eq.s32.totalorder %s50, 1
      %p241 = por %p239, %p240
      %p242 = scmp.ne.s32.totalorder %s233, %s234
      %p243 = scmp.eq.s32.totalorder %s50, 0
      %p244 = por %p242, %p243
      %p245 = scmp.ne.s32.totalorder %s233, %s234
      %p246 = scmp.eq.s32.totalorder %s51, 1
      %p247 = por %p245, %p246
      %p249 = scmp.ne.s32.totalorder %s234, %s248
      %p250 = scmp.eq.s32.totalorder %s51, 0
      %p251 = por %p249, %p250
      %s253 = sadd.s32 %s252, 1
      %p256 = scmp.eq.s32.totalorder %s45, 1
      %p257 = scmp.ne.s32.totalorder %s252, %s254
      %p258 = scmp.eq.s32.totalorder %s45, 0
      %p259 = por %p257, %p258
      %p260 = scmp.ne.s32.totalorder %s252, %s254
      %p261 = scmp.eq.s32.totalorder %s50, 1
      %p262 = por %p260, %p261
      %p263 = scmp.ne.s32.totalorder %s254, %s255
      %p264 = scmp.eq.s32.totalorder %s50, 0
      %p265 = por %p263, %p264
      %p266 = scmp.ne.s32.totalorder %s254, %s255
      %p267 = scmp.eq.s32.totalorder %s51, 1
      %p268 = por %p266, %p267
      %p270 = scmp.ne.s32.totalorder %s255, %s269
      %p271 = scmp.eq.s32.totalorder %s51, 0
      %p272 = por %p270, %p271
      %s274 = sadd.s32 %s273, 1
      %p277 = scmp.eq.s32.totalorder %s45, 1
      %p278 = scmp.ne.s32.totalorder %s273, %s275
      %p279 = scmp.eq.s32.totalorder %s45, 0
      %p280 = por %p278, %p279
      %p281 = scmp.ne.s32.totalorder %s273, %s275
      %p282 = scmp.eq.s32.totalorder %s50, 1
      %p283 = por %p281, %p282
      %p284 = scmp.ne.s32.totalorder %s275, %s276
      %p285 = scmp.eq.s32.totalorder %s50, 0
      %p286 = por %p284, %p285
      %p287 = scmp.ne.s32.totalorder %s275, %s276
      %p288 = scmp.eq.s32.totalorder %s51, 1
      %p289 = por %p287, %p288
      %p291 = scmp.ne.s32.totalorder %s276, %s290
      %p292 = scmp.eq.s32.totalorder %s51, 0
      %p293 = por %p291, %p292
      %s295 = sadd.s32 %s294, 1
      %p298 = scmp.eq.s32.totalorder %s45, 1
      %p299 = scmp.ne.s32.totalorder %s294, %s296
      %p300 = scmp.eq.s32.totalorder %s45, 0
      %p301 = por %p299, %p300
      %p302 = scmp.ne.s32.totalorder %s294, %s296
      %p303 = scmp.eq.s32.totalorder %s50, 1
      %p304 = por %p302, %p303
      %p305 = scmp.ne.s32.totalorder %s296, %s297
      %p306 = scmp.eq.s32.totalorder %s50, 0
      %p307 = por %p305, %p306
      %p308 = scmp.ne.s32.totalorder %s296, %s297
      %p309 = scmp.eq.s32.totalorder %s51, 1
      %p310 = por %p308, %p309
      %p312 = scmp.ne.s32.totalorder %s297, %s311
      %p313 = scmp.eq.s32.totalorder %s51, 0
      %p314 = por %p312, %p313
      %s316 = sadd.s32 %s315, 1
      %p319 = scmp.eq.s32.totalorder %s45, 1
      %p320 = scmp.ne.s32.totalorder %s315, %s317
      %p321 = scmp.eq.s32.totalorder %s45, 0
      %p322 = por %p320, %p321
      %p323 = scmp.ne.s32.totalorder %s315, %s317
      %p324 = scmp.eq.s32.totalorder %s50, 1
      %p325 = por %p323, %p324
      %p326 = scmp.ne.s32.totalorder %s317, %s318
      %p327 = scmp.eq.s32.totalorder %s50, 0
      %p328 = por %p326, %p327
      %p329 = scmp.ne.s32.totalorder %s317, %s318
      %p330 = scmp.eq.s32.totalorder %s51, 1
      %p331 = por %p329, %p330
      %p333 = scmp.ne.s32.totalorder %s318, %s332
      %p334 = scmp.eq.s32.totalorder %s51, 0
      %p335 = por %p333, %p334
      %s337 = sadd.s32 %s336, 1
      %p340 = scmp.eq.s32.totalorder %s45, 1
      %p341 = scmp.ne.s32.totalorder %s336, %s338
      %p342 = scmp.eq.s32.totalorder %s45, 0
      %p343 = por %p341, %p342
      %p344 = scmp.ne.s32.totalorder %s336, %s338
      %p345 = scmp.eq.s32.totalorder %s50, 1
      %p346 = por %p344, %p345
      %p347 = scmp.ne.s32.totalorder %s338, %s339
      %p348 = scmp.eq.s32.totalorder %s50, 0
      %p349 = por %p347, %p348
      %p350 = scmp.ne.s32.totalorder %s338, %s339
      %p351 = scmp.eq.s32.totalorder %s51, 1
      %p352 = por %p350, %p351
      %p354 = scmp.ne.s32.totalorder %s339, %s353
      %p355 = scmp.eq.s32.totalorder %s51, 0
      %p356 = por %p354, %p355
      %s358 = sadd.s32 %s357, 1
      %p361 = scmp.eq.s32.totalorder %s45, 1
      %p362 = scmp.ne.s32.totalorder %s357, %s359
      %p363 = scmp.eq.s32.totalorder %s45, 0
      %p364 = por %p362, %p363
      %p365 = scmp.ne.s32.totalorder %s357, %s359
      %p366 = scmp.eq.s32.totalorder %s50, 1
      %p367 = por %p365, %p366
      %p368 = scmp.ne.s32.totalorder %s359, %s360
      %p369 = scmp.eq.s32.totalorder %s50, 0
      %p370 = por %p368, %p369
      %p371 = scmp.ne.s32.totalorder %s359, %s360
      %p372 = scmp.eq.s32.totalorder %s51, 1
      %p373 = por %p371, %p372
      %p375 = scmp.ne.s32.totalorder %s360, %s374
      %p376 = scmp.eq.s32.totalorder %s51, 0
      %p377 = por %p375, %p376
      %s379 = sadd.s32 %s378, 1
      %p382 = scmp.eq.s32.totalorder %s45, 1
      %p383 = scmp.ne.s32.totalorder %s378, %s380
      %p384 = scmp.eq.s32.totalorder %s45, 0
      %p385 = por %p383, %p384
      %p386 = scmp.ne.s32.totalorder %s378, %s380
      %p387 = scmp.eq.s32.totalorder %s50, 1
      %p388 = por %p386, %p387
      %p389 = scmp.ne.s32.totalorder %s380, %s381
      %p390 = scmp.eq.s32.totalorder %s50, 0
      %p391 = por %p389, %p390
      %p392 = scmp.ne.s32.totalorder %s380, %s381
      %p393 = scmp.eq.s32.totalorder %s51, 1
      %p394 = por %p392, %p393
      %p396 = scmp.ne.s32.totalorder %s381, %s395
      %p397 = scmp.eq.s32.totalorder %s51, 0
      %p398 = por %p396, %p397
      %s400 = sadd.s32 %s399, 1
      %p403 = scmp.eq.s32.totalorder %s45, 1
      %p404 = scmp.ne.s32.totalorder %s399, %s401
      %p405 = scmp.eq.s32.totalorder %s45, 0
      %p406 = por %p404, %p405
      %p407 = scmp.ne.s32.totalorder %s399, %s401
      %p408 = scmp.eq.s32.totalorder %s50, 1
      %p409 = por %p407, %p408
      %p410 = scmp.ne.s32.totalorder %s401, %s402
      %p411 = scmp.eq.s32.totalorder %s50, 0
      %p412 = por %p410, %p411
      %p413 = scmp.ne.s32.totalorder %s401, %s402
      %p414 = scmp.eq.s32.totalorder %s51, 1
      %p415 = por %p413, %p414
      %p417 = scmp.ne.s32.totalorder %s402, %s416
      %p418 = scmp.eq.s32.totalorder %s51, 0
      %p419 = por %p417, %p418
      %s421 = sadd.s32 %s420, 1
      %p424 = scmp.eq.s32.totalorder %s45, 1
      %p425 = scmp.ne.s32.totalorder %s420, %s422
      %p426 = scmp.eq.s32.totalorder %s45, 0
      %p427 = por %p425, %p426
      %p428 = scmp.ne.s32.totalorder %s420, %s422
      %p429 = scmp.eq.s32.totalorder %s50, 1
      %p430 = por %p428, %p429
      %p431 = scmp.ne.s32.totalorder %s422, %s423
      %p432 = scmp.eq.s32.totalorder %s50, 0
      %p433 = por %p431, %p432
      %p434 = scmp.ne.s32.totalorder %s422, %s423
      %p435 = scmp.eq.s32.totalorder %s51, 1
      %p436 = por %p434, %p435
      %p438 = scmp.ne.s32.totalorder %s423, %s437
      %p439 = scmp.eq.s32.totalorder %s51, 0
      %p440 = por %p438, %p439
      %s442 = sadd.s32 %s441, 1
      %p445 = scmp.eq.s32.totalorder %s45, 1
      %p446 = scmp.ne.s32.totalorder %s441, %s443
      %p447 = scmp.eq.s32.totalorder %s45, 0
      %p448 = por %p446, %p447
      %p449 = scmp.ne.s32.totalorder %s441, %s443
      %p450 = scmp.eq.s32.totalorder %s50, 1
      %p451 = por %p449, %p450
      %p452 = scmp.ne.s32.totalorder %s443, %s444
      %p453 = scmp.eq.s32.totalorder %s50, 0
      %p454 = por %p452, %p453
      %p455 = scmp.ne.s32.totalorder %s443, %s444
      %p456 = scmp.eq.s32.totalorder %s51, 1
      %p457 = por %p455, %p456
      %p459 = scmp.ne.s32.totalorder %s444, %s458
      %p460 = scmp.eq.s32.totalorder %s51, 0
      %p461 = por %p459, %p460
      %s463 = sadd.s32 %s462, 1
      %p466 = scmp.eq.s32.totalorder %s45, 1
      %p467 = scmp.ne.s32.totalorder %s462, %s464
      %p468 = scmp.eq.s32.totalorder %s45, 0
      %p469 = por %p467, %p468
      %p470 = scmp.ne.s32.totalorder %s462, %s464
      %p471 = scmp.eq.s32.totalorder %s50, 1
      %p472 = por %p470, %p471
      %p473 = scmp.ne.s32.totalorder %s464, %s465
      %p474 = scmp.eq.s32.totalorder %s50, 0
      %p475 = por %p473, %p474
      %p476 = scmp.ne.s32.totalorder %s464, %s465
      %p477 = scmp.eq.s32.totalorder %s51, 1
      %p478 = por %p476, %p477
      %p480 = scmp.ne.s32.totalorder %s465, %s479
      %p481 = scmp.eq.s32.totalorder %s51, 0
      %p482 = por %p480, %p481
      %s484 = sadd.s32 %s483, 1
      %p487 = scmp.eq.s32.totalorder %s45, 1
      %p488 = scmp.ne.s32.totalorder %s483, %s485
      %p489 = scmp.eq.s32.totalorder %s45, 0
      %p490 = por %p488, %p489
      %p491 = scmp.ne.s32.totalorder %s483, %s485
      %p492 = scmp.eq.s32.totalorder %s50, 1
      %p493 = por %p491, %p492
      %p494 = scmp.ne.s32.totalorder %s485, %s486
      %p495 = scmp.eq.s32.totalorder %s50, 0
      %p496 = por %p494, %p495
      %p497 = scmp.ne.s32.totalorder %s485, %s486
      %p498 = scmp.eq.s32.totalorder %s51, 1
      %p499 = por %p497, %p498
      %p501 = scmp.ne.s32.totalorder %s486, %s500
      %p502 = scmp.eq.s32.totalorder %s51, 0
      %p503 = por %p501, %p502
      %s504 = ssub.s32 %s45, %s52
      %p505 = scmp.eq.s32.totalorder %s504, 0
      %s507 = sadd.s32 %s506, 1
      %s508 = scalar_select %p505, %s506, %s507
      %p511 = pneg %p505
      %p512 = scmp.eq.s32.totalorder %s45, 1
      %p513 = por %p511, %p512
      %p514 = scmp.ne.s32.totalorder %s506, %s509
      %p515 = scmp.eq.s32.totalorder %s45, 0
      %p516 = por %p514, %p515
      %p517 = scmp.ne.s32.totalorder %s506, %s509
      %p518 = scmp.eq.s32.totalorder %s50, 1
      %p519 = por %p517, %p518
      %p520 = scmp.ne.s32.totalorder %s509, %s510
      %p521 = scmp.eq.s32.totalorder %s50, 0
      %p522 = por %p520, %p521
      %p523 = scmp.ne.s32.totalorder %s509, %s510
      %p524 = scmp.eq.s32.totalorder %s51, 1
      %p525 = por %p523, %p524
      %p527 = scmp.ne.s32.totalorder %s510, %s526
      %p528 = scmp.eq.s32.totalorder %s51, 0
      %p529 = por %p527, %p528
      %s530 = ssub.s32 %s45, %s52
      %p531 = scmp.eq.s32.totalorder %s530, 0
      %s533 = sadd.s32 %s532, 1
      %s534 = scalar_select %p531, %s532, %s533
      %p537 = pneg %p531
      %p538 = scmp.eq.s32.totalorder %s45, 1
      %p539 = por %p537, %p538
      %p540 = scmp.ne.s32.totalorder %s532, %s535
      %p541 = scmp.eq.s32.totalorder %s45, 0
      %p542 = por %p540, %p541
      %p543 = scmp.ne.s32.totalorder %s532, %s535
      %p544 = scmp.eq.s32.totalorder %s50, 1
      %p545 = por %p543, %p544
      %p546 = scmp.ne.s32.totalorder %s535, %s536
      %p547 = scmp.eq.s32.totalorder %s50, 0
      %p548 = por %p546, %p547
      %p549 = scmp.ne.s32.totalorder %s535, %s536
      %p550 = scmp.eq.s32.totalorder %s51, 1
      %p551 = por %p549, %p550
      %p553 = scmp.ne.s32.totalorder %s536, %s552
      %p554 = scmp.eq.s32.totalorder %s51, 0
      %p555 = por %p553, %p554
      %s556 = ssub.s32 %s45, %s52
      %p557 = scmp.eq.s32.totalorder %s556, 0
      %s559 = sadd.s32 %s558, 1
      %s560 = scalar_select %p557, %s558, %s559
      %p563 = pneg %p557
      %p564 = scmp.eq.s32.totalorder %s45, 1
      %p565 = por %p563, %p564
      %p566 = scmp.ne.s32.totalorder %s558, %s561
      %p567 = scmp.eq.s32.totalorder %s45, 0
      %p568 = por %p566, %p567
      %p569 = scmp.ne.s32.totalorder %s558, %s561
      %p570 = scmp.eq.s32.totalorder %s50, 1
      %p571 = por %p569, %p570
      %p572 = scmp.ne.s32.totalorder %s561, %s562
      %p573 = scmp.eq.s32.totalorder %s50, 0
      %p574 = por %p572, %p573
      %p575 = scmp.ne.s32.totalorder %s561, %s562
      %p576 = scmp.eq.s32.totalorder %s51, 1
      %p577 = por %p575, %p576
      %p579 = scmp.ne.s32.totalorder %s562, %s578
      %p580 = scmp.eq.s32.totalorder %s51, 0
      %p581 = por %p579, %p580
      %p582 = scmp.le.s32.totalorder 1, %s45
      %p583 = scmp.lt.s32.totalorder %s45, 3
      %p584 = pnand %p582, %p583
      %p585 = pneg %p584
      // Predicated region
      $region9: #{tpu_custom_call.1} parent=5 // pred_check
        _
      $region10: #{tpu_custom_call.1} parent=5 // pred_check_branch
        %587 = sbr.rel (%p584) target = $region12
      $region11: #{tpu_custom_call.1} parent=5 // pred_region
        %s588 = ssub.s32 %s45, 1
        // Predicated region
        $region13: #{tpu_custom_call.1} parent=11 // pred_check
          %p589 = pneg %p118
        $region14: #{tpu_custom_call.1} parent=11 // pred_check_branch
          %591 = sbr.rel (%p589) target = $region16
        $region15: #{tpu_custom_call.1} parent=11 // pred_region
          %s593 = ssub.s32 256, 256
          %594 = vsyncadd [#allocation7], %s593
          %s595 = sshll.u32 [#allocation8], 4
          %s596 = int_to_ptr.vmem [resolvable:$true] %s595
          %601 = dma.hbm_to_vmem [thread:$0]  %s2, 256, %s596, [#allocation7], 128, 128, 8
        $region16: #{tpu_custom_call.1} parent=11 // pred_fallthru
          _
        // Predicated region
        $region17: #{tpu_custom_call.1} parent=11 // pred_check
          %p602 = pneg %p139
        $region18: #{tpu_custom_call.1} parent=11 // pred_check_branch
          %604 = sbr.rel (%p602) target = $region20
        $region19: #{tpu_custom_call.1} parent=11 // pred_region
          %s606 = ssub.s32 256, 256
          %607 = vsyncadd [#allocation10], %s606
          %s608 = sshll.u32 [#allocation9], 4
          %s609 = int_to_ptr.vmem [resolvable:$true] %s608
          %614 = dma.hbm_to_vmem [thread:$0]  %s3, 256, %s609, [#allocation10], 128, 128, 8
        $region20: #{tpu_custom_call.1} parent=11 // pred_fallthru
          _
        // Predicated region
        $region21: #{tpu_custom_call.1} parent=11 // pred_check
          %p615 = pneg %p160
        $region22: #{tpu_custom_call.1} parent=11 // pred_check_branch
          %617 = sbr.rel (%p615) target = $region24
        $region23: #{tpu_custom_call.1} parent=11 // pred_region
          %s619 = ssub.s32 256, 256
          %620 = vsyncadd [#allocation10], %s619
          %s621 = sshll.u32 [#allocation11], 4
          %s622 = int_to_ptr.vmem [resolvable:$true] %s621
          %627 = dma.hbm_to_vmem [thread:$0]  %s4, 256, %s622, [#allocation10], 128, 128, 8
        $region24: #{tpu_custom_call.1} parent=11 // pred_fallthru
          _
        // Predicated region
        $region25: #{tpu_custom_call.1} parent=11 // pred_check
          %p628 = pneg %p181
        $region26: #{tpu_custom_call.1} parent=11 // pred_check_branch
          %630 = sbr.rel (%p628) target = $region28
        $region27: #{tpu_custom_call.1} parent=11 // pred_region
          _
        $region28: #{tpu_custom_call.1} parent=11 // pred_fallthru
          _
        // Predicated region
        $region29: #{tpu_custom_call.1} parent=11 // pred_check
          %p631 = pneg %p202
        $region30: #{tpu_custom_call.1} parent=11 // pred_check_branch
          %633 = sbr.rel (%p631) target = $region32
        $region31: #{tpu_custom_call.1} parent=11 // pred_region
          _
        $region32: #{tpu_custom_call.1} parent=11 // pred_fallthru
          _
        // Predicated region
        $region33: #{tpu_custom_call.1} parent=11 // pred_check
          %p634 = pneg %p223
        $region34: #{tpu_custom_call.1} parent=11 // pred_check_branch
          %636 = sbr.rel (%p634) target = $region36
        $region35: #{tpu_custom_call.1} parent=11 // pred_region
          %s638 = ssub.s32 3072, 3072
          %639 = vsyncadd [#allocation13], %s638
          %s640 = sshll.u32 [#allocation12], 4
          %s641 = int_to_ptr.vmem [resolvable:$true] %s640
          %646 = dma.hbm_to_vmem [thread:$0]  %s7, 3072, %s641, [#allocation13], 192, 192, 12
        $region36: #{tpu_custom_call.1} parent=11 // pred_fallthru
          _
        // Predicated region
        $region37: #{tpu_custom_call.1} parent=11 // pred_check
          %p647 = pneg %p244
        $region38: #{tpu_custom_call.1} parent=11 // pred_check_branch
          %649 = sbr.rel (%p647) target = $region40
        $region39: #{tpu_custom_call.1} parent=11 // pred_region
          _
        $region40: #{tpu_custom_call.1} parent=11 // pred_fallthru
          _
        // Predicated region
        $region41: #{tpu_custom_call.1} parent=11 // pred_check
          %p650 = pneg %p265
        $region42: #{tpu_custom_call.1} parent=11 // pred_check_branch
          %652 = sbr.rel (%p650) target = $region44
        $region43: #{tpu_custom_call.1} parent=11 // pred_region
          _
        $region44: #{tpu_custom_call.1} parent=11 // pred_fallthru
          _
        // Predicated region
        $region45: #{tpu_custom_call.1} parent=11 // pred_check
          %p653 = pneg %p286
        $region46: #{tpu_custom_call.1} parent=11 // pred_check_branch
          %655 = sbr.rel (%p653) target = $region48
        $region47: #{tpu_custom_call.1} parent=11 // pred_region
          _
        $region48: #{tpu_custom_call.1} parent=11 // pred_fallthru
          _
        // Predicated region
        $region49: #{tpu_custom_call.1} parent=11 // pred_check
          %p656 = pneg %p307
        $region50: #{tpu_custom_call.1} parent=11 // pred_check_branch
          %658 = sbr.rel (%p656) target = $region52
        $region51: #{tpu_custom_call.1} parent=11 // pred_region
          _
        $region52: #{tpu_custom_call.1} parent=11 // pred_fallthru
          _
        // Predicated region
        $region53: #{tpu_custom_call.1} parent=11 // pred_check
          %p659 = pneg %p328
        $region54: #{tpu_custom_call.1} parent=11 // pred_check_branch
          %661 = sbr.rel (%p659) target = $region56
        $region55: #{tpu_custom_call.1} parent=11 // pred_region
          _
        $region56: #{tpu_custom_call.1} parent=11 // pred_fallthru
          _
        // Predicated region
        $region57: #{tpu_custom_call.1} parent=11 // pred_check
          %p662 = pneg %p349
        $region58: #{tpu_custom_call.1} parent=11 // pred_check_branch
          %664 = sbr.rel (%p662) target = $region60
        $region59: #{tpu_custom_call.1} parent=11 // pred_region
          %s666 = ssub.s32 1024, 1024
          %667 = vsyncadd [#allocation13], %s666
          %s668 = sshll.u32 [#allocation14], 4
          %s669 = int_to_ptr.vmem [resolvable:$true] %s668
          %674 = dma.hbm_to_vmem [thread:$0]  %s13, 1024, %s669, [#allocation13], 64, 64, 4
        $region60: #{tpu_custom_call.1} parent=11 // pred_fallthru
          _
        // Predicated region
        $region61: #{tpu_custom_call.1} parent=11 // pred_check
          %p675 = pneg %p370
        $region62: #{tpu_custom_call.1} parent=11 // pred_check_branch
          %677 = sbr.rel (%p675) target = $region64
        $region63: #{tpu_custom_call.1} parent=11 // pred_region
          _
        $region64: #{tpu_custom_call.1} parent=11 // pred_fallthru
          _
        // Predicated region
        $region65: #{tpu_custom_call.1} parent=11 // pred_check
          %p678 = pneg %p391
        $region66: #{tpu_custom_call.1} parent=11 // pred_check_branch
          %680 = sbr.rel (%p678) target = $region68
        $region67: #{tpu_custom_call.1} parent=11 // pred_region
          _
        $region68: #{tpu_custom_call.1} parent=11 // pred_fallthru
          _
        // Predicated region
        $region69: #{tpu_custom_call.1} parent=11 // pred_check
          %p681 = pneg %p412
        $region70: #{tpu_custom_call.1} parent=11 // pred_check_branch
          %683 = sbr.rel (%p681) target = $region72
        $region71: #{tpu_custom_call.1} parent=11 // pred_region
          _
        $region72: #{tpu_custom_call.1} parent=11 // pred_fallthru
          _
        // Predicated region
        $region73: #{tpu_custom_call.1} parent=11 // pred_check
          %p684 = pneg %p433
        $region74: #{tpu_custom_call.1} parent=11 // pred_check_branch
          %686 = sbr.rel (%p684) target = $region76
        $region75: #{tpu_custom_call.1} parent=11 // pred_region
          %s688 = ssub.s32 4096, 4096
          %689 = vsyncadd [#allocation16], %s688
          %s690 = sshll.u32 [#allocation15], 4
          %s691 = int_to_ptr.vmem [resolvable:$true] %s690
          %696 = dma.hbm_to_vmem [thread:$0]  %s17, 4096, %s691, [#allocation16], 256, 256, 16
        $region76: #{tpu_custom_call.1} parent=11 // pred_fallthru
          _
        // Predicated region
        $region77: #{tpu_custom_call.1} parent=11 // pred_check
          %p697 = pneg %p454
        $region78: #{tpu_custom_call.1} parent=11 // pred_check_branch
          %699 = sbr.rel (%p697) target = $region80
        $region79: #{tpu_custom_call.1} parent=11 // pred_region
          _
        $region80: #{tpu_custom_call.1} parent=11 // pred_fallthru
          _
        // Predicated region
        $region81: #{tpu_custom_call.1} parent=11 // pred_check
          %p700 = pneg %p475
        $region82: #{tpu_custom_call.1} parent=11 // pred_check_branch
          %702 = sbr.rel (%p700) target = $region84
        $region83: #{tpu_custom_call.1} parent=11 // pred_region
          %s704 = ssub.s32 4096, 4096
          %705 = vsyncadd [#allocation16], %s704
          %s706 = sshll.u32 [#allocation17], 4
          %s707 = int_to_ptr.vmem [resolvable:$true] %s706
          %712 = dma.hbm_to_vmem [thread:$0]  %s19, 4096, %s707, [#allocation16], 64, 64, 4
        $region84: #{tpu_custom_call.1} parent=11 // pred_fallthru
          _
        // Predicated region
        $region85: #{tpu_custom_call.1} parent=11 // pred_check
          %p713 = pneg %p496
        $region86: #{tpu_custom_call.1} parent=11 // pred_check_branch
          %715 = sbr.rel (%p713) target = $region88
        $region87: #{tpu_custom_call.1} parent=11 // pred_region
          _
        $region88: #{tpu_custom_call.1} parent=11 // pred_fallthru
          _
      $region12: #{tpu_custom_call.1} parent=5 // pred_fallthru
        _
      %p716 = scmp.lt.s32.totalorder %s45, 2
      // Predicated region
      $region89: #{tpu_custom_call.1} parent=5 // pred_check
        %p717 = pneg %p716
      $region90: #{tpu_custom_call.1} parent=5 // pred_check_branch
        %719 = sbr.rel (%p717) target = $region92
      $region91: #{tpu_custom_call.1} parent=5 // pred_region
        // Predicated region
        $region93: #{tpu_custom_call.1} parent=91 // pred_check
          %p720 = pneg %p65
        $region94: #{tpu_custom_call.1} parent=91 // pred_check_branch
          %722 = sbr.rel (%p720) target = $region96
        $region95: #{tpu_custom_call.1} parent=91 // pred_region
          %s723 = sand.u32 %s55, 1
          %s724 = scalar_lea.sflag [#allocation4], %s723
          %s725 = sand.u32 %s55, 1
          %s726 = smul.addr %s725, 16
          %s727 = scalar_lea.vmem [#allocation3], %s726
          %s729 = ssub.s32 256, 256
          %730 = vsyncadd %s724, %s729
          %s731 = smul.addr %s45, 2
          %s732 = smul.addr %s731, 128
          %s733 = scalar_lea.hbm %s0, %s732
          %s734 = sshll.u32 %s727, 4
          %s735 = int_to_ptr.vmem [resolvable:$true] %s734
          %740 = dma.hbm_to_vmem [thread:$0]  %s733, 256, %s735, %s724, 128, 128, 8
        $region96: #{tpu_custom_call.1} parent=91 // pred_fallthru
          _
        // Predicated region
        $region97: #{tpu_custom_call.1} parent=91 // pred_check
          %p741 = pneg %p91
        $region98: #{tpu_custom_call.1} parent=91 // pred_check_branch
          %743 = sbr.rel (%p741) target = $region100
        $region99: #{tpu_custom_call.1} parent=91 // pred_region
          %s744 = sand.u32 %s45, 1
          %s745 = scalar_lea.sflag [#allocation7], %s744
          %s746 = sand.u32 %s81, 1
          %s747 = scalar_lea.vmem [#allocation6], %s746
          %s749 = ssub.s32 16, 16
          %750 = vsyncadd %s745, %s749
          %s751 = smul.addr %s45, 16
          %s752 = scalar_lea.hbm %s1, %s751
          %s754 = sshll.u32 %s747, 4
          %s755 = int_to_ptr.vmem [resolvable:$true] %s754
          %757 = dma.hbm_to_vmem [thread:$0]  %s752, 16, %s755, %s745
        $region100: #{tpu_custom_call.1} parent=91 // pred_fallthru
          _
      $region92: #{tpu_custom_call.1} parent=5 // pred_fallthru
        _
      %p758 = scmp.le.s32.totalorder 1, %s45
      %p759 = scmp.lt.s32.totalorder %s45, 3
      %p760 = pnand %p758, %p759
      %p761 = pneg %p760
      // Predicated region
      $region101: #{tpu_custom_call.1} parent=5 // pred_check
        _
      $region102: #{tpu_custom_call.1} parent=5 // pred_check_branch
        %763 = sbr.rel (%p760) target = $region104
      $region103: #{tpu_custom_call.1} parent=5 // pred_region
        %s764 = ssub.s32 %s45, 1
        %s765 = sand.u32 %s58, 1
        %s766 = scalar_lea.sflag [#allocation4], %s765
        %s767 = sand.u32 %s58, 1
        %s768 = smul.addr %s767, 16
        %s769 = scalar_lea.vmem [#allocation3], %s768
        // Predicated region
        $region105: #{tpu_custom_call.1} parent=103 // pred_check
          %p770 = pneg %p71
        $region106: #{tpu_custom_call.1} parent=103 // pred_check_branch
          %772 = sbr.rel (%p770) target = $region108
        $region107: #{tpu_custom_call.1} parent=103 // pred_region
          %773 = dma.done %s766, 256
        $region108: #{tpu_custom_call.1} parent=103 // pred_fallthru
          _
        %s774 = sand.u32 %s50, 1
        %s775 = scalar_lea.sflag [#allocation7], %s774
        %s776 = sand.u32 %s84, 1
        %s777 = scalar_lea.vmem [#allocation6], %s776
        // Predicated region
        $region109: #{tpu_custom_call.1} parent=103 // pred_check
          %p778 = pneg %p97
        $region110: #{tpu_custom_call.1} parent=103 // pred_check_branch
          %780 = sbr.rel (%p778) target = $region112
        $region111: #{tpu_custom_call.1} parent=103 // pred_region
          %781 = dma.done %s775, 16
        $region112: #{tpu_custom_call.1} parent=103 // pred_fallthru
          _
        // Predicated region
        $region113: #{tpu_custom_call.1} parent=103 // pred_check
          %p782 = pneg %p118
        $region114: #{tpu_custom_call.1} parent=103 // pred_check_branch
          %784 = sbr.rel (%p782) target = $region116
        $region115: #{tpu_custom_call.1} parent=103 // pred_region
          %785 = dma.done [#allocation7], 256
        $region116: #{tpu_custom_call.1} parent=103 // pred_fallthru
          _
        // Predicated region
        $region117: #{tpu_custom_call.1} parent=103 // pred_check
          %p786 = pneg %p139
        $region118: #{tpu_custom_call.1} parent=103 // pred_check_branch
          %788 = sbr.rel (%p786) target = $region120
        $region119: #{tpu_custom_call.1} parent=103 // pred_region
          %789 = dma.done [#allocation10], 256
        $region120: #{tpu_custom_call.1} parent=103 // pred_fallthru
          _
        // Predicated region
        $region121: #{tpu_custom_call.1} parent=103 // pred_check
          %p790 = pneg %p160
        $region122: #{tpu_custom_call.1} parent=103 // pred_check_branch
          %792 = sbr.rel (%p790) target = $region124
        $region123: #{tpu_custom_call.1} parent=103 // pred_region
          %793 = dma.done [#allocation10], 256
        $region124: #{tpu_custom_call.1} parent=103 // pred_fallthru
          _
        // Predicated region
        $region125: #{tpu_custom_call.1} parent=103 // pred_check
          %p794 = pneg %p223
        $region126: #{tpu_custom_call.1} parent=103 // pred_check_branch
          %796 = sbr.rel (%p794) target = $region128
        $region127: #{tpu_custom_call.1} parent=103 // pred_region
          %797 = dma.done [#allocation13], 3072
        $region128: #{tpu_custom_call.1} parent=103 // pred_fallthru
          _
        // Predicated region
        $region129: #{tpu_custom_call.1} parent=103 // pred_check
          %p798 = pneg %p349
        $region130: #{tpu_custom_call.1} parent=103 // pred_check_branch
          %800 = sbr.rel (%p798) target = $region132
        $region131: #{tpu_custom_call.1} parent=103 // pred_region
          %801 = dma.done [#allocation13], 1024
        $region132: #{tpu_custom_call.1} parent=103 // pred_fallthru
          _
        // Predicated region
        $region133: #{tpu_custom_call.1} parent=103 // pred_check
          %p802 = pneg %p433
        $region134: #{tpu_custom_call.1} parent=103 // pred_check_branch
          %804 = sbr.rel (%p802) target = $region136
        $region135: #{tpu_custom_call.1} parent=103 // pred_region
          %805 = dma.done [#allocation16], 4096
        $region136: #{tpu_custom_call.1} parent=103 // pred_fallthru
          _
        // Predicated region
        $region137: #{tpu_custom_call.1} parent=103 // pred_check
          %p806 = pneg %p475
        $region138: #{tpu_custom_call.1} parent=103 // pred_check_branch
          %808 = sbr.rel (%p806) target = $region140
        $region139: #{tpu_custom_call.1} parent=103 // pred_region
          %809 = dma.done [#allocation16], 4096
        $region140: #{tpu_custom_call.1} parent=103 // pred_fallthru
          _
        %s810 = sand.u32 %s58, 1
        %s811 = scalar_lea.sflag [#allocation4], %s810
        %s812 = sand.u32 %s58, 1
        %s813 = smul.addr %s812, 16
        %s814 = scalar_lea.vmem [#allocation3], %s813
        %p815 = pneg %p71
        %p816 = pneg %p68
        %s817 = sand.u32 %s50, 1
        %s818 = scalar_lea.sflag [#allocation7], %s817
        %s819 = sand.u32 %s84, 1
        %s820 = scalar_lea.vmem [#allocation6], %s819
        %p821 = pneg %p97
        %p822 = pneg %p94
        %p823 = pneg %p118
        %p824 = pneg %p115
        %p825 = pneg %p139
        %p826 = pneg %p136
        %p827 = pneg %p160
        %p828 = pneg %p157
        %p829 = pneg %p181
        %p830 = pneg %p178
        %p831 = pneg %p202
        %p832 = pneg %p199
        %p833 = pneg %p223
        %p834 = pneg %p220
        %p835 = pneg %p244
        %p836 = pneg %p241
        %p837 = pneg %p265
        %p838 = pneg %p262
        %p839 = pneg %p286
        %p840 = pneg %p283
        %p841 = pneg %p307
        %p842 = pneg %p304
        %p843 = pneg %p328
        %p844 = pneg %p325
        %p845 = pneg %p349
        %p846 = pneg %p346
        %p847 = pneg %p370
        %p848 = pneg %p367
        %p849 = pneg %p391
        %p850 = pneg %p388
        %p851 = pneg %p412
        %p852 = pneg %p409
        %p853 = pneg %p433
        %p854 = pneg %p430
        %p855 = pneg %p454
        %p856 = pneg %p451
        %p857 = pneg %p475
        %p858 = pneg %p472
        %p859 = pneg %p496
        %p860 = pneg %p493
        %p861 = pneg %p522
        %p862 = pneg %p519
        %s863 = sand.u32 %s509, 1
        %s864 = scalar_lea.sflag [#allocation5], %s863
        %s865 = sand.u32 %s509, 1
        %s866 = smul.addr %s865, 16
        %s867 = scalar_lea.vmem [#allocation18], %s866
        %p868 = pneg %p548
        %p869 = pneg %p545
        %s870 = sand.u32 %s50, 1
        %s871 = scalar_lea.sflag [#allocation20], %s870
        %s872 = sand.u32 %s535, 1
        %s873 = smul.addr %s872, 8
        %s874 = scalar_lea.vmem [#allocation19], %s873
        %p875 = pneg %p574
        %p876 = pneg %p571
        %s877 = sand.u32 %s50, 1
        %s878 = scalar_lea.sflag [#allocation20], %s877
        %s879 = sand.u32 %s561, 1
        %s880 = smul.addr %s879, 8
        %s881 = scalar_lea.vmem [#allocation21], %s880
        %v883 = vld [vmem:[%s769] sm:$0xff]
        %v884 = vld [vmem:[%s769 + $0x8] sm:$0xff]
        %v885 = vlaneseq
        %v886 = vshrl.u32 %v885, 7
        %v887 = vadd.s32 %v886, 8
        %v888 = vlaneseq
        %v889 = vand.u32 %v888, 127
        %vm890 = vcmp.le.s32.totalorder %v889, %v886
        %vm891 = vcmp.le.s32.totalorder %v889, %v887
        %v892 = vsel %vm890, 0.0, -1e+09
        %v893 = vsel %vm891, 0.0, -1e+09
        %v894 = vld [vmem:[%s777] sm:$0x1]
        %v896 = vlaneseq
        %v897 = vshrl.u32 %v896, 7
        %v898 = vsub.s32 0, %v897
        %v899 = vrot.slane %v894, %v898
        %v901 = vadd.f32 %v892, %v899
        %v902 = vadd.f32 %v893, %v899
        %v903 = vld [vmem:[%s5] sm:$0x1]
        %v904 = vld [vmem:[%s6] sm:$0x1]
        %905 = vadd.xlane.f32.xlu0 %v883
        %v906 = vpop.xlane.xlu0 %905
        %907 = vadd.xlane.f32.xlu0 %v884
        %v908 = vpop.xlane.xlu0 %907
        %v909 = vrcp.pop 128.0
        %v910 = vmul.f32 %v906, %v909
        %v911 = vmul.f32 %v908, %v909
        %v912 = vsub.f32 %v883, %v910
        %v913 = vsub.f32 %v884, %v911
        %v914 = vmul.f32 %v912, %v912
        %v915 = vmul.f32 %v913, %v913
        %916 = vadd.xlane.f32.xlu0 %v914
        %v917 = vpop.xlane.xlu0 %916
        %918 = vadd.xlane.f32.xlu0 %v915
        %v919 = vpop.xlane.xlu0 %918
        %v920 = vmul.f32 %v917, %v909
        %v921 = vmul.f32 %v919, %v909
        %v922 = vadd.f32 %v920, 1e-05
        %v923 = vadd.f32 %v921, 1e-05
        %v924 = vrsqrt.pop %v922
        %v925 = vrsqrt.pop %v923
        %v926 = vmul.f32 %v912, %v924
        %v927 = vmul.f32 %v913, %v925
        %v929 = vlaneseq
        %v930 = vshrl.u32 %v929, 7
        %v931 = vsub.s32 0, %v930
        %v932 = vrot.slane %v903, %v931
        %v934 = vmul.f32 %v926, %v932
        %v935 = vmul.f32 %v927, %v932
        %v937 = vlaneseq
        %v938 = vshrl.u32 %v937, 7
        %v939 = vsub.s32 0, %v938
        %v940 = vrot.slane %v904, %v939
        %v942 = vadd.f32 %v934, %v940
        %v943 = vadd.f32 %v935, %v940
        %v944 = vpack.c.bf16 %v943, %v942
        %v945 = vld [vmem:[#allocation12] sm:$0xff]
        %v946 = vld [vmem:[#allocation12 + $0x8] sm:$0xf]
        %v947 = vld [vmem:[#allocation12 + $0xc] sm:$0xff]
        %v948 = vld [vmem:[#allocation12 + $0x14] sm:$0xf]
        %v949 = vld [vmem:[#allocation12 + $0x18] sm:$0xff]
        %v950 = vld [vmem:[#allocation12 + $0x20] sm:$0xf]
        %v951 = vld [vmem:[#allocation12 + $0x24] sm:$0xff]
        %v952 = vld [vmem:[#allocation12 + $0x2c] sm:$0xf]
        %v953 = vld [vmem:[#allocation12 + $0x30] sm:$0xff]
        %v954 = vld [vmem:[#allocation12 + $0x38] sm:$0xf]
        %v955 = vld [vmem:[#allocation12 + $0x3c] sm:$0xff]
        %v956 = vld [vmem:[#allocation12 + $0x44] sm:$0xf]
        %v957 = vld [vmem:[#allocation12 + $0x48] sm:$0xff]
        %v958 = vld [vmem:[#allocation12 + $0x50] sm:$0xf]
        %v959 = vld [vmem:[#allocation12 + $0x54] sm:$0xff]
        %v960 = vld [vmem:[#allocation12 + $0x5c] sm:$0xf]
        %v961 = vld [vmem:[#allocation12 + $0x60] sm:$0xff]
        %v962 = vld [vmem:[#allocation12 + $0x68] sm:$0xf]
        %v963 = vld [vmem:[#allocation12 + $0x6c] sm:$0xff]
        %v964 = vld [vmem:[#allocation12 + $0x74] sm:$0xf]
        %v965 = vld [vmem:[#allocation12 + $0x78] sm:$0xff]
        %v966 = vld [vmem:[#allocation12 + $0x80] sm:$0xf]
        %v967 = vld [vmem:[#allocation12 + $0x84] sm:$0xff]
        %v968 = vld [vmem:[#allocation12 + $0x8c] sm:$0xf]
        %v969 = vld [vmem:[#allocation12 + $0x90] sm:$0xff]
        %v970 = vld [vmem:[#allocation12 + $0x98] sm:$0xf]
        %v971 = vld [vmem:[#allocation12 + $0x9c] sm:$0xff]
        %v972 = vld [vmem:[#allocation12 + $0xa4] sm:$0xf]
        %v973 = vld [vmem:[#allocation12 + $0xa8] sm:$0xff]
        %v974 = vld [vmem:[#allocation12 + $0xb0] sm:$0xf]
        %v975 = vld [vmem:[#allocation12 + $0xb4] sm:$0xff]
        %v976 = vld [vmem:[#allocation12 + $0xbc] sm:$0xf]
        %v977 = vld [vmem:[%s8] sm:$0x7]
        %v979 = vlaneseq
        %v980 = vshrl.u32 %v979, 7
        %v981 = vsub.s32 0, %v980
        %v982 = vrot.slane %v977, %v981
        %v983 = vlaneseq
        %v984 = vshrl.u32 %v983, 7
        %v985 = vsub.s32 1, %v984
        %v986 = vrot.slane %v977, %v985
        %v987 = vlaneseq
        %v988 = vshrl.u32 %v987, 7
        %v989 = vsub.s32 2, %v988
        %v990 = vrot.slane %v977, %v989
        %v1026 = vunpack.c.l.b16 %v945
        %v1027 = vunpack.c.h.b16 %v945
        %v1028 = vunpack.c.l.b16 %v946
        %v1029 = vunpack.c.l.b16 %v947
        %v1030 = vunpack.c.h.b16 %v947
        %v1031 = vunpack.c.l.b16 %v948
        %v1032 = vunpack.c.l.b16 %v949
        %v1033 = vunpack.c.h.b16 %v949
        %v1034 = vunpack.c.l.b16 %v950
        %v1035 = vunpack.c.l.b16 %v951
        %v1036 = vunpack.c.h.b16 %v951
        %v1037 = vunpack.c.l.b16 %v952
        %v1038 = vunpack.c.l.b16 %v953
        %v1039 = vunpack.c.h.b16 %v953
        %v1040 = vunpack.c.l.b16 %v954
        %v1041 = vunpack.c.l.b16 %v955
        %v1042 = vunpack.c.h.b16 %v955
        %v1043 = vunpack.c.l.b16 %v956
        %v1044 = vunpack.c.l.b16 %v957
        %v1045 = vunpack.c.h.b16 %v957
        %v1046 = vunpack.c.l.b16 %v958
        %v1047 = vunpack.c.l.b16 %v959
        %v1048 = vunpack.c.h.b16 %v959
        %v1049 = vunpack.c.l.b16 %v960
        %v1050 = vunpack.c.l.b16 %v961
        %v1051 = vunpack.c.h.b16 %v961
        %v1052 = vunpack.c.l.b16 %v962
        %v1053 = vunpack.c.l.b16 %v963
        %v1054 = vunpack.c.h.b16 %v963
        %v1055 = vunpack.c.l.b16 %v964
        %v1056 = vunpack.c.l.b16 %v965
        %v1057 = vunpack.c.h.b16 %v965
        %v1058 = vunpack.c.l.b16 %v966
        %v1059 = vunpack.c.l.b16 %v967
        %v1060 = vunpack.c.h.b16 %v967
        %v1061 = vunpack.c.l.b16 %v968
        %v1062 = vunpack.c.l.b16 %v969
        %v1063 = vunpack.c.h.b16 %v969
        %v1064 = vunpack.c.l.b16 %v970
        %v1065 = vunpack.c.l.b16 %v971
        %v1066 = vunpack.c.h.b16 %v971
        %v1067 = vunpack.c.l.b16 %v972
        %v1068 = vunpack.c.l.b16 %v973
        %v1069 = vunpack.c.h.b16 %v973
        %v1070 = vunpack.c.l.b16 %v974
        %v1071 = vunpack.c.l.b16 %v975
        %v1072 = vunpack.c.h.b16 %v975
        %v1073 = vunpack.c.l.b16 %v976
        %v1074 = vpack.c.b16 %v1029, %v1026
        %v1075 = vpack.c.b16 %v1030, %v1027
        %v1076 = vpack.c.b16 %v1031, %v1028
        %v1077 = vpack.c.b16 %v1035, %v1032
        %v1078 = vpack.c.b16 %v1036, %v1033
        %v1079 = vpack.c.b16 %v1037, %v1034
        %v1080 = vpack.c.b16 %v1041, %v1038
        %v1081 = vpack.c.b16 %v1042, %v1039
        %v1082 = vpack.c.b16 %v1043, %v1040
        %v1083 = vpack.c.b16 %v1047, %v1044
        %v1084 = vpack.c.b16 %v1048, %v1045
        %v1085 = vpack.c.b16 %v1049, %v1046
        %v1086 = vpack.c.b16 %v1053, %v1050
        %v1087 = vpack.c.b16 %v1054, %v1051
        %v1088 = vpack.c.b16 %v1055, %v1052
        %v1089 = vpack.c.b16 %v1059, %v1056
        %v1090 = vpack.c.b16 %v1060, %v1057
        %v1091 = vpack.c.b16 %v1061, %v1058
        %v1092 = vpack.c.b16 %v1065, %v1062
        %v1093 = vpack.c.b16 %v1066, %v1063
        %v1094 = vpack.c.b16 %v1067, %v1064
        %v1095 = vpack.c.b16 %v1071, %v1068
        %v1096 = vpack.c.b16 %v1072, %v1069
        %v1097 = vpack.c.b16 %v1073, %v1070
        %1122 = vmatprep.subr.bf16.mxu0 %v1075
        %1123 = vmatpush1.bf16.msra.mxu0 %v1074
        %1124 = vmatprep.subr.bf16.mxu0 %v1078
        %1125 = vmatpush1.bf16.msra.mxu0 %v1077
        %1126 = vmatprep.subr.bf16.mxu0 %v1081
        %1127 = vmatpush1.bf16.msra.mxu0 %v1080
        %1128 = vmatprep.subr.bf16.mxu0 %v1084
        %1129 = vmatpush1.bf16.msra.mxu0 %v1083
        %1130 = vmatprep.subr.bf16.mxu0 %v1087
        %1131 = vmatpush1.bf16.msra.mxu0 %v1086
        %1132 = vmatprep.subr.bf16.mxu0 %v1090
        %1133 = vmatpush1.bf16.msra.mxu0 %v1089
        %1134 = vmatprep.subr.bf16.mxu0 %v1093
        %1135 = vmatpush1.bf16.msra.mxu0 %v1092
        %1136 = vmatprep.subr.bf16.mxu0 %v1096
        %1137 = vmatpush1.bf16.msra.mxu0 %v1095
        %1138 = vmatprep.subr.bf16.mxu0 0
        %1139 = vmatpush1.bf16.msra.mxu0 0
        %1140 = vmatprep.subr.bf16.mxu0 0
        %1141 = vmatpush1.bf16.msra.mxu0 0
        %1142 = vmatprep.subr.bf16.mxu0 0
        %1143 = vmatpush1.bf16.msra.mxu0 0
        %1144 = vmatprep.subr.bf16.mxu0 0
        %1145 = vmatpush1.bf16.msra.mxu0 0
        %1146 = vmatprep.subr.bf16.mxu0 0
        %1147 = vmatpush1.bf16.msra.mxu0 0
        %1148 = vmatprep.subr.bf16.mxu0 0
        %1149 = vmatpush1.bf16.msra.mxu0 0
        %1150 = vmatprep.subr.bf16.mxu0 0
        %1151 = vmatpush1.bf16.msra.mxu0 0
        %1152 = vmatprep.subr.bf16.mxu0 0
        %1153 = vmatpush1.bf16.msra.mxu0 0
        %1154 = vmatprep.mubr.bf16.mxu0 0
        %1155 = vmatmul.mubr.bf16.gmra.mrb[0].mxu0 %v944
        %v1156 = vpop.f32.mrb[0].mxu0
        %v1157 = vadd.f32 %v982, %v1156
        %v1158 = vpop.f32.mrb[0].mxu0
        %v1159 = vadd.f32 %v986, %v1158
        %v1160 = vpop.f32.mrb[0].mxu0
        %v1161 = vadd.f32 %v982, %v1160
        %v1162 = vpop.f32.mrb[0].mxu0
        %v1163 = vadd.f32 %v986, %v1162
        %1164 = vdwg.mxu0
        %1165 = vmatprep.subr.bf16.mxu0 0
        %1166 = vmatpush1.bf16.msra.mxu0 %v1076
        %1167 = vmatprep.subr.bf16.mxu0 0
        %1168 = vmatpush1.bf16.msra.mxu0 %v1079
        %1169 = vmatprep.subr.bf16.mxu0 0
        %1170 = vmatpush1.bf16.msra.mxu0 %v1082
        %1171 = vmatprep.subr.bf16.mxu0 0
        %1172 = vmatpush1.bf16.msra.mxu0 %v1085
        %1173 = vmatprep.subr.bf16.mxu0 0
        %1174 = vmatpush1.bf16.msra.mxu0 %v1088
        %1175 = vmatprep.subr.bf16.mxu0 0
        %1176 = vmatpush1.bf16.msra.mxu0 %v1091
        %1177 = vmatprep.subr.bf16.mxu0 0
        %1178 = vmatpush1.bf16.msra.mxu0 %v1094
        %1179 = vmatprep.subr.bf16.mxu0 0
        %1180 = vmatpush1.bf16.msra.mxu0 %v1097
        %1181 = vmatprep.subr.bf16.mxu0 0
        %1182 = vmatpush1.bf16.msra.mxu0 0
        %1183 = vmatprep.subr.bf16.mxu0 0
        %1184 = vmatpush1.bf16.msra.mxu0 0
        %1185 = vmatprep.subr.bf16.mxu0 0
        %1186 = vmatpush1.bf16.msra.mxu0 0
        %1187 = vmatprep.subr.bf16.mxu0 0
        %1188 = vmatpush1.bf16.msra.mxu0 0
        %1189 = vmatprep.subr.bf16.mxu0 0
        %1190 = vmatpush1.bf16.msra.mxu0 0
        %1191 = vmatprep.subr.bf16.mxu0 0
        %1192 = vmatpush1.bf16.msra.mxu0 0
        %1193 = vmatprep.subr.bf16.mxu0 0
        %1194 = vmatpush1.bf16.msra.mxu0 0
        %1195 = vmatprep.subr.bf16.mxu0 0
        %1196 = vmatpush1.bf16.msra.mxu0 0
        %1197 = vmatprep.mubr.bf16.mxu0 0
        %1198 = vmatmul.mubr.bf16.gmra.mrb[0].mxu0 %v944
        %v1199 = vpop.f32.mrb[0].mxu0
        %v1200 = vadd.f32 %v990, %v1199
        %v1201 = vpop.f32.mrb[0].mxu0
        %v1202 = vpop.f32.mrb[0].mxu0
        %v1203 = vadd.f32 %v990, %v1202
        %v1204 = vpop.f32.mrb[0].mxu0
        %1205 = vdwg.mxu0
        %v1206 = vld [vmem:[#allocation8] sm:$0xff]
        %v1207 = vld [vmem:[#allocation8 + $0x8] sm:$0xff]
        %1210 = vrot.lane.b32.xlu0 %v1206, 64
        %v1211 = vpop.permute.xlu0 %1210
        %1212 = vrot.lane.b32.xlu0 %v1207, 64
        %v1213 = vpop.permute.xlu0 %1212
        %vm1216 = vcmask 523264
        %v1217 = vsel %vm1216, %v1206, %v1211
        %v1218 = vsel %vm1216, %v1207, %v1213
        %v1219 = vld [vmem:[#allocation9] sm:$0xff]
        %v1220 = vld [vmem:[#allocation9 + $0x8] sm:$0xff]
        %1223 = vrot.lane.b32.xlu0 %v1219, 64
        %v1224 = vpop.permute.xlu0 %1223
        %1225 = vrot.lane.b32.xlu0 %v1220, 64
        %v1226 = vpop.permute.xlu0 %1225
        %v1229 = vsel %vm1216, %v1219, %v1224
        %v1230 = vsel %vm1216, %v1220, %v1226
        %v1231 = vld [vmem:[#allocation11] sm:$0xff]
        %v1232 = vld [vmem:[#allocation11 + $0x8] sm:$0xff]
        %1235 = vrot.lane.b32.xlu0 %v1231, 64
        %v1236 = vpop.permute.xlu0 %1235
        %1237 = vrot.lane.b32.xlu0 %v1232, 64
        %v1238 = vpop.permute.xlu0 %1237
        %v1241 = vsel %vm1216, %v1231, %v1236
        %v1242 = vsel %vm1216, %v1232, %v1238
        %v1243 = vld [vmem:[%s9] sm:$0x1]
        %v1244 = vld [vmem:[%s10] sm:$0x1]
        %v1245 = vsel %vm1216, %v1157, 0.0
        %1246 = vadd.xlane.f32.xlu0 %v1245
        %v1247 = vpop.xlane.xlu0 %1246
        %v1248 = vsel %vm1216, %v1161, 0.0
        %1249 = vadd.xlane.f32.xlu0 %v1248
        %v1250 = vpop.xlane.xlu0 %1249
        %v1251 = vrcp.pop 64.0
        %v1252 = vmul.f32 %v1247, %v1251
        %v1253 = vmul.f32 %v1250, %v1251
        %v1254 = vsub.f32 %v1157, %v1252
        %v1255 = vsub.f32 %v1161, %v1253
        %v1256 = vmul.f32 %v1254, %v1254
        %v1257 = vmul.f32 %v1255, %v1255
        %v1258 = vsel %vm1216, %v1256, 0.0
        %1259 = vadd.xlane.f32.xlu0 %v1258
        %v1260 = vpop.xlane.xlu0 %1259
        %v1261 = vsel %vm1216, %v1257, 0.0
        %1262 = vadd.xlane.f32.xlu0 %v1261
        %v1263 = vpop.xlane.xlu0 %1262
        %v1264 = vmul.f32 %v1260, %v1251
        %v1265 = vmul.f32 %v1263, %v1251
        %v1266 = vadd.f32 %v1264, 1e-05
        %v1267 = vadd.f32 %v1265, 1e-05
        %v1268 = vrsqrt.pop %v1266
        %v1269 = vrsqrt.pop %v1267
        %v1270 = vmul.f32 %v1254, %v1268
        %v1271 = vmul.f32 %v1255, %v1269
        %v1273 = vlaneseq
        %v1274 = vshrl.u32 %v1273, 7
        %v1275 = vsub.s32 0, %v1274
        %v1276 = vrot.slane %v1243, %v1275
        %v1278 = vmul.f32 %v1270, %v1276
        %v1279 = vmul.f32 %v1271, %v1276
        %v1281 = vlaneseq
        %v1282 = vshrl.u32 %v1281, 7
        %v1283 = vsub.s32 0, %v1282
        %v1284 = vrot.slane %v1244, %v1283
        %v1286 = vadd.f32 %v1278, %v1284
        %v1287 = vadd.f32 %v1279, %v1284
        %v1288 = vld [vmem:[%s11] sm:$0x1]
        %v1289 = vld [vmem:[%s12] sm:$0x1]
        %v1290 = vsel %vm1216, %v1159, 0.0
        %1291 = vadd.xlane.f32.xlu0 %v1290
        %v1292 = vpop.xlane.xlu0 %1291
        %v1293 = vsel %vm1216, %v1163, 0.0
        %1294 = vadd.xlane.f32.xlu0 %v1293
        %v1295 = vpop.xlane.xlu0 %1294
        %v1296 = vmul.f32 %v1292, %v1251
        %v1297 = vmul.f32 %v1295, %v1251
        %v1298 = vsub.f32 %v1159, %v1296
        %v1299 = vsub.f32 %v1163, %v1297
        %v1300 = vmul.f32 %v1298, %v1298
        %v1301 = vmul.f32 %v1299, %v1299
        %v1302 = vsel %vm1216, %v1300, 0.0
        %1303 = vadd.xlane.f32.xlu0 %v1302
        %v1304 = vpop.xlane.xlu0 %1303
        %v1305 = vsel %vm1216, %v1301, 0.0
        %1306 = vadd.xlane.f32.xlu0 %v1305
        %v1307 = vpop.xlane.xlu0 %1306
        %v1308 = vmul.f32 %v1304, %v1251
        %v1309 = vmul.f32 %v1307, %v1251
        %v1310 = vadd.f32 %v1308, 1e-05
        %v1311 = vadd.f32 %v1309, 1e-05
        %v1312 = vrsqrt.pop %v1310
        %v1313 = vrsqrt.pop %v1311
        %v1314 = vmul.f32 %v1298, %v1312
        %v1315 = vmul.f32 %v1299, %v1313
        %v1317 = vlaneseq
        %v1318 = vshrl.u32 %v1317, 7
        %v1319 = vsub.s32 0, %v1318
        %v1320 = vrot.slane %v1288, %v1319
        %v1322 = vmul.f32 %v1314, %v1320
        %v1323 = vmul.f32 %v1315, %v1320
        %v1325 = vlaneseq
        %v1326 = vshrl.u32 %v1325, 7
        %v1327 = vsub.s32 0, %v1326
        %v1328 = vrot.slane %v1289, %v1327
        %v1330 = vadd.f32 %v1322, %v1328
        %v1331 = vadd.f32 %v1323, %v1328
        %1334 = vrot.lane.b32.xlu0 %v1157, 64
        %v1335 = vpop.permute.xlu0 %1334
        %1336 = vrot.lane.b32.xlu0 %v1161, 64
        %v1337 = vpop.permute.xlu0 %1336
        %v1340 = vsel %vm1216, %v1335, 0.0
        %1341 = vadd.xlane.f32.xlu0 %v1340
        %v1342 = vpop.xlane.xlu0 %1341
        %v1343 = vsel %vm1216, %v1337, 0.0
        %1344 = vadd.xlane.f32.xlu0 %v1343
        %v1345 = vpop.xlane.xlu0 %1344
        %v1346 = vmul.f32 %v1342, %v1251
        %v1347 = vmul.f32 %v1345, %v1251
        %v1348 = vsub.f32 %v1157, %v1346
        %v1349 = vsub.f32 %v1161, %v1347
        %v1350 = vmul.f32 %v1348, %v1348
        %v1351 = vmul.f32 %v1349, %v1349
        %1354 = vrot.lane.b32.xlu0 %v1350, 64
        %v1355 = vpop.permute.xlu0 %1354
        %1356 = vrot.lane.b32.xlu0 %v1351, 64
        %v1357 = vpop.permute.xlu0 %1356
        %v1360 = vsel %vm1216, %v1355, 0.0
        %1361 = vadd.xlane.f32.xlu0 %v1360
        %v1362 = vpop.xlane.xlu0 %1361
        %v1363 = vsel %vm1216, %v1357, 0.0
        %1364 = vadd.xlane.f32.xlu0 %v1363
        %v1365 = vpop.xlane.xlu0 %1364
        %v1366 = vmul.f32 %v1362, %v1251
        %v1367 = vmul.f32 %v1365, %v1251
        %v1368 = vadd.f32 %v1366, 1e-05
        %v1369 = vadd.f32 %v1367, 1e-05
        %v1370 = vrsqrt.pop %v1368
        %v1371 = vrsqrt.pop %v1369
        %v1372 = vmul.f32 %v1348, %v1370
        %v1373 = vmul.f32 %v1349, %v1371
        %1374 = vrot.lane.b32.xlu0 %v1276, 64
        %v1375 = vpop.permute.xlu0 %1374
        %v1377 = vmul.f32 %v1372, %v1375
        %v1378 = vmul.f32 %v1373, %v1375
        %1379 = vrot.lane.b32.xlu0 %v1284, 64
        %v1380 = vpop.permute.xlu0 %1379
        %v1382 = vadd.f32 %v1377, %v1380
        %v1383 = vadd.f32 %v1378, %v1380
        %1386 = vrot.lane.b32.xlu0 %v1159, 64
        %v1387 = vpop.permute.xlu0 %1386
        %1388 = vrot.lane.b32.xlu0 %v1163, 64
        %v1389 = vpop.permute.xlu0 %1388
        %v1392 = vsel %vm1216, %v1387, 0.0
        %1393 = vadd.xlane.f32.xlu0 %v1392
        %v1394 = vpop.xlane.xlu0 %1393
        %v1395 = vsel %vm1216, %v1389, 0.0
        %1396 = vadd.xlane.f32.xlu0 %v1395
        %v1397 = vpop.xlane.xlu0 %1396
        %v1398 = vmul.f32 %v1394, %v1251
        %v1399 = vmul.f32 %v1397, %v1251
        %v1400 = vsub.f32 %v1159, %v1398
        %v1401 = vsub.f32 %v1163, %v1399
        %v1402 = vmul.f32 %v1400, %v1400
        %v1403 = vmul.f32 %v1401, %v1401
        %1406 = vrot.lane.b32.xlu0 %v1402, 64
        %v1407 = vpop.permute.xlu0 %1406
        %1408 = vrot.lane.b32.xlu0 %v1403, 64
        %v1409 = vpop.permute.xlu0 %1408
        %v1412 = vsel %vm1216, %v1407, 0.0
        %1413 = vadd.xlane.f32.xlu0 %v1412
        %v1414 = vpop.xlane.xlu0 %1413
        %v1415 = vsel %vm1216, %v1409, 0.0
        %1416 = vadd.xlane.f32.xlu0 %v1415
        %v1417 = vpop.xlane.xlu0 %1416
        %v1418 = vmul.f32 %v1414, %v1251
        %v1419 = vmul.f32 %v1417, %v1251
        %v1420 = vadd.f32 %v1418, 1e-05
        %v1421 = vadd.f32 %v1419, 1e-05
        %v1422 = vrsqrt.pop %v1420
        %v1423 = vrsqrt.pop %v1421
        %v1424 = vmul.f32 %v1400, %v1422
        %v1425 = vmul.f32 %v1401, %v1423
        %1426 = vrot.lane.b32.xlu0 %v1320, 64
        %v1427 = vpop.permute.xlu0 %1426
        %v1429 = vmul.f32 %v1424, %v1427
        %v1430 = vmul.f32 %v1425, %v1427
        %1431 = vrot.lane.b32.xlu0 %v1328, 64
        %v1432 = vpop.permute.xlu0 %1431
        %v1434 = vadd.f32 %v1429, %v1432
        %v1435 = vadd.f32 %v1430, %v1432
        %v1436 = vsel %vm1216, %v1286, %v1382
        %v1437 = vsel %vm1216, %v1287, %v1383
        %v1438 = vsel %vm1216, %v1330, %v1434
        %v1439 = vsel %vm1216, %v1331, %v1435
        %1442 = vrot.lane.b32.xlu0 %v1436, 16
        %v1443 = vpop.permute.xlu0 %1442
        %1444 = vrot.lane.b32.xlu0 %v1437, 16
        %v1445 = vpop.permute.xlu0 %1444
        %vm1448 = vcmask 130048
        %1449 = vrot.lane.b32.xlu0 %v1436, 112
        %v1450 = vpop.permute.xlu0 %1449
        %1451 = vrot.lane.b32.xlu0 %v1437, 112
        %v1452 = vpop.permute.xlu0 %1451
        %v1455 = vmul.f32 %v1436, %v1217
        %v1456 = vmul.f32 %v1437, %v1218
        %v1457 = vmul.f32 %v1443, %v1229
        %v1458 = vmul.f32 %v1445, %v1230
        %v1459 = vadd.f32 %v1455, %v1457
        %v1460 = vadd.f32 %v1456, %v1458
        %v1461 = vmul.f32 %v1450, %v1241
        %v1462 = vmul.f32 %v1452, %v1242
        %v1463 = vsub.f32 %v1459, %v1461
        %v1464 = vsub.f32 %v1460, %v1462
        %1467 = vrot.lane.b32.xlu0 %v1438, 16
        %v1468 = vpop.permute.xlu0 %1467
        %1469 = vrot.lane.b32.xlu0 %v1439, 16
        %v1470 = vpop.permute.xlu0 %1469
        %1473 = vrot.lane.b32.xlu0 %v1438, 112
        %v1474 = vpop.permute.xlu0 %1473
        %1475 = vrot.lane.b32.xlu0 %v1439, 112
        %v1476 = vpop.permute.xlu0 %1475
        %v1479 = vmul.f32 %v1438, %v1217
        %v1480 = vmul.f32 %v1439, %v1218
        %v1481 = vmul.f32 %v1468, %v1229
        %v1482 = vmul.f32 %v1470, %v1230
        %v1483 = vadd.f32 %v1479, %v1481
        %v1484 = vadd.f32 %v1480, %v1482
        %v1485 = vmul.f32 %v1474, %v1241
        %v1486 = vmul.f32 %v1476, %v1242
        %v1487 = vsub.f32 %v1483, %v1485
        %v1488 = vsub.f32 %v1484, %v1486
        %v1489 = vpack.c.bf16 %v1488, %v1487
        %v1491 = vunpack.c.l.b16 %v1489
        %v1492 = vunpack.c.h.b16 %v1489
        %v1493 = vpack.c.b16 %v1491, %v1491
        %v1494 = vpack.c.b16 %v1492, %v1492
        %1497 = vst [vmem:[%s874] sm:$0xf] %v1493
        %1498 = vst [vmem:[%s874 + $0x4] sm:$0xf] %v1494
        %v1499 = vpack.c.bf16 %v1203, %v1200
        %v1501 = vunpack.c.l.b16 %v1499
        %v1502 = vunpack.c.h.b16 %v1499
        %v1503 = vpack.c.b16 %v1501, %v1501
        %v1504 = vpack.c.b16 %v1502, %v1502
        %1507 = vst [vmem:[%s881] sm:$0xf] %v1503
        %1508 = vst [vmem:[%s881 + $0x4] sm:$0xf] %v1504
        %v1509 = vpack.c.bf16 %v1464, %v1463
        %v1511 = vsel %vm1216, %v1509, 0
        %v1514 = vsel %vm1216, %v1489, 0
        %1516 = vmatprep.subr.bf16.mxu0 0
        %1517 = vmatpush1.bf16.xpose.msra.mxu0 %v1514
        %1518 = vmatprep.subr.bf16.mxu0 0
        %1519 = vmatpush1.bf16.xpose.msra.mxu0 0
        %1520 = vmatprep.subr.bf16.mxu0 0
        %1521 = vmatpush1.bf16.xpose.msra.mxu0 0
        %1522 = vmatprep.subr.bf16.mxu0 0
        %1523 = vmatpush1.bf16.xpose.msra.mxu0 0
        %1524 = vmatprep.subr.bf16.mxu0 0
        %1525 = vmatpush1.bf16.xpose.msra.mxu0 0
        %1526 = vmatprep.subr.bf16.mxu0 0
        %1527 = vmatpush1.bf16.xpose.msra.mxu0 0
        %1528 = vmatprep.subr.bf16.mxu0 0
        %1529 = vmatpush1.bf16.xpose.msra.mxu0 0
        %1530 = vmatprep.subr.bf16.mxu0 0
        %1531 = vmatpush1.bf16.xpose.msra.mxu0 0
        %1532 = vmatprep.subr.bf16.mxu0 0
        %1533 = vmatpush1.bf16.xpose.msra.mxu0 0
        %1534 = vmatprep.subr.bf16.mxu0 0
        %1535 = vmatpush1.bf16.xpose.msra.mxu0 0
        %1536 = vmatprep.subr.bf16.mxu0 0
        %1537 = vmatpush1.bf16.xpose.msra.mxu0 0
        %1538 = vmatprep.subr.bf16.mxu0 0
        %1539 = vmatpush1.bf16.xpose.msra.mxu0 0
        %1540 = vmatprep.subr.bf16.mxu0 0
        %1541 = vmatpush1.bf16.xpose.msra.mxu0 0
        %1542 = vmatprep.subr.bf16.mxu0 0
        %1543 = vmatpush1.bf16.xpose.msra.mxu0 0
        %1544 = vmatprep.subr.bf16.mxu0 0
        %1545 = vmatpush1.bf16.xpose.msra.mxu0 0
        %1546 = vmatprep.subr.bf16.mxu0 0
        %1547 = vmatpush1.bf16.xpose.msra.mxu0 0
        %1548 = vmatprep.mubr.bf16.mxu0 0
        %1549 = vmatmul.mubr.bf16.gmra.mrb[0].mxu0 %v1511
        %v1550 = vpop.f32.mrb[0].mxu0
        %v1551 = vadd.f32 %v901, %v1550
        %v1552 = vpop.f32.mrb[0].mxu0
        %v1553 = vpop.f32.mrb[0].mxu0
        %v1554 = vadd.f32 %v902, %v1553
        %v1555 = vpop.f32.mrb[0].mxu0
        %1556 = vdwg.mxu0
        %v1557 = vsel %vm1448, %v1551, -inf
        %1558 = vmax.xlane.f32.xlu0 %v1557
        %v1559 = vpop.xlane.xlu0 %1558
        %v1560 = vsel %vm1448, %v1554, -inf
        %1561 = vmax.xlane.f32.xlu0 %v1560
        %v1562 = vpop.xlane.xlu0 %1561
        %v1563 = vsub.f32 %v1551, %v1559
        %v1564 = vsub.f32 %v1554, %v1562
        %v1565 = vmul.f32 %v1563, 1.442695
        %v1566 = vpow.pop %v1565
        %v1567 = vmul.f32 %v1564, 1.442695
        %v1568 = vpow.pop %v1567
        %v1569 = vsel %vm1448, %v1566, 0.0
        %1570 = vadd.xlane.f32.xlu0 %v1569
        %v1571 = vpop.xlane.xlu0 %1570
        %v1572 = vsel %vm1448, %v1568, 0.0
        %1573 = vadd.xlane.f32.xlu0 %v1572
        %v1574 = vpop.xlane.xlu0 %1573
        %v1575 = vrcp.pop %v1571
        %v1576 = vrcp.pop %v1574
        %v1577 = vmul.f32 %v1566, %v1575
        %v1578 = vmul.f32 %v1568, %v1576
        %v1579 = vpack.c.bf16 %v1578, %v1577
        %v1581 = vsel %vm1448, %v1579, 0
        %1583 = vmatprep.subr.bf16.mxu0 0
        %1584 = vmatpush1.bf16.msra.mxu0 %v1499
        %1585 = vmatprep.subr.bf16.mxu0 0
        %1586 = vmatpush1.bf16.msra.mxu0 0
        %1587 = vmatprep.subr.bf16.mxu0 0
        %1588 = vmatpush1.bf16.msra.mxu0 0
        %1589 = vmatprep.subr.bf16.mxu0 0
        %1590 = vmatpush1.bf16.msra.mxu0 0
        %1591 = vmatprep.subr.bf16.mxu0 0
        %1592 = vmatpush1.bf16.msra.mxu0 0
        %1593 = vmatprep.subr.bf16.mxu0 0
        %1594 = vmatpush1.bf16.msra.mxu0 0
        %1595 = vmatprep.subr.bf16.mxu0 0
        %1596 = vmatpush1.bf16.msra.mxu0 0
        %1597 = vmatprep.subr.bf16.mxu0 0
        %1598 = vmatpush1.bf16.msra.mxu0 0
        %1599 = vmatprep.subr.bf16.mxu0 0
        %1600 = vmatpush1.bf16.msra.mxu0 0
        %1601 = vmatprep.subr.bf16.mxu0 0
        %1602 = vmatpush1.bf16.msra.mxu0 0
        %1603 = vmatprep.subr.bf16.mxu0 0
        %1604 = vmatpush1.bf16.msra.mxu0 0
        %1605 = vmatprep.subr.bf16.mxu0 0
        %1606 = vmatpush1.bf16.msra.mxu0 0
        %1607 = vmatprep.subr.bf16.mxu0 0
        %1608 = vmatpush1.bf16.msra.mxu0 0
        %1609 = vmatprep.subr.bf16.mxu0 0
        %1610 = vmatpush1.bf16.msra.mxu0 0
        %1611 = vmatprep.subr.bf16.mxu0 0
        %1612 = vmatpush1.bf16.msra.mxu0 0
        %1613 = vmatprep.subr.bf16.mxu0 0
        %1614 = vmatpush1.bf16.msra.mxu0 0
        %1615 = vmatprep.mubr.bf16.mxu0 0
        %1616 = vmatmul.mubr.bf16.gmra.mrb[0].mxu0 %v1581
        %v1617 = vpop.f32.mrb[0].mxu0
        %v1618 = vadd.f32 0.0, %v1617
        %v1619 = vpop.f32.mrb[0].mxu0
        %v1620 = vpop.f32.mrb[0].mxu0
        %v1621 = vadd.f32 0.0, %v1620
        %v1622 = vpop.f32.mrb[0].mxu0
        %1623 = vdwg.mxu0
        %1625 = vrot.lane.b32.xlu0 %v1509, 64
        %v1626 = vpop.permute.xlu0 %1625
        %1627 = vrot.lane.b32.xlu0 %v1489, 64
        %v1628 = vpop.permute.xlu0 %1627
        %v1630 = vsel %vm1216, %v1626, 0
        %v1633 = vsel %vm1216, %v1628, 0
        %1635 = vmatprep.subr.bf16.mxu0 0
        %1636 = vmatpush1.bf16.xpose.msra.mxu0 %v1633
        %1637 = vmatprep.subr.bf16.mxu0 0
        %1638 = vmatpush1.bf16.xpose.msra.mxu0 0
        %1639 = vmatprep.subr.bf16.mxu0 0
        %1640 = vmatpush1.bf16.xpose.msra.mxu0 0
        %1641 = vmatprep.subr.bf16.mxu0 0
        %1642 = vmatpush1.bf16.xpose.msra.mxu0 0
        %1643 = vmatprep.subr.bf16.mxu0 0
        %1644 = vmatpush1.bf16.xpose.msra.mxu0 0
        %1645 = vmatprep.subr.bf16.mxu0 0
        %1646 = vmatpush1.bf16.xpose.msra.mxu0 0
        %1647 = vmatprep.subr.bf16.mxu0 0
        %1648 = vmatpush1.bf16.xpose.msra.mxu0 0
        %1649 = vmatprep.subr.bf16.mxu0 0
        %1650 = vmatpush1.bf16.xpose.msra.mxu0 0
        %1651 = vmatprep.subr.bf16.mxu0 0
        %1652 = vmatpush1.bf16.xpose.msra.mxu0 0
        %1653 = vmatprep.subr.bf16.mxu0 0
        %1654 = vmatpush1.bf16.xpose.msra.mxu0 0
        %1655 = vmatprep.subr.bf16.mxu0 0
        %1656 = vmatpush1.bf16.xpose.msra.mxu0 0
        %1657 = vmatprep.subr.bf16.mxu0 0
        %1658 = vmatpush1.bf16.xpose.msra.mxu0 0
        %1659 = vmatprep.subr.bf16.mxu0 0
        %1660 = vmatpush1.bf16.xpose.msra.mxu0 0
        %1661 = vmatprep.subr.bf16.mxu0 0
        %1662 = vmatpush1.bf16.xpose.msra.mxu0 0
        %1663 = vmatprep.subr.bf16.mxu0 0
        %1664 = vmatpush1.bf16.xpose.msra.mxu0 0
        %1665 = vmatprep.subr.bf16.mxu0 0
        %1666 = vmatpush1.bf16.xpose.msra.mxu0 0
        %1667 = vmatprep.mubr.bf16.mxu0 0
        %1668 = vmatmul.mubr.bf16.gmra.mrb[0].mxu0 %v1630
        %v1669 = vpop.f32.mrb[0].mxu0
        %v1670 = vadd.f32 %v901, %v1669
        %v1671 = vpop.f32.mrb[0].mxu0
        %v1672 = vpop.f32.mrb[0].mxu0
        %v1673 = vadd.f32 %v902, %v1672
        %v1674 = vpop.f32.mrb[0].mxu0
        %1675 = vdwg.mxu0
        %v1676 = vsel %vm1448, %v1670, -inf
        %1677 = vmax.xlane.f32.xlu0 %v1676
        %v1678 = vpop.xlane.xlu0 %1677
        %v1679 = vsel %vm1448, %v1673, -inf
        %1680 = vmax.xlane.f32.xlu0 %v1679
        %v1681 = vpop.xlane.xlu0 %1680
        %v1682 = vsub.f32 %v1670, %v1678
        %v1683 = vsub.f32 %v1673, %v1681
        %v1684 = vmul.f32 %v1682, 1.442695
        %v1685 = vpow.pop %v1684
        %v1686 = vmul.f32 %v1683, 1.442695
        %v1687 = vpow.pop %v1686
        %v1688 = vsel %vm1448, %v1685, 0.0
        %1689 = vadd.xlane.f32.xlu0 %v1688
        %v1690 = vpop.xlane.xlu0 %1689
        %v1691 = vsel %vm1448, %v1687, 0.0
        %1692 = vadd.xlane.f32.xlu0 %v1691
        %v1693 = vpop.xlane.xlu0 %1692
        %v1694 = vrcp.pop %v1690
        %v1695 = vrcp.pop %v1693
        %v1696 = vmul.f32 %v1685, %v1694
        %v1697 = vmul.f32 %v1687, %v1695
        %v1698 = vpack.c.bf16 %v1697, %v1696
        %1699 = vrot.lane.b32.xlu0 %v1499, 64
        %v1700 = vpop.permute.xlu0 %1699
        %v1703 = vsel %vm1448, %v1698, 0
        %1705 = vmatprep.subr.bf16.mxu0 0
        %1706 = vmatpush1.bf16.msra.mxu0 %v1700
        %1707 = vmatprep.subr.bf16.mxu0 0
        %1708 = vmatpush1.bf16.msra.mxu0 0
        %1709 = vmatprep.subr.bf16.mxu0 0
        %1710 = vmatpush1.bf16.msra.mxu0 0
        %1711 = vmatprep.subr.bf16.mxu0 0
        %1712 = vmatpush1.bf16.msra.mxu0 0
        %1713 = vmatprep.subr.bf16.mxu0 0
        %1714 = vmatpush1.bf16.msra.mxu0 0
        %1715 = vmatprep.subr.bf16.mxu0 0
        %1716 = vmatpush1.bf16.msra.mxu0 0
        %1717 = vmatprep.subr.bf16.mxu0 0
        %1718 = vmatpush1.bf16.msra.mxu0 0
        %1719 = vmatprep.subr.bf16.mxu0 0
        %1720 = vmatpush1.bf16.msra.mxu0 0
        %1721 = vmatprep.subr.bf16.mxu0 0
        %1722 = vmatpush1.bf16.msra.mxu0 0
        %1723 = vmatprep.subr.bf16.mxu0 0
        %1724 = vmatpush1.bf16.msra.mxu0 0
        %1725 = vmatprep.subr.bf16.mxu0 0
        %1726 = vmatpush1.bf16.msra.mxu0 0
        %1727 = vmatprep.subr.bf16.mxu0 0
        %1728 = vmatpush1.bf16.msra.mxu0 0
        %1729 = vmatprep.subr.bf16.mxu0 0
        %1730 = vmatpush1.bf16.msra.mxu0 0
        %1731 = vmatprep.subr.bf16.mxu0 0
        %1732 = vmatpush1.bf16.msra.mxu0 0
        %1733 = vmatprep.subr.bf16.mxu0 0
        %1734 = vmatpush1.bf16.msra.mxu0 0
        %1735 = vmatprep.subr.bf16.mxu0 0
        %1736 = vmatpush1.bf16.msra.mxu0 0
        %1737 = vmatprep.mubr.bf16.mxu0 0
        %1738 = vmatmul.mubr.bf16.gmra.mrb[0].mxu0 %v1703
        %v1739 = vpop.f32.mrb[0].mxu0
        %v1740 = vadd.f32 0.0, %v1739
        %v1741 = vpop.f32.mrb[0].mxu0
        %v1742 = vpop.f32.mrb[0].mxu0
        %v1743 = vadd.f32 0.0, %v1742
        %v1744 = vpop.f32.mrb[0].mxu0
        %1745 = vdwg.mxu0
        %1748 = vrot.lane.b32.xlu0 %v1740, 64
        %v1749 = vpop.permute.xlu0 %1748
        %1750 = vrot.lane.b32.xlu0 %v1743, 64
        %v1751 = vpop.permute.xlu0 %1750
        %v1754 = vsel %vm1216, %v1618, %v1749
        %v1755 = vsel %vm1216, %v1621, %v1751
        %v1756 = vpack.c.bf16 %v1755, %v1754
        %1757 = vst [vmem:[#allocation2] sm:$0xff] %v1756
        %v1758 = vld [vmem:[#allocation2] sm:$0xff]
        %v1759 = vld [vmem:[#allocation14] sm:$0xf]
        %v1760 = vld [vmem:[#allocation14 + $0x4] sm:$0xf]
        %v1761 = vld [vmem:[#allocation14 + $0x8] sm:$0xf]
        %v1762 = vld [vmem:[#allocation14 + $0xc] sm:$0xf]
        %v1763 = vld [vmem:[#allocation14 + $0x10] sm:$0xf]
        %v1764 = vld [vmem:[#allocation14 + $0x14] sm:$0xf]
        %v1765 = vld [vmem:[#allocation14 + $0x18] sm:$0xf]
        %v1766 = vld [vmem:[#allocation14 + $0x1c] sm:$0xf]
        %v1767 = vld [vmem:[#allocation14 + $0x20] sm:$0xf]
        %v1768 = vld [vmem:[#allocation14 + $0x24] sm:$0xf]
        %v1769 = vld [vmem:[#allocation14 + $0x28] sm:$0xf]
        %v1770 = vld [vmem:[#allocation14 + $0x2c] sm:$0xf]
        %v1771 = vld [vmem:[#allocation14 + $0x30] sm:$0xf]
        %v1772 = vld [vmem:[#allocation14 + $0x34] sm:$0xf]
        %v1773 = vld [vmem:[#allocation14 + $0x38] sm:$0xf]
        %v1774 = vld [vmem:[#allocation14 + $0x3c] sm:$0xf]
        %v1775 = vld [vmem:[%s14] sm:$0x1]
        %v1777 = vlaneseq
        %v1778 = vshrl.u32 %v1777, 7
        %v1779 = vsub.s32 0, %v1778
        %v1780 = vrot.slane %v1775, %v1779
        %v1798 = vunpack.c.l.b16 %v1759
        %v1799 = vunpack.c.l.b16 %v1760
        %v1800 = vunpack.c.l.b16 %v1761
        %v1801 = vunpack.c.l.b16 %v1762
        %v1802 = vunpack.c.l.b16 %v1763
        %v1803 = vunpack.c.l.b16 %v1764
        %v1804 = vunpack.c.l.b16 %v1765
        %v1805 = vunpack.c.l.b16 %v1766
        %v1806 = vunpack.c.l.b16 %v1767
        %v1807 = vunpack.c.l.b16 %v1768
        %v1808 = vunpack.c.l.b16 %v1769
        %v1809 = vunpack.c.l.b16 %v1770
        %v1810 = vunpack.c.l.b16 %v1771
        %v1811 = vunpack.c.l.b16 %v1772
        %v1812 = vunpack.c.l.b16 %v1773
        %v1813 = vunpack.c.l.b16 %v1774
        %v1814 = vpack.c.b16 %v1799, %v1798
        %v1815 = vpack.c.b16 %v1801, %v1800
        %v1816 = vpack.c.b16 %v1803, %v1802
        %v1817 = vpack.c.b16 %v1805, %v1804
        %v1818 = vpack.c.b16 %v1807, %v1806
        %v1819 = vpack.c.b16 %v1809, %v1808
        %v1820 = vpack.c.b16 %v1811, %v1810
        %v1821 = vpack.c.b16 %v1813, %v1812
        %1830 = vmatprep.subr.bf16.mxu0 0
        %1831 = vmatpush1.bf16.msra.mxu0 %v1814
        %1832 = vmatprep.subr.bf16.mxu0 0
        %1833 = vmatpush1.bf16.msra.mxu0 %v1815
        %1834 = vmatprep.subr.bf16.mxu0 0
        %1835 = vmatpush1.bf16.msra.mxu0 %v1816
        %1836 = vmatprep.subr.bf16.mxu0 0
        %1837 = vmatpush1.bf16.msra.mxu0 %v1817
        %1838 = vmatprep.subr.bf16.mxu0 0
        %1839 = vmatpush1.bf16.msra.mxu0 %v1818
        %1840 = vmatprep.subr.bf16.mxu0 0
        %1841 = vmatpush1.bf16.msra.mxu0 %v1819
        %1842 = vmatprep.subr.bf16.mxu0 0
        %1843 = vmatpush1.bf16.msra.mxu0 %v1820
        %1844 = vmatprep.subr.bf16.mxu0 0
        %1845 = vmatpush1.bf16.msra.mxu0 %v1821
        %1846 = vmatprep.subr.bf16.mxu0 0
        %1847 = vmatpush1.bf16.msra.mxu0 0
        %1848 = vmatprep.subr.bf16.mxu0 0
        %1849 = vmatpush1.bf16.msra.mxu0 0
        %1850 = vmatprep.subr.bf16.mxu0 0
        %1851 = vmatpush1.bf16.msra.mxu0 0
        %1852 = vmatprep.subr.bf16.mxu0 0
        %1853 = vmatpush1.bf16.msra.mxu0 0
        %1854 = vmatprep.subr.bf16.mxu0 0
        %1855 = vmatpush1.bf16.msra.mxu0 0
        %1856 = vmatprep.subr.bf16.mxu0 0
        %1857 = vmatpush1.bf16.msra.mxu0 0
        %1858 = vmatprep.subr.bf16.mxu0 0
        %1859 = vmatpush1.bf16.msra.mxu0 0
        %1860 = vmatprep.subr.bf16.mxu0 0
        %1861 = vmatpush1.bf16.msra.mxu0 0
        %1862 = vmatprep.mubr.bf16.mxu0 0
        %1863 = vmatmul.mubr.bf16.gmra.mrb[0].mxu0 %v1758
        %v1864 = vpop.f32.mrb[0].mxu0
        %v1865 = vadd.f32 %v1780, %v1864
        %v1866 = vpop.f32.mrb[0].mxu0
        %v1867 = vpop.f32.mrb[0].mxu0
        %v1868 = vadd.f32 %v1780, %v1867
        %v1869 = vpop.f32.mrb[0].mxu0
        %1870 = vdwg.mxu0
        %v1871 = vadd.f32 %v883, %v1865
        %v1872 = vadd.f32 %v884, %v1868
        %v1873 = vld [vmem:[%s15] sm:$0x1]
        %v1874 = vld [vmem:[%s16] sm:$0x1]
        %1875 = vadd.xlane.f32.xlu0 %v1871
        %v1876 = vpop.xlane.xlu0 %1875
        %1877 = vadd.xlane.f32.xlu0 %v1872
        %v1878 = vpop.xlane.xlu0 %1877
        %v1879 = vmul.f32 %v1876, %v909
        %v1880 = vmul.f32 %v1878, %v909
        %v1881 = vsub.f32 %v1871, %v1879
        %v1882 = vsub.f32 %v1872, %v1880
        %v1883 = vmul.f32 %v1881, %v1881
        %v1884 = vmul.f32 %v1882, %v1882
        %1885 = vadd.xlane.f32.xlu0 %v1883
        %v1886 = vpop.xlane.xlu0 %1885
        %1887 = vadd.xlane.f32.xlu0 %v1884
        %v1888 = vpop.xlane.xlu0 %1887
        %v1889 = vmul.f32 %v1886, %v909
        %v1890 = vmul.f32 %v1888, %v909
        %v1891 = vadd.f32 %v1889, 1e-05
        %v1892 = vadd.f32 %v1890, 1e-05
        %v1893 = vrsqrt.pop %v1891
        %v1894 = vrsqrt.pop %v1892
        %v1895 = vmul.f32 %v1881, %v1893
        %v1896 = vmul.f32 %v1882, %v1894
        %v1898 = vlaneseq
        %v1899 = vshrl.u32 %v1898, 7
        %v1900 = vsub.s32 0, %v1899
        %v1901 = vrot.slane %v1873, %v1900
        %v1903 = vmul.f32 %v1895, %v1901
        %v1904 = vmul.f32 %v1896, %v1901
        %v1906 = vlaneseq
        %v1907 = vshrl.u32 %v1906, 7
        %v1908 = vsub.s32 0, %v1907
        %v1909 = vrot.slane %v1874, %v1908
        %v1911 = vadd.f32 %v1903, %v1909
        %v1912 = vadd.f32 %v1904, %v1909
        %v1913 = vpack.c.bf16 %v1912, %v1911
        %v1914 = vld [vmem:[#allocation15] sm:$0xff]
        %v1915 = vld [vmem:[#allocation15 + $0x8] sm:$0xff]
        %v1916 = vld [vmem:[#allocation15 + $0x10] sm:$0xff]
        %v1917 = vld [vmem:[#allocation15 + $0x18] sm:$0xff]
        %v1918 = vld [vmem:[#allocation15 + $0x20] sm:$0xff]
        %v1919 = vld [vmem:[#allocation15 + $0x28] sm:$0xff]
        %v1920 = vld [vmem:[#allocation15 + $0x30] sm:$0xff]
        %v1921 = vld [vmem:[#allocation15 + $0x38] sm:$0xff]
        %v1922 = vld [vmem:[#allocation15 + $0x40] sm:$0xff]
        %v1923 = vld [vmem:[#allocation15 + $0x48] sm:$0xff]
        %v1924 = vld [vmem:[#allocation15 + $0x50] sm:$0xff]
        %v1925 = vld [vmem:[#allocation15 + $0x58] sm:$0xff]
        %v1926 = vld [vmem:[#allocation15 + $0x60] sm:$0xff]
        %v1927 = vld [vmem:[#allocation15 + $0x68] sm:$0xff]
        %v1928 = vld [vmem:[#allocation15 + $0x70] sm:$0xff]
        %v1929 = vld [vmem:[#allocation15 + $0x78] sm:$0xff]
        %v1930 = vld [vmem:[#allocation15 + $0x80] sm:$0xff]
        %v1931 = vld [vmem:[#allocation15 + $0x88] sm:$0xff]
        %v1932 = vld [vmem:[#allocation15 + $0x90] sm:$0xff]
        %v1933 = vld [vmem:[#allocation15 + $0x98] sm:$0xff]
        %v1934 = vld [vmem:[#allocation15 + $0xa0] sm:$0xff]
        %v1935 = vld [vmem:[#allocation15 + $0xa8] sm:$0xff]
        %v1936 = vld [vmem:[#allocation15 + $0xb0] sm:$0xff]
        %v1937 = vld [vmem:[#allocation15 + $0xb8] sm:$0xff]
        %v1938 = vld [vmem:[#allocation15 + $0xc0] sm:$0xff]
        %v1939 = vld [vmem:[#allocation15 + $0xc8] sm:$0xff]
        %v1940 = vld [vmem:[#allocation15 + $0xd0] sm:$0xff]
        %v1941 = vld [vmem:[#allocation15 + $0xd8] sm:$0xff]
        %v1942 = vld [vmem:[#allocation15 + $0xe0] sm:$0xff]
        %v1943 = vld [vmem:[#allocation15 + $0xe8] sm:$0xff]
        %v1944 = vld [vmem:[#allocation15 + $0xf0] sm:$0xff]
        %v1945 = vld [vmem:[#allocation15 + $0xf8] sm:$0xff]
        %v1946 = vld [vmem:[%s18] sm:$0xf]
        %v1948 = vlaneseq
        %v1949 = vshrl.u32 %v1948, 7
        %v1950 = vsub.s32 0, %v1949
        %v1951 = vrot.slane %v1946, %v1950
        %v1952 = vlaneseq
        %v1953 = vshrl.u32 %v1952, 7
        %v1954 = vsub.s32 1, %v1953
        %v1955 = vrot.slane %v1946, %v1954
        %v1956 = vlaneseq
        %v1957 = vshrl.u32 %v1956, 7
        %v1958 = vsub.s32 2, %v1957
        %v1959 = vrot.slane %v1946, %v1958
        %v1960 = vlaneseq
        %v1961 = vshrl.u32 %v1960, 7
        %v1962 = vsub.s32 3, %v1961
        %v1963 = vrot.slane %v1946, %v1962
        %v2000 = vunpack.c.l.b16 %v1914
        %v2001 = vunpack.c.h.b16 %v1914
        %v2002 = vunpack.c.l.b16 %v1915
        %v2003 = vunpack.c.h.b16 %v1915
        %v2004 = vunpack.c.l.b16 %v1916
        %v2005 = vunpack.c.h.b16 %v1916
        %v2006 = vunpack.c.l.b16 %v1917
        %v2007 = vunpack.c.h.b16 %v1917
        %v2008 = vunpack.c.l.b16 %v1918
        %v2009 = vunpack.c.h.b16 %v1918
        %v2010 = vunpack.c.l.b16 %v1919
        %v2011 = vunpack.c.h.b16 %v1919
        %v2012 = vunpack.c.l.b16 %v1920
        %v2013 = vunpack.c.h.b16 %v1920
        %v2014 = vunpack.c.l.b16 %v1921
        %v2015 = vunpack.c.h.b16 %v1921
        %v2016 = vunpack.c.l.b16 %v1922
        %v2017 = vunpack.c.h.b16 %v1922
        %v2018 = vunpack.c.l.b16 %v1923
        %v2019 = vunpack.c.h.b16 %v1923
        %v2020 = vunpack.c.l.b16 %v1924
        %v2021 = vunpack.c.h.b16 %v1924
        %v2022 = vunpack.c.l.b16 %v1925
        %v2023 = vunpack.c.h.b16 %v1925
        %v2024 = vunpack.c.l.b16 %v1926
        %v2025 = vunpack.c.h.b16 %v1926
        %v2026 = vunpack.c.l.b16 %v1927
        %v2027 = vunpack.c.h.b16 %v1927
        %v2028 = vunpack.c.l.b16 %v1928
        %v2029 = vunpack.c.h.b16 %v1928
        %v2030 = vunpack.c.l.b16 %v1929
        %v2031 = vunpack.c.h.b16 %v1929
        %v2032 = vunpack.c.l.b16 %v1930
        %v2033 = vunpack.c.h.b16 %v1930
        %v2034 = vunpack.c.l.b16 %v1931
        %v2035 = vunpack.c.h.b16 %v1931
        %v2036 = vunpack.c.l.b16 %v1932
        %v2037 = vunpack.c.h.b16 %v1932
        %v2038 = vunpack.c.l.b16 %v1933
        %v2039 = vunpack.c.h.b16 %v1933
        %v2040 = vunpack.c.l.b16 %v1934
        %v2041 = vunpack.c.h.b16 %v1934
        %v2042 = vunpack.c.l.b16 %v1935
        %v2043 = vunpack.c.h.b16 %v1935
        %v2044 = vunpack.c.l.b16 %v1936
        %v2045 = vunpack.c.h.b16 %v1936
        %v2046 = vunpack.c.l.b16 %v1937
        %v2047 = vunpack.c.h.b16 %v1937
        %v2048 = vunpack.c.l.b16 %v1938
        %v2049 = vunpack.c.h.b16 %v1938
        %v2050 = vunpack.c.l.b16 %v1939
        %v2051 = vunpack.c.h.b16 %v1939
        %v2052 = vunpack.c.l.b16 %v1940
        %v2053 = vunpack.c.h.b16 %v1940
        %v2054 = vunpack.c.l.b16 %v1941
        %v2055 = vunpack.c.h.b16 %v1941
        %v2056 = vunpack.c.l.b16 %v1942
        %v2057 = vunpack.c.h.b16 %v1942
        %v2058 = vunpack.c.l.b16 %v1943
        %v2059 = vunpack.c.h.b16 %v1943
        %v2060 = vunpack.c.l.b16 %v1944
        %v2061 = vunpack.c.h.b16 %v1944
        %v2062 = vunpack.c.l.b16 %v1945
        %v2063 = vunpack.c.h.b16 %v1945
        %v2064 = vpack.c.b16 %v2004, %v2000
        %v2065 = vpack.c.b16 %v2005, %v2001
        %v2066 = vpack.c.b16 %v2006, %v2002
        %v2067 = vpack.c.b16 %v2007, %v2003
        %v2068 = vpack.c.b16 %v2012, %v2008
        %v2069 = vpack.c.b16 %v2013, %v2009
        %v2070 = vpack.c.b16 %v2014, %v2010
        %v2071 = vpack.c.b16 %v2015, %v2011
        %v2072 = vpack.c.b16 %v2020, %v2016
        %v2073 = vpack.c.b16 %v2021, %v2017
        %v2074 = vpack.c.b16 %v2022, %v2018
        %v2075 = vpack.c.b16 %v2023, %v2019
        %v2076 = vpack.c.b16 %v2028, %v2024
        %v2077 = vpack.c.b16 %v2029, %v2025
        %v2078 = vpack.c.b16 %v2030, %v2026
        %v2079 = vpack.c.b16 %v2031, %v2027
        %v2080 = vpack.c.b16 %v2036, %v2032
        %v2081 = vpack.c.b16 %v2037, %v2033
        %v2082 = vpack.c.b16 %v2038, %v2034
        %v2083 = vpack.c.b16 %v2039, %v2035
        %v2084 = vpack.c.b16 %v2044, %v2040
        %v2085 = vpack.c.b16 %v2045, %v2041
        %v2086 = vpack.c.b16 %v2046, %v2042
        %v2087 = vpack.c.b16 %v2047, %v2043
        %v2088 = vpack.c.b16 %v2052, %v2048
        %v2089 = vpack.c.b16 %v2053, %v2049
        %v2090 = vpack.c.b16 %v2054, %v2050
        %v2091 = vpack.c.b16 %v2055, %v2051
        %v2092 = vpack.c.b16 %v2060, %v2056
        %v2093 = vpack.c.b16 %v2061, %v2057
        %v2094 = vpack.c.b16 %v2062, %v2058
        %v2095 = vpack.c.b16 %v2063, %v2059
        %2128 = vmatprep.subr.bf16.mxu0 %v2065
        %2129 = vmatpush1.bf16.msra.mxu0 %v2064
        %2130 = vmatprep.subr.bf16.mxu0 %v2069
        %2131 = vmatpush1.bf16.msra.mxu0 %v2068
        %2132 = vmatprep.subr.bf16.mxu0 %v2073
        %2133 = vmatpush1.bf16.msra.mxu0 %v2072
        %2134 = vmatprep.subr.bf16.mxu0 %v2077
        %2135 = vmatpush1.bf16.msra.mxu0 %v2076
        %2136 = vmatprep.subr.bf16.mxu0 %v2081
        %2137 = vmatpush1.bf16.msra.mxu0 %v2080
        %2138 = vmatprep.subr.bf16.mxu0 %v2085
        %2139 = vmatpush1.bf16.msra.mxu0 %v2084
        %2140 = vmatprep.subr.bf16.mxu0 %v2089
        %2141 = vmatpush1.bf16.msra.mxu0 %v2088
        %2142 = vmatprep.subr.bf16.mxu0 %v2093
        %2143 = vmatpush1.bf16.msra.mxu0 %v2092
        %2144 = vmatprep.subr.bf16.mxu0 0
        %2145 = vmatpush1.bf16.msra.mxu0 0
        %2146 = vmatprep.subr.bf16.mxu0 0
        %2147 = vmatpush1.bf16.msra.mxu0 0
        %2148 = vmatprep.subr.bf16.mxu0 0
        %2149 = vmatpush1.bf16.msra.mxu0 0
        %2150 = vmatprep.subr.bf16.mxu0 0
        %2151 = vmatpush1.bf16.msra.mxu0 0
        %2152 = vmatprep.subr.bf16.mxu0 0
        %2153 = vmatpush1.bf16.msra.mxu0 0
        %2154 = vmatprep.subr.bf16.mxu0 0
        %2155 = vmatpush1.bf16.msra.mxu0 0
        %2156 = vmatprep.subr.bf16.mxu0 0
        %2157 = vmatpush1.bf16.msra.mxu0 0
        %2158 = vmatprep.subr.bf16.mxu0 0
        %2159 = vmatpush1.bf16.msra.mxu0 0
        %2160 = vmatprep.mubr.bf16.mxu0 0
        %2161 = vmatmul.mubr.bf16.gmra.mrb[0].mxu0 %v1913
        %v2162 = vpop.f32.mrb[0].mxu0
        %v2163 = vadd.f32 %v1951, %v2162
        %v2164 = vpop.f32.mrb[0].mxu0
        %v2165 = vadd.f32 %v1955, %v2164
        %v2166 = vpop.f32.mrb[0].mxu0
        %v2167 = vadd.f32 %v1951, %v2166
        %v2168 = vpop.f32.mrb[0].mxu0
        %v2169 = vadd.f32 %v1955, %v2168
        %2170 = vdwg.mxu0
        %2171 = vmatprep.subr.bf16.mxu0 %v2067
        %2172 = vmatpush1.bf16.msra.mxu0 %v2066
        %2173 = vmatprep.subr.bf16.mxu0 %v2071
        %2174 = vmatpush1.bf16.msra.mxu0 %v2070
        %2175 = vmatprep.subr.bf16.mxu0 %v2075
        %2176 = vmatpush1.bf16.msra.mxu0 %v2074
        %2177 = vmatprep.subr.bf16.mxu0 %v2079
        %2178 = vmatpush1.bf16.msra.mxu0 %v2078
        %2179 = vmatprep.subr.bf16.mxu0 %v2083
        %2180 = vmatpush1.bf16.msra.mxu0 %v2082
        %2181 = vmatprep.subr.bf16.mxu0 %v2087
        %2182 = vmatpush1.bf16.msra.mxu0 %v2086
        %2183 = vmatprep.subr.bf16.mxu0 %v2091
        %2184 = vmatpush1.bf16.msra.mxu0 %v2090
        %2185 = vmatprep.subr.bf16.mxu0 %v2095
        %2186 = vmatpush1.bf16.msra.mxu0 %v2094
        %2187 = vmatprep.subr.bf16.mxu0 0
        %2188 = vmatpush1.bf16.msra.mxu0 0
        %2189 = vmatprep.subr.bf16.mxu0 0
        %2190 = vmatpush1.bf16.msra.mxu0 0
        %2191 = vmatprep.subr.bf16.mxu0 0
        %2192 = vmatpush1.bf16.msra.mxu0 0
        %2193 = vmatprep.subr.bf16.mxu0 0
        %2194 = vmatpush1.bf16.msra.mxu0 0
        %2195 = vmatprep.subr.bf16.mxu0 0
        %2196 = vmatpush1.bf16.msra.mxu0 0
        %2197 = vmatprep.subr.bf16.mxu0 0
        %2198 = vmatpush1.bf16.msra.mxu0 0
        %2199 = vmatprep.subr.bf16.mxu0 0
        %2200 = vmatpush1.bf16.msra.mxu0 0
        %2201 = vmatprep.subr.bf16.mxu0 0
        %2202 = vmatpush1.bf16.msra.mxu0 0
        %2203 = vmatprep.mubr.bf16.mxu0 0
        %2204 = vmatmul.mubr.bf16.gmra.mrb[0].mxu0 %v1913
        %v2205 = vpop.f32.mrb[0].mxu0
        %v2206 = vadd.f32 %v1959, %v2205
        %v2207 = vpop.f32.mrb[0].mxu0
        %v2208 = vadd.f32 %v1963, %v2207
        %v2209 = vpop.f32.mrb[0].mxu0
        %v2210 = vadd.f32 %v1959, %v2209
        %v2211 = vpop.f32.mrb[0].mxu0
        %v2212 = vadd.f32 %v1963, %v2211
        %2213 = vdwg.mxu0
        %v2214 = vmax.f32 %v2163, 0.0
        %v2215 = vmax.f32 %v2165, 0.0
        %v2216 = vmax.f32 %v2206, 0.0
        %v2217 = vmax.f32 %v2208, 0.0
        %v2218 = vmax.f32 %v2167, 0.0
        %v2219 = vmax.f32 %v2169, 0.0
        %v2220 = vmax.f32 %v2210, 0.0
        %v2221 = vmax.f32 %v2212, 0.0
        %v2222 = vmul.f32 %v2214, %v2214
        %v2223 = vmul.f32 %v2215, %v2215
        %v2224 = vmul.f32 %v2216, %v2216
        %v2225 = vmul.f32 %v2217, %v2217
        %v2226 = vmul.f32 %v2218, %v2218
        %v2227 = vmul.f32 %v2219, %v2219
        %v2228 = vmul.f32 %v2220, %v2220
        %v2229 = vmul.f32 %v2221, %v2221
        %v2230 = vpack.c.bf16 %v2226, %v2222
        %v2231 = vpack.c.bf16 %v2227, %v2223
        %v2232 = vpack.c.bf16 %v2228, %v2224
        %v2233 = vpack.c.bf16 %v2229, %v2225
        %v2234 = vld [vmem:[#allocation17] sm:$0xf]
        %v2235 = vld [vmem:[#allocation17 + $0x4] sm:$0xf]
        %v2236 = vld [vmem:[#allocation17 + $0x8] sm:$0xf]
        %v2237 = vld [vmem:[#allocation17 + $0xc] sm:$0xf]
        %v2238 = vld [vmem:[#allocation17 + $0x10] sm:$0xf]
        %v2239 = vld [vmem:[#allocation17 + $0x14] sm:$0xf]
        %v2240 = vld [vmem:[#allocation17 + $0x18] sm:$0xf]
        %v2241 = vld [vmem:[#allocation17 + $0x1c] sm:$0xf]
        %v2242 = vld [vmem:[#allocation17 + $0x20] sm:$0xf]
        %v2243 = vld [vmem:[#allocation17 + $0x24] sm:$0xf]
        %v2244 = vld [vmem:[#allocation17 + $0x28] sm:$0xf]
        %v2245 = vld [vmem:[#allocation17 + $0x2c] sm:$0xf]
        %v2246 = vld [vmem:[#allocation17 + $0x30] sm:$0xf]
        %v2247 = vld [vmem:[#allocation17 + $0x34] sm:$0xf]
        %v2248 = vld [vmem:[#allocation17 + $0x38] sm:$0xf]
        %v2249 = vld [vmem:[#allocation17 + $0x3c] sm:$0xf]
        %v2250 = vld [vmem:[#allocation17 + $0x40] sm:$0xf]
        %v2251 = vld [vmem:[#allocation17 + $0x44] sm:$0xf]
        %v2252 = vld [vmem:[#allocation17 + $0x48] sm:$0xf]
        %v2253 = vld [vmem:[#allocation17 + $0x4c] sm:$0xf]
        %v2254 = vld [vmem:[#allocation17 + $0x50] sm:$0xf]
        %v2255 = vld [vmem:[#allocation17 + $0x54] sm:$0xf]
        %v2256 = vld [vmem:[#allocation17 + $0x58] sm:$0xf]
        %v2257 = vld [vmem:[#allocation17 + $0x5c] sm:$0xf]
        %v2258 = vld [vmem:[#allocation17 + $0x60] sm:$0xf]
        %v2259 = vld [vmem:[#allocation17 + $0x64] sm:$0xf]
        %v2260 = vld [vmem:[#allocation17 + $0x68] sm:$0xf]
        %v2261 = vld [vmem:[#allocation17 + $0x6c] sm:$0xf]
        %v2262 = vld [vmem:[#allocation17 + $0x70] sm:$0xf]
        %v2263 = vld [vmem:[#allocation17 + $0x74] sm:$0xf]
        %v2264 = vld [vmem:[#allocation17 + $0x78] sm:$0xf]
        %v2265 = vld [vmem:[#allocation17 + $0x7c] sm:$0xf]
        %v2266 = vld [vmem:[#allocation17 + $0x80] sm:$0xf]
        %v2267 = vld [vmem:[#allocation17 + $0x84] sm:$0xf]
        %v2268 = vld [vmem:[#allocation17 + $0x88] sm:$0xf]
        %v2269 = vld [vmem:[#allocation17 + $0x8c] sm:$0xf]
        %v2270 = vld [vmem:[#allocation17 + $0x90] sm:$0xf]
        %v2271 = vld [vmem:[#allocation17 + $0x94] sm:$0xf]
        %v2272 = vld [vmem:[#allocation17 + $0x98] sm:$0xf]
        %v2273 = vld [vmem:[#allocation17 + $0x9c] sm:$0xf]
        %v2274 = vld [vmem:[#allocation17 + $0xa0] sm:$0xf]
        %v2275 = vld [vmem:[#allocation17 + $0xa4] sm:$0xf]
        %v2276 = vld [vmem:[#allocation17 + $0xa8] sm:$0xf]
        %v2277 = vld [vmem:[#allocation17 + $0xac] sm:$0xf]
        %v2278 = vld [vmem:[#allocation17 + $0xb0] sm:$0xf]
        %v2279 = vld [vmem:[#allocation17 + $0xb4] sm:$0xf]
        %v2280 = vld [vmem:[#allocation17 + $0xb8] sm:$0xf]
        %v2281 = vld [vmem:[#allocation17 + $0xbc] sm:$0xf]
        %v2282 = vld [vmem:[#allocation17 + $0xc0] sm:$0xf]
        %v2283 = vld [vmem:[#allocation17 + $0xc4] sm:$0xf]
        %v2284 = vld [vmem:[#allocation17 + $0xc8] sm:$0xf]
        %v2285 = vld [vmem:[#allocation17 + $0xcc] sm:$0xf]
        %v2286 = vld [vmem:[#allocation17 + $0xd0] sm:$0xf]
        %v2287 = vld [vmem:[#allocation17 + $0xd4] sm:$0xf]
        %v2288 = vld [vmem:[#allocation17 + $0xd8] sm:$0xf]
        %v2289 = vld [vmem:[#allocation17 + $0xdc] sm:$0xf]
        %v2290 = vld [vmem:[#allocation17 + $0xe0] sm:$0xf]
        %v2291 = vld [vmem:[#allocation17 + $0xe4] sm:$0xf]
        %v2292 = vld [vmem:[#allocation17 + $0xe8] sm:$0xf]
        %v2293 = vld [vmem:[#allocation17 + $0xec] sm:$0xf]
        %v2294 = vld [vmem:[#allocation17 + $0xf0] sm:$0xf]
        %v2295 = vld [vmem:[#allocation17 + $0xf4] sm:$0xf]
        %v2296 = vld [vmem:[#allocation17 + $0xf8] sm:$0xf]
        %v2297 = vld [vmem:[#allocation17 + $0xfc] sm:$0xf]
        %v2298 = vld [vmem:[%s20] sm:$0x1]
        %v2300 = vlaneseq
        %v2301 = vshrl.u32 %v2300, 7
        %v2302 = vsub.s32 0, %v2301
        %v2303 = vrot.slane %v2298, %v2302
        %v2369 = vunpack.c.l.b16 %v2234
        %v2370 = vunpack.c.l.b16 %v2235
        %v2371 = vunpack.c.l.b16 %v2236
        %v2372 = vunpack.c.l.b16 %v2237
        %v2373 = vunpack.c.l.b16 %v2238
        %v2374 = vunpack.c.l.b16 %v2239
        %v2375 = vunpack.c.l.b16 %v2240
        %v2376 = vunpack.c.l.b16 %v2241
        %v2377 = vunpack.c.l.b16 %v2242
        %v2378 = vunpack.c.l.b16 %v2243
        %v2379 = vunpack.c.l.b16 %v2244
        %v2380 = vunpack.c.l.b16 %v2245
        %v2381 = vunpack.c.l.b16 %v2246
        %v2382 = vunpack.c.l.b16 %v2247
        %v2383 = vunpack.c.l.b16 %v2248
        %v2384 = vunpack.c.l.b16 %v2249
        %v2385 = vunpack.c.l.b16 %v2250
        %v2386 = vunpack.c.l.b16 %v2251
        %v2387 = vunpack.c.l.b16 %v2252
        %v2388 = vunpack.c.l.b16 %v2253
        %v2389 = vunpack.c.l.b16 %v2254
        %v2390 = vunpack.c.l.b16 %v2255
        %v2391 = vunpack.c.l.b16 %v2256
        %v2392 = vunpack.c.l.b16 %v2257
        %v2393 = vunpack.c.l.b16 %v2258
        %v2394 = vunpack.c.l.b16 %v2259
        %v2395 = vunpack.c.l.b16 %v2260
        %v2396 = vunpack.c.l.b16 %v2261
        %v2397 = vunpack.c.l.b16 %v2262
        %v2398 = vunpack.c.l.b16 %v2263
        %v2399 = vunpack.c.l.b16 %v2264
        %v2400 = vunpack.c.l.b16 %v2265
        %v2401 = vunpack.c.l.b16 %v2266
        %v2402 = vunpack.c.l.b16 %v2267
        %v2403 = vunpack.c.l.b16 %v2268
        %v2404 = vunpack.c.l.b16 %v2269
        %v2405 = vunpack.c.l.b16 %v2270
        %v2406 = vunpack.c.l.b16 %v2271
        %v2407 = vunpack.c.l.b16 %v2272
        %v2408 = vunpack.c.l.b16 %v2273
        %v2409 = vunpack.c.l.b16 %v2274
        %v2410 = vunpack.c.l.b16 %v2275
        %v2411 = vunpack.c.l.b16 %v2276
        %v2412 = vunpack.c.l.b16 %v2277
        %v2413 = vunpack.c.l.b16 %v2278
        %v2414 = vunpack.c.l.b16 %v2279
        %v2415 = vunpack.c.l.b16 %v2280
        %v2416 = vunpack.c.l.b16 %v2281
        %v2417 = vunpack.c.l.b16 %v2282
        %v2418 = vunpack.c.l.b16 %v2283
        %v2419 = vunpack.c.l.b16 %v2284
        %v2420 = vunpack.c.l.b16 %v2285
        %v2421 = vunpack.c.l.b16 %v2286
        %v2422 = vunpack.c.l.b16 %v2287
        %v2423 = vunpack.c.l.b16 %v2288
        %v2424 = vunpack.c.l.b16 %v2289
        %v2425 = vunpack.c.l.b16 %v2290
        %v2426 = vunpack.c.l.b16 %v2291
        %v2427 = vunpack.c.l.b16 %v2292
        %v2428 = vunpack.c.l.b16 %v2293
        %v2429 = vunpack.c.l.b16 %v2294
        %v2430 = vunpack.c.l.b16 %v2295
        %v2431 = vunpack.c.l.b16 %v2296
        %v2432 = vunpack.c.l.b16 %v2297
        %v2433 = vpack.c.b16 %v2370, %v2369
        %v2434 = vpack.c.b16 %v2372, %v2371
        %v2435 = vpack.c.b16 %v2374, %v2373
        %v2436 = vpack.c.b16 %v2376, %v2375
        %v2437 = vpack.c.b16 %v2378, %v2377
        %v2438 = vpack.c.b16 %v2380, %v2379
        %v2439 = vpack.c.b16 %v2382, %v2381
        %v2440 = vpack.c.b16 %v2384, %v2383
        %v2441 = vpack.c.b16 %v2386, %v2385
        %v2442 = vpack.c.b16 %v2388, %v2387
        %v2443 = vpack.c.b16 %v2390, %v2389
        %v2444 = vpack.c.b16 %v2392, %v2391
        %v2445 = vpack.c.b16 %v2394, %v2393
        %v2446 = vpack.c.b16 %v2396, %v2395
        %v2447 = vpack.c.b16 %v2398, %v2397
        %v2448 = vpack.c.b16 %v2400, %v2399
        %v2449 = vpack.c.b16 %v2402, %v2401
        %v2450 = vpack.c.b16 %v2404, %v2403
        %v2451 = vpack.c.b16 %v2406, %v2405
        %v2452 = vpack.c.b16 %v2408, %v2407
        %v2453 = vpack.c.b16 %v2410, %v2409
        %v2454 = vpack.c.b16 %v2412, %v2411
        %v2455 = vpack.c.b16 %v2414, %v2413
        %v2456 = vpack.c.b16 %v2416, %v2415
        %v2457 = vpack.c.b16 %v2418, %v2417
        %v2458 = vpack.c.b16 %v2420, %v2419
        %v2459 = vpack.c.b16 %v2422, %v2421
        %v2460 = vpack.c.b16 %v2424, %v2423
        %v2461 = vpack.c.b16 %v2426, %v2425
        %v2462 = vpack.c.b16 %v2428, %v2427
        %v2463 = vpack.c.b16 %v2430, %v2429
        %v2464 = vpack.c.b16 %v2432, %v2431
        %2497 = vmatprep.subr.bf16.mxu0 0
        %2498 = vmatpush1.bf16.msra.mxu0 %v2433
        %2499 = vmatprep.subr.bf16.mxu0 0
        %2500 = vmatpush1.bf16.msra.mxu0 %v2434
        %2501 = vmatprep.subr.bf16.mxu0 0
        %2502 = vmatpush1.bf16.msra.mxu0 %v2435
        %2503 = vmatprep.subr.bf16.mxu0 0
        %2504 = vmatpush1.bf16.msra.mxu0 %v2436
        %2505 = vmatprep.subr.bf16.mxu0 0
        %2506 = vmatpush1.bf16.msra.mxu0 %v2437
        %2507 = vmatprep.subr.bf16.mxu0 0
        %2508 = vmatpush1.bf16.msra.mxu0 %v2438
        %2509 = vmatprep.subr.bf16.mxu0 0
        %2510 = vmatpush1.bf16.msra.mxu0 %v2439
        %2511 = vmatprep.subr.bf16.mxu0 0
        %2512 = vmatpush1.bf16.msra.mxu0 %v2440
        %2513 = vmatprep.subr.bf16.mxu0 0
        %2514 = vmatpush1.bf16.msra.mxu0 %v2441
        %2515 = vmatprep.subr.bf16.mxu0 0
        %2516 = vmatpush1.bf16.msra.mxu0 %v2442
        %2517 = vmatprep.subr.bf16.mxu0 0
        %2518 = vmatpush1.bf16.msra.mxu0 %v2443
        %2519 = vmatprep.subr.bf16.mxu0 0
        %2520 = vmatpush1.bf16.msra.mxu0 %v2444
        %2521 = vmatprep.subr.bf16.mxu0 0
        %2522 = vmatpush1.bf16.msra.mxu0 %v2445
        %2523 = vmatprep.subr.bf16.mxu0 0
        %2524 = vmatpush1.bf16.msra.mxu0 %v2446
        %2525 = vmatprep.subr.bf16.mxu0 0
        %2526 = vmatpush1.bf16.msra.mxu0 %v2447
        %2527 = vmatprep.subr.bf16.mxu0 0
        %2528 = vmatpush1.bf16.msra.mxu0 %v2448
        %2529 = vmatprep.mubr.bf16.mxu0 %v2231
        %2530 = vmatmul.mubr.bf16.gmra.mrb[0].mxu0 %v2230
        %v2531 = vpop.f32.mrb[0].mxu0
        %v2532 = vadd.f32 %v2303, %v2531
        %v2533 = vpop.f32.mrb[0].mxu0
        %v2534 = vpop.f32.mrb[0].mxu0
        %v2535 = vadd.f32 %v2303, %v2534
        %v2536 = vpop.f32.mrb[0].mxu0
        %2537 = vdwg.mxu0
        %2538 = vmatprep.subr.bf16.mxu0 0
        %2539 = vmatpush1.bf16.msra.mxu0 %v2449
        %2540 = vmatprep.subr.bf16.mxu0 0
        %2541 = vmatpush1.bf16.msra.mxu0 %v2450
        %2542 = vmatprep.subr.bf16.mxu0 0
        %2543 = vmatpush1.bf16.msra.mxu0 %v2451
        %2544 = vmatprep.subr.bf16.mxu0 0
        %2545 = vmatpush1.bf16.msra.mxu0 %v2452
        %2546 = vmatprep.subr.bf16.mxu0 0
        %2547 = vmatpush1.bf16.msra.mxu0 %v2453
        %2548 = vmatprep.subr.bf16.mxu0 0
        %2549 = vmatpush1.bf16.msra.mxu0 %v2454
        %2550 = vmatprep.subr.bf16.mxu0 0
        %2551 = vmatpush1.bf16.msra.mxu0 %v2455
        %2552 = vmatprep.subr.bf16.mxu0 0
        %2553 = vmatpush1.bf16.msra.mxu0 %v2456
        %2554 = vmatprep.subr.bf16.mxu0 0
        %2555 = vmatpush1.bf16.msra.mxu0 %v2457
        %2556 = vmatprep.subr.bf16.mxu0 0
        %2557 = vmatpush1.bf16.msra.mxu0 %v2458
        %2558 = vmatprep.subr.bf16.mxu0 0
        %2559 = vmatpush1.bf16.msra.mxu0 %v2459
        %2560 = vmatprep.subr.bf16.mxu0 0
        %2561 = vmatpush1.bf16.msra.mxu0 %v2460
        %2562 = vmatprep.subr.bf16.mxu0 0
        %2563 = vmatpush1.bf16.msra.mxu0 %v2461
        %2564 = vmatprep.subr.bf16.mxu0 0
        %2565 = vmatpush1.bf16.msra.mxu0 %v2462
        %2566 = vmatprep.subr.bf16.mxu0 0
        %2567 = vmatpush1.bf16.msra.mxu0 %v2463
        %2568 = vmatprep.subr.bf16.mxu0 0
        %2569 = vmatpush1.bf16.msra.mxu0 %v2464
        %2570 = vmatprep.mubr.bf16.mxu0 %v2233
        %2571 = vmatmul.mubr.bf16.gmra.mrb[0].mxu0 %v2232
        %v2572 = vpop.f32.mrb[0].mxu0
        %v2573 = vadd.f32 %v2532, %v2572
        %v2574 = vpop.f32.mrb[0].mxu0
        %v2575 = vpop.f32.mrb[0].mxu0
        %v2576 = vadd.f32 %v2535, %v2575
        %v2577 = vpop.f32.mrb[0].mxu0
        %2578 = vdwg.mxu0
        %v2579 = vadd.f32 %v1871, %v2573
        %v2580 = vadd.f32 %v1872, %v2576
        %2581 = vst [vmem:[%s867] sm:$0xff] %v2579
        %2582 = vst [vmem:[%s867 + $0x8] sm:$0xff] %v2580
        %s2583 = sand.u32 %s509, 1
        %s2584 = scalar_lea.sflag [#allocation5], %s2583
        %s2585 = sand.u32 %s509, 1
        %s2586 = smul.addr %s2585, 16
        %s2587 = scalar_lea.vmem [#allocation18], %s2586
        %s2588 = sand.u32 %s50, 1
        %s2589 = scalar_lea.sflag [#allocation20], %s2588
        %s2590 = sand.u32 %s535, 1
        %s2591 = smul.addr %s2590, 8
        %s2592 = scalar_lea.vmem [#allocation19], %s2591
        %s2593 = sand.u32 %s50, 1
        %s2594 = scalar_lea.sflag [#allocation20], %s2593
        %s2595 = sand.u32 %s561, 1
        %s2596 = smul.addr %s2595, 8
        %s2597 = scalar_lea.vmem [#allocation21], %s2596
        // Predicated region
        $region141: #{tpu_custom_call.1} parent=103 // pred_check
          %p2598 = pneg %p519
        $region142: #{tpu_custom_call.1} parent=103 // pred_check_branch
          %2600 = sbr.rel (%p2598) target = $region144
        $region143: #{tpu_custom_call.1} parent=103 // pred_region
          %s2602 = ssub.s32 256, 256
          %2603 = vsyncadd %s2584, %s2602
          %s2604 = smul.addr %s50, 2
          %s2605 = smul.addr %s2604, 128
          %s2606 = scalar_lea.hbm %s21, %s2605
          %s2607 = sshll.u32 %s2587, 4
          %s2608 = int_to_ptr.vmem [resolvable:$true] %s2607
          %2613 = dma.vmem_to_hbm [thread:$0]  %s2608, 256, %s2606, %s2584, 128, 128, 8
        $region144: #{tpu_custom_call.1} parent=103 // pred_fallthru
          _
        // Predicated region
        $region145: #{tpu_custom_call.1} parent=103 // pred_check
          %p2614 = pneg %p545
        $region146: #{tpu_custom_call.1} parent=103 // pred_check_branch
          %2616 = sbr.rel (%p2614) target = $region148
        $region147: #{tpu_custom_call.1} parent=103 // pred_region
          %s2618 = ssub.s32 128, 128
          %2619 = vsyncadd %s2589, %s2618
          %s2620 = smul.addr %s50, 2
          %s2621 = smul.addr %s2620, 64
          %s2622 = scalar_lea.hbm %s22, %s2621
          %s2623 = sshll.u32 %s2592, 4
          %s2624 = int_to_ptr.vmem [resolvable:$true] %s2623
          %2629 = dma.vmem_to_hbm [thread:$0]  %s2624, 128, %s2622, %s2589, 64, 64, 4
        $region148: #{tpu_custom_call.1} parent=103 // pred_fallthru
          _
        // Predicated region
        $region149: #{tpu_custom_call.1} parent=103 // pred_check
          %p2630 = pneg %p571
        $region150: #{tpu_custom_call.1} parent=103 // pred_check_branch
          %2632 = sbr.rel (%p2630) target = $region152
        $region151: #{tpu_custom_call.1} parent=103 // pred_region
          %s2634 = ssub.s32 128, 128
          %2635 = vsyncadd %s2594, %s2634
          %s2636 = smul.addr %s50, 2
          %s2637 = smul.addr %s2636, 64
          %s2638 = scalar_lea.hbm %s23, %s2637
          %s2639 = sshll.u32 %s2597, 4
          %s2640 = int_to_ptr.vmem [resolvable:$true] %s2639
          %2645 = dma.vmem_to_hbm [thread:$0]  %s2640, 128, %s2638, %s2594, 64, 64, 4
        $region152: #{tpu_custom_call.1} parent=103 // pred_fallthru
          _
      $region104: #{tpu_custom_call.1} parent=5 // pred_fallthru
        _
      %p2646 = scmp.le.s32.totalorder 2, %s45
      // Predicated region
      $region153: #{tpu_custom_call.1} parent=5 // pred_check
        %p2647 = pneg %p2646
      $region154: #{tpu_custom_call.1} parent=5 // pred_check_branch
        %2649 = sbr.rel (%p2647) target = $region156
      $region155: #{tpu_custom_call.1} parent=5 // pred_region
        %s2650 = ssub.s32 %s45, 2
        // Predicated region
        $region157: #{tpu_custom_call.1} parent=155 // pred_check
          %p2651 = pneg %p525
        $region158: #{tpu_custom_call.1} parent=155 // pred_check_branch
          %2653 = sbr.rel (%p2651) target = $region160
        $region159: #{tpu_custom_call.1} parent=155 // pred_region
          %s2654 = sand.u32 %s510, 1
          %s2655 = scalar_lea.sflag [#allocation5], %s2654
          %s2656 = sand.u32 %s510, 1
          %s2657 = smul.addr %s2656, 16
          %s2658 = scalar_lea.vmem [#allocation18], %s2657
          %2659 = dma.done %s2655, 256
        $region160: #{tpu_custom_call.1} parent=155 // pred_fallthru
          _
        // Predicated region
        $region161: #{tpu_custom_call.1} parent=155 // pred_check
          %p2660 = pneg %p551
        $region162: #{tpu_custom_call.1} parent=155 // pred_check_branch
          %2662 = sbr.rel (%p2660) target = $region164
        $region163: #{tpu_custom_call.1} parent=155 // pred_region
          %s2663 = sand.u32 %s51, 1
          %s2664 = scalar_lea.sflag [#allocation20], %s2663
          %s2665 = sand.u32 %s536, 1
          %s2666 = smul.addr %s2665, 8
          %s2667 = scalar_lea.vmem [#allocation19], %s2666
          %2668 = dma.done %s2664, 128
        $region164: #{tpu_custom_call.1} parent=155 // pred_fallthru
          _
        // Predicated region
        $region165: #{tpu_custom_call.1} parent=155 // pred_check
          %p2669 = pneg %p577
        $region166: #{tpu_custom_call.1} parent=155 // pred_check_branch
          %2671 = sbr.rel (%p2669) target = $region168
        $region167: #{tpu_custom_call.1} parent=155 // pred_region
          %s2672 = sand.u32 %s51, 1
          %s2673 = scalar_lea.sflag [#allocation20], %s2672
          %s2674 = sand.u32 %s562, 1
          %s2675 = smul.addr %s2674, 8
          %s2676 = scalar_lea.vmem [#allocation21], %s2675
          %2677 = dma.done %s2673, 128
        $region168: #{tpu_custom_call.1} parent=155 // pred_fallthru
          _
      $region156: #{tpu_custom_call.1} parent=5 // pred_fallthru
        _
    $region6: #{tpu_custom_call.1} parent=1 // loop_footer
      %s49 = sadd.s32 1, %s45
    $region7: #{tpu_custom_call.1} parent=1 // loop_footer_branch
      %44 = sbr.rel target = $region3
    $region8: #{tpu_custom_call.1} parent=1 // loop_exit
      _
    %2678 = vsyncpa [#allocation4], 1
    %s2679 = scalar_lea.sflag [#allocation4], 1
    %2680 = vsyncpa %s2679, 1
    %2681 = vsyncpa [#allocation7], 1
    %s2682 = scalar_lea.sflag [#allocation7], 1
    %2683 = vsyncpa %s2682, 1
    %2684 = vsyncpa [#allocation10], 1
    %2685 = vsyncpa [#allocation13], 1
    %2686 = vsyncpa [#allocation16], 1
    %2687 = vsyncpa [#allocation5], 1
    %s2688 = scalar_lea.sflag [#allocation5], 1
    %2689 = vsyncpa %s2688, 1
    %2690 = vsyncpa [#allocation20], 1
    %s2691 = scalar_lea.sflag [#allocation20], 1
    %2692 = vsyncpa %s2691, 1

</llo_original>
